<compile_context>
chip_gen: v7x
topology: tpu7x:2x2x1
jax: 0.10.0
libtpu: 0.0.40
codegen_flags: <defaults>
</compile_context>

<pallas_src>
import functools

import jax
import jax.numpy as jnp
from jax import lax
from jax.experimental import pallas as pl
from jax.experimental.pallas import tpu as pltpu

DARTS_SPACE = ('none', 'max_pool_3x3', 'avg_pool_3x3', 'skip_connect',
               'sep_conv_3x3', 'sep_conv_5x5', 'dil_conv_3x3', 'dil_conv_5x5')
BN_EPS = 1e-5


# ----------------------------------------------------------------------------
# Kernel
# ----------------------------------------------------------------------------
def _mixed_op_kernel(alpha_ref, x_ref, hidx_ref, widx_ref, invc_ref,
                     s3_dw1, s3_pw1, s3_dw2, s3_pw2,
                     s5_dw1, s5_pw1, s5_dw2, s5_pw2,
                     d3_dw, d3_pw, d5_dw, d5_pw,
                     o_ref, *, B, H, W, C):
    """Fully fused MixedOp on a lane-dense (B*C, H*W) layout; single output store."""
    HW = H * W
    BC = B * C

    x = x_ref[...]                       # (BC, HW)
    h_idx = hidx_ref[...]                # (BC, HW) float row index of each pixel
    w_idx = widx_ref[...]                # (BC, HW) float col index of each pixel

    # ---- stencil helpers: flat (h*W + w) lane shifts + border masks -----------
    mask_cache = {}                      # memoized across all branches (trace-time)

    def tap_mask(dh, dw):
        key = (dh, dw)
        if key not in mask_cache:
            mh = jnp.logical_and(h_idx >= float(-dh), h_idx <= float(H - 1 - dh))
            mw = jnp.logical_and(w_idx >= float(-dw), w_idx <= float(W - 1 - dw))
            mask_cache[key] = jnp.logical_and(mh, mw)
        return mask_cache[key]

    def shifted(v, dh, dw):
        # out[.., h*W+w] = v[.., (h+dh)*W + (w+dw)]  (circular; out-of-image lanes
        # are garbage and must be masked by tap_mask).
        s = (-(dh * W + dw)) % HW
        return v if s == 0 else pltpu.roll(v, s, axis=1)

    def tap(v, dh, dw, fill):
        if dh == 0 and dw == 0:
            return v
        return jnp.where(tap_mask(dh, dw), shifted(v, dh, dw), fill)

    # ---------------- skip_connect (identity); 'none' contributes 0 ------------
    out = alpha_ref[3] * x               # register-resident accumulator

    # ---------------- max_pool_3x3 / avg_pool_3x3 (shared taps) ----------------
    mp = x                               # center tap is always valid
    ap = x
    for kh in range(3):
        for kw in range(3):
            dh, dw = kh - 1, kw - 1
            if dh == 0 and dw == 0:
                continue
            t = shifted(x, dh, dw)
            m = tap_mask(dh, dw)
            mp = jnp.maximum(mp, jnp.where(m, t, -jnp.inf))
            ap = ap + jnp.where(m, t, 0.0)
    out = out + alpha_ref[1] * mp
    out = out + alpha_ref[2] * (ap * invc_ref[...])   # precomputed 1/valid_count

    # ---------------- shared ReLU(x) for all four conv branches ----------------
    rx = jnp.maximum(x, 0.0)             # mask fill 0 == zero padding (relu(0)==0)

    def depthwise(v, dw_ref, K, pad, dil):
        dwv = dw_ref[...]                # (K, K, BC, 1) -- hoisted, indexed in-reg
        acc = None
        for kh in range(K):
            dh = kh * dil - pad
            for kw in range(K):
                dww = kw * dil - pad
                t = tap(v, dh, dww, 0.0) * dwv[kh, kw]   # (BC,1) lane-broadcast FMA
                acc = t if acc is None else acc + t
        return acc

    def pointwise(v, pw_ref):
        # 1x1 conv as channel mixing via sublane shifts within each batch group.
        # TODO(synk): for C>=32 route this through the MXU instead of the VPU.
        pwv = pw_ref[...]                # (2C-1, BC, 1) -- hoisted
        acc = None
        for idx, d in enumerate(range(-(C - 1), C)):
            t = v if d == 0 else pltpu.roll(v, d % BC, axis=0)
            t = t * pwv[idx]
            acc = t if acc is None else acc + t
        return acc

    inv_n = 1.0 / float(B * HW)

    def batch_norm(y):
        # Training-mode BatchNorm2d(affine=False): biased batch stats over (N,H,W).
        # Single-pass: sum & sum-of-squares in one traversal, stats kept in f32.
        q = y * y
        ys, qs = y, q
        for j in range(1, B):            # fold the other batch rows onto each row
            sh = (j * C) % BC
            ys = ys + pltpu.roll(y, sh, axis=0)
            qs = qs + pltpu.roll(q, sh, axis=0)
        s1 = jnp.sum(ys, axis=1, keepdims=True)          # (BC,1) per-channel sums
        s2 = jnp.sum(qs, axis=1, keepdims=True)
        mean = s1 * inv_n
        var = s2 * inv_n - mean * mean
        return (y - mean) * lax.rsqrt(var + BN_EPS)

    def conv_unit(v, dw_ref, pw_ref, K, pad, dil):
        return batch_norm(pointwise(depthwise(v, dw_ref, K, pad, dil), pw_ref))

    # ---------------- sep_conv_3x3 ---------------------------------------------
    y = conv_unit(rx, s3_dw1, s3_pw1, 3, 1, 1)
    y = conv_unit(jnp.maximum(y, 0.0), s3_dw2, s3_pw2, 3, 1, 1)
    out = out + alpha_ref[4] * y

    # ---------------- sep_conv_5x5 ---------------------------------------------
    y = conv_unit(rx, s5_dw1, s5_pw1, 5, 2, 1)
    y = conv_unit(jnp.maximum(y, 0.0), s5_dw2, s5_pw2, 5, 2, 1)
    out = out + alpha_ref[5] * y

    # ---------------- dil_conv_3x3 / dil_conv_5x5 ------------------------------
    out = out + alpha_ref[6] * conv_unit(rx, d3_dw, d3_pw, 3, 2, 2)
    out = out + alpha_ref[7] * conv_unit(rx, d5_dw, d5_pw, 5, 4, 2)

    # Single, unmasked, lane-dense store of the weighted sum.
    o_ref[...] = out


# ----------------------------------------------------------------------------
# Wrapper
# ----------------------------------------------------------------------------
@jax.jit
def mixed_op_forward(x_nchw, weights, params):
    B, C, H, W = x_nchw.shape
    HW, BC = H * W, B * C
    # NCHW -> (B*C, H*W): a pure reshape (lane-dense, no transpose needed).
    x = x_nchw.astype(jnp.float32).reshape(BC, HW)

    # Flat pixel coordinates (for border masks) and 1/count for avg_pool_3x3
    # with count_include_pad=False.  Assumes H, W >= 2.
    pos = jnp.arange(HW, dtype=jnp.int32)
    hh, ww = pos // W, pos % W
    h_idx = jnp.broadcast_to(hh.astype(jnp.float32)[None, :], (BC, HW))
    w_idx = jnp.broadcast_to(ww.astype(jnp.float32)[None, :], (BC, HW))
    vh = 3.0 - (hh == 0).astype(jnp.float32) - (hh == H - 1).astype(jnp.float32)
    vw = 3.0 - (ww == 0).astype(jnp.float32) - (ww == W - 1).astype(jnp.float32)
    inv_cnt = jnp.broadcast_to((1.0 / (vh * vw))[None, :], (BC, HW))

    def expand_dw(dw):
        # (K,K,C) -> (K,K,B*C,1): per-(batch,channel)-row scalar columns.
        return jnp.tile(dw, (1, 1, B))[:, :, :, None].astype(jnp.float32)

    def expand_pw(pw):
        # (Cin,Cout) -> (2C-1, B*C, 1): plane for sublane shift d holds
        # pw[co-d, co] at row b*C+co (0 where ci=co-d is out of range).
        co = jnp.arange(C)
        planes = []
        for d in range(-(C - 1), C):
            ci = co - d
            valid = (ci >= 0) & (ci < C)
            wv = jnp.where(valid, pw[jnp.clip(ci, 0, C - 1), co], 0.0)   # (C,)
            planes.append(jnp.tile(wv, B))                               # (B*C,)
        return jnp.stack(planes, axis=0)[:, :, None].astype(jnp.float32)

    p3, p5 = params['sep_conv_3x3'], params['sep_conv_5x5']
    d3, d5 = params['dil_conv_3x3'], params['dil_conv_5x5']

    kernel = functools.partial(_mixed_op_kernel, B=B, H=H, W=W, C=C)

    def full(shape):
        n = len(shape)
        return pl.BlockSpec(shape, lambda i: (0,) * n)

    y = pl.pallas_call(
        kernel,
        out_shape=jax.ShapeDtypeStruct((BC, HW), jnp.float32),
        grid=(1,),
        in_specs=[
            pl.BlockSpec(memory_space=pltpu.MemorySpace.SMEM),   # alphas (8,)
            full((BC, HW)),                                       # x
            full((BC, HW)), full((BC, HW)),                       # h_idx, w_idx
            full((BC, HW)),                                       # 1/count (avg pool)
            full((3, 3, BC, 1)), full((2 * C - 1, BC, 1)),        # sep3 unit1
            full((3, 3, BC, 1)), full((2 * C - 1, BC, 1)),        # sep3 unit2
            full((5, 5, BC, 1)), full((2 * C - 1, BC, 1)),        # sep5 unit1
            full((5, 5, BC, 1)), full((2 * C - 1, BC, 1)),        # sep5 unit2
            full((3, 3, BC, 1)), full((2 * C - 1, BC, 1)),        # dil3
            full((5, 5, BC, 1)), full((2 * C - 1, BC, 1)),        # dil5
        ],
        out_specs=full((BC, HW)),
        compiler_params=pltpu.CompilerParams(dimension_semantics=("arbitrary",)),
    )(weights.astype(jnp.float32), x, h_idx, w_idx, inv_cnt,
      expand_dw(p3['dw1']), expand_pw(p3['pw1']), expand_dw(p3['dw2']), expand_pw(p3['pw2']),
      expand_dw(p5['dw1']), expand_pw(p5['pw1']), expand_dw(p5['dw2']), expand_pw(p5['pw2']),
      expand_dw(d3['dw']), expand_pw(d3['pw']),
      expand_dw(d5['dw']), expand_pw(d5['pw']))

    return y.reshape(B, C, H, W)


def init_params(key, C):
    """Deterministic parameter init.  Depthwise weights (K,K,C), pointwise (Cin,Cout)."""
    params = {}

    def nrm(k, shape):
        return 0.1 * jax.random.normal(k, shape, jnp.float32)

    keys = iter(jax.random.split(key, 16))
    for name, k in (('sep_conv_3x3', 3), ('sep_conv_5x5', 5)):
        params[name] = {'dw1': nrm(next(keys), (k, k, C)),
                        'pw1': nrm(next(keys), (C, C)),
                        'dw2': nrm(next(keys), (k, k, C)),
                        'pw2': nrm(next(keys), (C, C))}
    for name, k in (('dil_conv_3x3', 3), ('dil_conv_5x5', 5)):
        params[name] = {'dw': nrm(next(keys), (k, k, C)),
                        'pw': nrm(next(keys), (C, C))}
    return params


# ----------------------------------------------------------------------------
# Pure-JAX reference (correctness check only)
# ----------------------------------------------------------------------------
def _ref_dw(x, w, pad, dil):
    C = x.shape[-1]
    return lax.conv_general_dilated(
        x, w[:, :, None, :], window_strides=(1, 1),
        padding=[(pad, pad), (pad, pad)], rhs_dilation=(dil, dil),
        dimension_numbers=('NHWC', 'HWIO', 'NHWC'), feature_group_count=C)


def _ref_bn(x):
    mean = jnp.mean(x, axis=(0, 1, 2), keepdims=True)
    var = jnp.mean((x - mean) ** 2, axis=(0, 1, 2), keepdims=True)
    return (x - mean) * lax.rsqrt(var + BN_EPS)


def _ref_sep_unit(x, dw, pw, pad, dil):
    y = _ref_dw(jax.nn.relu(x), dw, pad, dil)
    y = jnp.einsum('nhwi,io->nhwo', y, pw)
    return _ref_bn(y)


def _ref_max_pool(x):
    return lax.reduce_window(x, -jnp.inf, lax.max, (1, 3, 3, 1), (1, 1, 1, 1),
                             ((0, 0), (1, 1), (1, 1), (0, 0)))


def _ref_avg_pool(x):
    s = lax.reduce_window(x, 0.0, lax.add, (1, 3, 3, 1), (1, 1, 1, 1),
                          ((0, 0), (1, 1), (1, 1), (0, 0)))
    c = lax.reduce_window(jnp.ones_like(x), 0.0, lax.add, (1, 3, 3, 1), (1, 1, 1, 1),
                          ((0, 0), (1, 1), (1, 1), (0, 0)))
    return s / c


def ref_mixed_op(x_nchw, weights, params):
    x = jnp.transpose(x_nchw, (0, 2, 3, 1)).astype(jnp.float32)
    outs = [jnp.zeros_like(x), _ref_max_pool(x), _ref_avg_pool(x), x]
    for name, pad, dil in (('sep_conv_3x3', 1, 1), ('sep_conv_5x5', 2, 1)):
        p = params[name]
        y = _ref_sep_unit(x, p['dw1'], p['pw1'], pad, dil)
        y = _ref_sep_unit(y, p['dw2'], p['pw2'], pad, dil)
        outs.append(y)
    for name, pad, dil in (('dil_conv_3x3', 2, 2), ('dil_conv_5x5', 4, 2)):
        p = params[name]
        outs.append(_ref_sep_unit(x, p['dw'], p['pw'], pad, dil))
    stacked = jnp.stack(outs, axis=0)
    y = jnp.einsum('p,pbhwc->bhwc', weights, stacked)
    return jnp.transpose(y, (0, 3, 1, 2))


# ----------------------------------------------------------------------------
if __name__ == "__main__":
    key = jax.random.PRNGKey(0)
    kx, ka, kp = jax.random.split(key, 3)

    B, C, H, W = 2, 4, 16, 16
    x = jax.random.normal(kx, (B, C, H, W), jnp.float32)          # NCHW (PyTorch convention)
    alphas = jax.random.normal(ka, (len(DARTS_SPACE),), jnp.float32)
    weights = jax.nn.softmax(alphas)                              # architecture weights (8,)
    params = init_params(kp, C)

    out = mixed_op_forward(x, weights, params)
    out = jax.block_until_ready(out)

    ref = ref_mixed_op(x, weights, params)
    assert out.shape == (B, C, H, W)
    err = float(jnp.max(jnp.abs(out - ref)))
    if not (err < 1e-3):
        raise AssertionError(f"mismatch vs reference: max abs err {err}")

    print("KERNEL_OK")
</pallas_src>

<mosaic_0001>
module attributes {stable_mosaic.version = 11 : i64} {
  func.func @_mixed_op_kernel(%arg0: i32, %arg1: memref<8xf32, #tpu.memory_space<smem>>, %arg2: memref<8x256xf32, #tpu.memory_space<vmem>>, %arg3: memref<8x256xf32, #tpu.memory_space<vmem>>, %arg4: memref<8x256xf32, #tpu.memory_space<vmem>>, %arg5: memref<8x256xf32, #tpu.memory_space<vmem>>, %arg6: memref<3x3x8x1xf32, #tpu.memory_space<vmem>>, %arg7: memref<7x8x1xf32, #tpu.memory_space<vmem>>, %arg8: memref<3x3x8x1xf32, #tpu.memory_space<vmem>>, %arg9: memref<7x8x1xf32, #tpu.memory_space<vmem>>, %arg10: memref<5x5x8x1xf32, #tpu.memory_space<vmem>>, %arg11: memref<7x8x1xf32, #tpu.memory_space<vmem>>, %arg12: memref<5x5x8x1xf32, #tpu.memory_space<vmem>>, %arg13: memref<7x8x1xf32, #tpu.memory_space<vmem>>, %arg14: memref<3x3x8x1xf32, #tpu.memory_space<vmem>>, %arg15: memref<7x8x1xf32, #tpu.memory_space<vmem>>, %arg16: memref<5x5x8x1xf32, #tpu.memory_space<vmem>>, %arg17: memref<7x8x1xf32, #tpu.memory_space<vmem>>, %arg18: memref<8x256xf32, #tpu.memory_space<vmem>>) attributes {dimension_semantics = [#tpu.dimension_semantics<arbitrary>], iteration_bounds = array<i64: 1>, scalar_prefetch = 0 : i64, scratch_operands = 0 : i64, tpu.core_type = #tpu.core_type<tc>, window_params = [{transform_indices = @transform_0, window_bounds = array<i64: 8>}, {pipeline_mode = #tpu.pipeline_mode<synchronous>, transform_indices = @transform_1, window_bounds = array<i64: 8, 256>}, {pipeline_mode = #tpu.pipeline_mode<synchronous>, transform_indices = @transform_2, window_bounds = array<i64: 8, 256>}, {pipeline_mode = #tpu.pipeline_mode<synchronous>, transform_indices = @transform_3, window_bounds = array<i64: 8, 256>}, {pipeline_mode = #tpu.pipeline_mode<synchronous>, transform_indices = @transform_4, window_bounds = array<i64: 8, 256>}, {pipeline_mode = #tpu.pipeline_mode<synchronous>, transform_indices = @transform_5, window_bounds = array<i64: 3, 3, 8, 1>}, {pipeline_mode = #tpu.pipeline_mode<synchronous>, transform_indices = @transform_6, window_bounds = array<i64: 7, 8, 1>}, {pipeline_mode = #tpu.pipeline_mode<synchronous>, transform_indices = @transform_7, window_bounds = array<i64: 3, 3, 8, 1>}, {pipeline_mode = #tpu.pipeline_mode<synchronous>, transform_indices = @transform_8, window_bounds = array<i64: 7, 8, 1>}, {pipeline_mode = #tpu.pipeline_mode<synchronous>, transform_indices = @transform_9, window_bounds = array<i64: 5, 5, 8, 1>}, {pipeline_mode = #tpu.pipeline_mode<synchronous>, transform_indices = @transform_10, window_bounds = array<i64: 7, 8, 1>}, {pipeline_mode = #tpu.pipeline_mode<synchronous>, transform_indices = @transform_11, window_bounds = array<i64: 5, 5, 8, 1>}, {pipeline_mode = #tpu.pipeline_mode<synchronous>, transform_indices = @transform_12, window_bounds = array<i64: 7, 8, 1>}, {pipeline_mode = #tpu.pipeline_mode<synchronous>, transform_indices = @transform_13, window_bounds = array<i64: 3, 3, 8, 1>}, {pipeline_mode = #tpu.pipeline_mode<synchronous>, transform_indices = @transform_14, window_bounds = array<i64: 7, 8, 1>}, {pipeline_mode = #tpu.pipeline_mode<synchronous>, transform_indices = @transform_15, window_bounds = array<i64: 5, 5, 8, 1>}, {pipeline_mode = #tpu.pipeline_mode<synchronous>, transform_indices = @transform_16, window_bounds = array<i64: 7, 8, 1>}, {pipeline_mode = #tpu.pipeline_mode<synchronous>, transform_indices = @transform_17, window_bounds = array<i64: 8, 256>}]} {
    %c0 = arith.constant 0 : index
    %c0_0 = arith.constant 0 : index
    %0 = vector.load %arg2[%c0, %c0_0] : memref<8x256xf32, #tpu.memory_space<vmem>>, vector<8x256xf32>
    %c0_1 = arith.constant 0 : index
    %c0_2 = arith.constant 0 : index
    %1 = vector.load %arg3[%c0_1, %c0_2] : memref<8x256xf32, #tpu.memory_space<vmem>>, vector<8x256xf32>
    %c0_3 = arith.constant 0 : index
    %c0_4 = arith.constant 0 : index
    %2 = vector.load %arg4[%c0_3, %c0_4] : memref<8x256xf32, #tpu.memory_space<vmem>>, vector<8x256xf32>
    %c3 = arith.constant 3 : index
    %3 = memref.load %arg1[%c3] : memref<8xf32, #tpu.memory_space<smem>>
    %4 = vector.broadcast %3 : f32 to vector<8x256xf32>
    %5 = arith.mulf %4, %0 : vector<8x256xf32>
    %c17_i32 = arith.constant 17 : i32
    %6 = tpu.dynamic_rotate %0 by %c17_i32 dim 1 : vector<8x256xf32>, i32 -> vector<8x256xf32>
    %cst = arith.constant 1.000000e+00 : f32
    %7 = vector.broadcast %cst : f32 to vector<8x256xf32>
    %8 = arith.cmpf oge, %1, %7 : vector<8x256xf32>
    %cst_5 = arith.constant 1.600000e+01 : f32
    %9 = vector.broadcast %cst_5 : f32 to vector<8x256xf32>
    %10 = arith.cmpf ole, %1, %9 : vector<8x256xf32>
    %11 = arith.andi %8, %10 : vector<8x256xi1>
    %cst_6 = arith.constant 1.000000e+00 : f32
    %12 = vector.broadcast %cst_6 : f32 to vector<8x256xf32>
    %13 = arith.cmpf oge, %2, %12 : vector<8x256xf32>
    %cst_7 = arith.constant 1.600000e+01 : f32
    %14 = vector.broadcast %cst_7 : f32 to vector<8x256xf32>
    %15 = arith.cmpf ole, %2, %14 : vector<8x256xf32>
    %16 = arith.andi %13, %15 : vector<8x256xi1>
    %17 = arith.andi %11, %16 : vector<8x256xi1>
    %cst_8 = arith.constant 0xFF800000 : f32
    %18 = vector.broadcast %cst_8 : f32 to vector<8x256xf32>
    %19 = arith.select %17, %6, %18 : vector<8x256xi1>, vector<8x256xf32>
    %20 = arith.maximumf %0, %19 : vector<8x256xf32>
    %cst_9 = arith.constant 0.000000e+00 : f32
    %21 = vector.broadcast %cst_9 : f32 to vector<8x256xf32>
    %22 = arith.select %17, %6, %21 : vector<8x256xi1>, vector<8x256xf32>
    %23 = arith.addf %0, %22 : vector<8x256xf32>
    %c16_i32 = arith.constant 16 : i32
    %24 = tpu.dynamic_rotate %0 by %c16_i32 dim 1 : vector<8x256xf32>, i32 -> vector<8x256xf32>
    %cst_10 = arith.constant 1.000000e+00 : f32
    %25 = vector.broadcast %cst_10 : f32 to vector<8x256xf32>
    %26 = arith.cmpf oge, %1, %25 : vector<8x256xf32>
    %cst_11 = arith.constant 1.600000e+01 : f32
    %27 = vector.broadcast %cst_11 : f32 to vector<8x256xf32>
    %28 = arith.cmpf ole, %1, %27 : vector<8x256xf32>
    %29 = arith.andi %26, %28 : vector<8x256xi1>
    %cst_12 = arith.constant 0.000000e+00 : f32
    %30 = vector.broadcast %cst_12 : f32 to vector<8x256xf32>
    %31 = arith.cmpf oge, %2, %30 : vector<8x256xf32>
    %cst_13 = arith.constant 1.500000e+01 : f32
    %32 = vector.broadcast %cst_13 : f32 to vector<8x256xf32>
    %33 = arith.cmpf ole, %2, %32 : vector<8x256xf32>
    %34 = arith.andi %31, %33 : vector<8x256xi1>
    %35 = arith.andi %29, %34 : vector<8x256xi1>
    %cst_14 = arith.constant 0xFF800000 : f32
    %36 = vector.broadcast %cst_14 : f32 to vector<8x256xf32>
    %37 = arith.select %35, %24, %36 : vector<8x256xi1>, vector<8x256xf32>
    %38 = arith.maximumf %20, %37 : vector<8x256xf32>
    %cst_15 = arith.constant 0.000000e+00 : f32
    %39 = vector.broadcast %cst_15 : f32 to vector<8x256xf32>
    %40 = arith.select %35, %24, %39 : vector<8x256xi1>, vector<8x256xf32>
    %41 = arith.addf %23, %40 : vector<8x256xf32>
    %c15_i32 = arith.constant 15 : i32
    %42 = tpu.dynamic_rotate %0 by %c15_i32 dim 1 : vector<8x256xf32>, i32 -> vector<8x256xf32>
    %cst_16 = arith.constant 1.000000e+00 : f32
    %43 = vector.broadcast %cst_16 : f32 to vector<8x256xf32>
    %44 = arith.cmpf oge, %1, %43 : vector<8x256xf32>
    %cst_17 = arith.constant 1.600000e+01 : f32
    %45 = vector.broadcast %cst_17 : f32 to vector<8x256xf32>
    %46 = arith.cmpf ole, %1, %45 : vector<8x256xf32>
    %47 = arith.andi %44, %46 : vector<8x256xi1>
    %cst_18 = arith.constant -1.000000e+00 : f32
    %48 = vector.broadcast %cst_18 : f32 to vector<8x256xf32>
    %49 = arith.cmpf oge, %2, %48 : vector<8x256xf32>
    %cst_19 = arith.constant 1.400000e+01 : f32
    %50 = vector.broadcast %cst_19 : f32 to vector<8x256xf32>
    %51 = arith.cmpf ole, %2, %50 : vector<8x256xf32>
    %52 = arith.andi %49, %51 : vector<8x256xi1>
    %53 = arith.andi %47, %52 : vector<8x256xi1>
    %cst_20 = arith.constant 0xFF800000 : f32
    %54 = vector.broadcast %cst_20 : f32 to vector<8x256xf32>
    %55 = arith.select %53, %42, %54 : vector<8x256xi1>, vector<8x256xf32>
    %56 = arith.maximumf %38, %55 : vector<8x256xf32>
    %cst_21 = arith.constant 0.000000e+00 : f32
    %57 = vector.broadcast %cst_21 : f32 to vector<8x256xf32>
    %58 = arith.select %53, %42, %57 : vector<8x256xi1>, vector<8x256xf32>
    %59 = arith.addf %41, %58 : vector<8x256xf32>
    %c1_i32 = arith.constant 1 : i32
    %60 = tpu.dynamic_rotate %0 by %c1_i32 dim 1 : vector<8x256xf32>, i32 -> vector<8x256xf32>
    %cst_22 = arith.constant 0.000000e+00 : f32
    %61 = vector.broadcast %cst_22 : f32 to vector<8x256xf32>
    %62 = arith.cmpf oge, %1, %61 : vector<8x256xf32>
    %cst_23 = arith.constant 1.500000e+01 : f32
    %63 = vector.broadcast %cst_23 : f32 to vector<8x256xf32>
    %64 = arith.cmpf ole, %1, %63 : vector<8x256xf32>
    %65 = arith.andi %62, %64 : vector<8x256xi1>
    %cst_24 = arith.constant 1.000000e+00 : f32
    %66 = vector.broadcast %cst_24 : f32 to vector<8x256xf32>
    %67 = arith.cmpf oge, %2, %66 : vector<8x256xf32>
    %cst_25 = arith.constant 1.600000e+01 : f32
    %68 = vector.broadcast %cst_25 : f32 to vector<8x256xf32>
    %69 = arith.cmpf ole, %2, %68 : vector<8x256xf32>
    %70 = arith.andi %67, %69 : vector<8x256xi1>
    %71 = arith.andi %65, %70 : vector<8x256xi1>
    %cst_26 = arith.constant 0xFF800000 : f32
    %72 = vector.broadcast %cst_26 : f32 to vector<8x256xf32>
    %73 = arith.select %71, %60, %72 : vector<8x256xi1>, vector<8x256xf32>
    %74 = arith.maximumf %56, %73 : vector<8x256xf32>
    %cst_27 = arith.constant 0.000000e+00 : f32
    %75 = vector.broadcast %cst_27 : f32 to vector<8x256xf32>
    %76 = arith.select %71, %60, %75 : vector<8x256xi1>, vector<8x256xf32>
    %77 = arith.addf %59, %76 : vector<8x256xf32>
    %c255_i32 = arith.constant 255 : i32
    %78 = tpu.dynamic_rotate %0 by %c255_i32 dim 1 : vector<8x256xf32>, i32 -> vector<8x256xf32>
    %cst_28 = arith.constant 0.000000e+00 : f32
    %79 = vector.broadcast %cst_28 : f32 to vector<8x256xf32>
    %80 = arith.cmpf oge, %1, %79 : vector<8x256xf32>
    %cst_29 = arith.constant 1.500000e+01 : f32
    %81 = vector.broadcast %cst_29 : f32 to vector<8x256xf32>
    %82 = arith.cmpf ole, %1, %81 : vector<8x256xf32>
    %83 = arith.andi %80, %82 : vector<8x256xi1>
    %cst_30 = arith.constant -1.000000e+00 : f32
    %84 = vector.broadcast %cst_30 : f32 to vector<8x256xf32>
    %85 = arith.cmpf oge, %2, %84 : vector<8x256xf32>
    %cst_31 = arith.constant 1.400000e+01 : f32
    %86 = vector.broadcast %cst_31 : f32 to vector<8x256xf32>
    %87 = arith.cmpf ole, %2, %86 : vector<8x256xf32>
    %88 = arith.andi %85, %87 : vector<8x256xi1>
    %89 = arith.andi %83, %88 : vector<8x256xi1>
    %cst_32 = arith.constant 0xFF800000 : f32
    %90 = vector.broadcast %cst_32 : f32 to vector<8x256xf32>
    %91 = arith.select %89, %78, %90 : vector<8x256xi1>, vector<8x256xf32>
    %92 = arith.maximumf %74, %91 : vector<8x256xf32>
    %cst_33 = arith.constant 0.000000e+00 : f32
    %93 = vector.broadcast %cst_33 : f32 to vector<8x256xf32>
    %94 = arith.select %89, %78, %93 : vector<8x256xi1>, vector<8x256xf32>
    %95 = arith.addf %77, %94 : vector<8x256xf32>
    %c241_i32 = arith.constant 241 : i32
    %96 = tpu.dynamic_rotate %0 by %c241_i32 dim 1 : vector<8x256xf32>, i32 -> vector<8x256xf32>
    %cst_34 = arith.constant -1.000000e+00 : f32
    %97 = vector.broadcast %cst_34 : f32 to vector<8x256xf32>
    %98 = arith.cmpf oge, %1, %97 : vector<8x256xf32>
    %cst_35 = arith.constant 1.400000e+01 : f32
    %99 = vector.broadcast %cst_35 : f32 to vector<8x256xf32>
    %100 = arith.cmpf ole, %1, %99 : vector<8x256xf32>
    %101 = arith.andi %98, %100 : vector<8x256xi1>
    %cst_36 = arith.constant 1.000000e+00 : f32
    %102 = vector.broadcast %cst_36 : f32 to vector<8x256xf32>
    %103 = arith.cmpf oge, %2, %102 : vector<8x256xf32>
    %cst_37 = arith.constant 1.600000e+01 : f32
    %104 = vector.broadcast %cst_37 : f32 to vector<8x256xf32>
    %105 = arith.cmpf ole, %2, %104 : vector<8x256xf32>
    %106 = arith.andi %103, %105 : vector<8x256xi1>
    %107 = arith.andi %101, %106 : vector<8x256xi1>
    %cst_38 = arith.constant 0xFF800000 : f32
    %108 = vector.broadcast %cst_38 : f32 to vector<8x256xf32>
    %109 = arith.select %107, %96, %108 : vector<8x256xi1>, vector<8x256xf32>
    %110 = arith.maximumf %92, %109 : vector<8x256xf32>
    %cst_39 = arith.constant 0.000000e+00 : f32
    %111 = vector.broadcast %cst_39 : f32 to vector<8x256xf32>
    %112 = arith.select %107, %96, %111 : vector<8x256xi1>, vector<8x256xf32>
    %113 = arith.addf %95, %112 : vector<8x256xf32>
    %c240_i32 = arith.constant 240 : i32
    %114 = tpu.dynamic_rotate %0 by %c240_i32 dim 1 : vector<8x256xf32>, i32 -> vector<8x256xf32>
    %cst_40 = arith.constant -1.000000e+00 : f32
    %115 = vector.broadcast %cst_40 : f32 to vector<8x256xf32>
    %116 = arith.cmpf oge, %1, %115 : vector<8x256xf32>
    %cst_41 = arith.constant 1.400000e+01 : f32
    %117 = vector.broadcast %cst_41 : f32 to vector<8x256xf32>
    %118 = arith.cmpf ole, %1, %117 : vector<8x256xf32>
    %119 = arith.andi %116, %118 : vector<8x256xi1>
    %cst_42 = arith.constant 0.000000e+00 : f32
    %120 = vector.broadcast %cst_42 : f32 to vector<8x256xf32>
    %121 = arith.cmpf oge, %2, %120 : vector<8x256xf32>
    %cst_43 = arith.constant 1.500000e+01 : f32
    %122 = vector.broadcast %cst_43 : f32 to vector<8x256xf32>
    %123 = arith.cmpf ole, %2, %122 : vector<8x256xf32>
    %124 = arith.andi %121, %123 : vector<8x256xi1>
    %125 = arith.andi %119, %124 : vector<8x256xi1>
    %cst_44 = arith.constant 0xFF800000 : f32
    %126 = vector.broadcast %cst_44 : f32 to vector<8x256xf32>
    %127 = arith.select %125, %114, %126 : vector<8x256xi1>, vector<8x256xf32>
    %128 = arith.maximumf %110, %127 : vector<8x256xf32>
    %cst_45 = arith.constant 0.000000e+00 : f32
    %129 = vector.broadcast %cst_45 : f32 to vector<8x256xf32>
    %130 = arith.select %125, %114, %129 : vector<8x256xi1>, vector<8x256xf32>
    %131 = arith.addf %113, %130 : vector<8x256xf32>
    %c239_i32 = arith.constant 239 : i32
    %132 = tpu.dynamic_rotate %0 by %c239_i32 dim 1 : vector<8x256xf32>, i32 -> vector<8x256xf32>
    %cst_46 = arith.constant -1.000000e+00 : f32
    %133 = vector.broadcast %cst_46 : f32 to vector<8x256xf32>
    %134 = arith.cmpf oge, %1, %133 : vector<8x256xf32>
    %cst_47 = arith.constant 1.400000e+01 : f32
    %135 = vector.broadcast %cst_47 : f32 to vector<8x256xf32>
    %136 = arith.cmpf ole, %1, %135 : vector<8x256xf32>
    %137 = arith.andi %134, %136 : vector<8x256xi1>
    %cst_48 = arith.constant -1.000000e+00 : f32
    %138 = vector.broadcast %cst_48 : f32 to vector<8x256xf32>
    %139 = arith.cmpf oge, %2, %138 : vector<8x256xf32>
    %cst_49 = arith.constant 1.400000e+01 : f32
    %140 = vector.broadcast %cst_49 : f32 to vector<8x256xf32>
    %141 = arith.cmpf ole, %2, %140 : vector<8x256xf32>
    %142 = arith.andi %139, %141 : vector<8x256xi1>
    %143 = arith.andi %137, %142 : vector<8x256xi1>
    %cst_50 = arith.constant 0xFF800000 : f32
    %144 = vector.broadcast %cst_50 : f32 to vector<8x256xf32>
    %145 = arith.select %143, %132, %144 : vector<8x256xi1>, vector<8x256xf32>
    %146 = arith.maximumf %128, %145 : vector<8x256xf32>
    %cst_51 = arith.constant 0.000000e+00 : f32
    %147 = vector.broadcast %cst_51 : f32 to vector<8x256xf32>
    %148 = arith.select %143, %132, %147 : vector<8x256xi1>, vector<8x256xf32>
    %149 = arith.addf %131, %148 : vector<8x256xf32>
    %c1 = arith.constant 1 : index
    %150 = memref.load %arg1[%c1] : memref<8xf32, #tpu.memory_space<smem>>
    %151 = vector.broadcast %150 : f32 to vector<8x256xf32>
    %152 = arith.mulf %151, %146 : vector<8x256xf32>
    %153 = arith.addf %5, %152 : vector<8x256xf32>
    %c2 = arith.constant 2 : index
    %154 = memref.load %arg1[%c2] : memref<8xf32, #tpu.memory_space<smem>>
    %c0_52 = arith.constant 0 : index
    %c0_53 = arith.constant 0 : index
    %155 = vector.load %arg5[%c0_52, %c0_53] : memref<8x256xf32, #tpu.memory_space<vmem>>, vector<8x256xf32>
    %156 = arith.mulf %149, %155 : vector<8x256xf32>
    %157 = vector.broadcast %154 : f32 to vector<8x256xf32>
    %158 = arith.mulf %157, %156 : vector<8x256xf32>
    %159 = arith.addf %153, %158 : vector<8x256xf32>
    %cst_54 = arith.constant 0.000000e+00 : f32
    %160 = vector.broadcast %cst_54 : f32 to vector<8x256xf32>
    %161 = arith.maximumf %0, %160 : vector<8x256xf32>
    %c0_55 = arith.constant 0 : index
    %c0_56 = arith.constant 0 : index
    %c0_57 = arith.constant 0 : index
    %c0_58 = arith.constant 0 : index
    %162 = vector.load %arg6[%c0_55, %c0_56, %c0_57, %c0_58] : memref<3x3x8x1xf32, #tpu.memory_space<vmem>>, vector<3x3x8x1xf32>
    %c17_i32_59 = arith.constant 17 : i32
    %163 = tpu.dynamic_rotate %161 by %c17_i32_59 dim 1 : vector<8x256xf32>, i32 -> vector<8x256xf32>
    %cst_60 = arith.constant 0.000000e+00 : f32
    %164 = vector.broadcast %cst_60 : f32 to vector<8x256xf32>
    %165 = arith.select %17, %163, %164 : vector<8x256xi1>, vector<8x256xf32>
    %166 = vector.extract_strided_slice %162 {offsets = [0, 0, 0, 0], sizes = [1, 1, 8, 1], strides = [1, 1, 1, 1]} : vector<3x3x8x1xf32> to vector<1x1x8x1xf32>
    %167 = vector.shape_cast %166 : vector<1x1x8x1xf32> to vector<8x1xf32>
    %168 = vector.broadcast %167 : vector<8x1xf32> to vector<8x256xf32>
    %169 = arith.mulf %165, %168 : vector<8x256xf32>
    %c16_i32_61 = arith.constant 16 : i32
    %170 = tpu.dynamic_rotate %161 by %c16_i32_61 dim 1 : vector<8x256xf32>, i32 -> vector<8x256xf32>
    %cst_62 = arith.constant 0.000000e+00 : f32
    %171 = vector.broadcast %cst_62 : f32 to vector<8x256xf32>
    %172 = arith.select %35, %170, %171 : vector<8x256xi1>, vector<8x256xf32>
    %173 = vector.extract_strided_slice %162 {offsets = [0, 1, 0, 0], sizes = [1, 1, 8, 1], strides = [1, 1, 1, 1]} : vector<3x3x8x1xf32> to vector<1x1x8x1xf32>
    %174 = vector.shape_cast %173 : vector<1x1x8x1xf32> to vector<8x1xf32>
    %175 = vector.broadcast %174 : vector<8x1xf32> to vector<8x256xf32>
    %176 = arith.mulf %172, %175 : vector<8x256xf32>
    %177 = arith.addf %169, %176 : vector<8x256xf32>
    %c15_i32_63 = arith.constant 15 : i32
    %178 = tpu.dynamic_rotate %161 by %c15_i32_63 dim 1 : vector<8x256xf32>, i32 -> vector<8x256xf32>
    %cst_64 = arith.constant 0.000000e+00 : f32
    %179 = vector.broadcast %cst_64 : f32 to vector<8x256xf32>
    %180 = arith.select %53, %178, %179 : vector<8x256xi1>, vector<8x256xf32>
    %181 = vector.extract_strided_slice %162 {offsets = [0, 2, 0, 0], sizes = [1, 1, 8, 1], strides = [1, 1, 1, 1]} : vector<3x3x8x1xf32> to vector<1x1x8x1xf32>
    %182 = vector.shape_cast %181 : vector<1x1x8x1xf32> to vector<8x1xf32>
    %183 = vector.broadcast %182 : vector<8x1xf32> to vector<8x256xf32>
    %184 = arith.mulf %180, %183 : vector<8x256xf32>
    %185 = arith.addf %177, %184 : vector<8x256xf32>
    %c1_i32_65 = arith.constant 1 : i32
    %186 = tpu.dynamic_rotate %161 by %c1_i32_65 dim 1 : vector<8x256xf32>, i32 -> vector<8x256xf32>
    %cst_66 = arith.constant 0.000000e+00 : f32
    %187 = vector.broadcast %cst_66 : f32 to vector<8x256xf32>
    %188 = arith.select %71, %186, %187 : vector<8x256xi1>, vector<8x256xf32>
    %189 = vector.extract_strided_slice %162 {offsets = [1, 0, 0, 0], sizes = [1, 1, 8, 1], strides = [1, 1, 1, 1]} : vector<3x3x8x1xf32> to vector<1x1x8x1xf32>
    %190 = vector.shape_cast %189 : vector<1x1x8x1xf32> to vector<8x1xf32>
    %191 = vector.broadcast %190 : vector<8x1xf32> to vector<8x256xf32>
    %192 = arith.mulf %188, %191 : vector<8x256xf32>
    %193 = arith.addf %185, %192 : vector<8x256xf32>
    %194 = vector.extract_strided_slice %162 {offsets = [1, 1, 0, 0], sizes = [1, 1, 8, 1], strides = [1, 1, 1, 1]} : vector<3x3x8x1xf32> to vector<1x1x8x1xf32>
    %195 = vector.shape_cast %194 : vector<1x1x8x1xf32> to vector<8x1xf32>
    %196 = vector.broadcast %195 : vector<8x1xf32> to vector<8x256xf32>
    %197 = arith.mulf %161, %196 : vector<8x256xf32>
    %198 = arith.addf %193, %197 : vector<8x256xf32>
    %c255_i32_67 = arith.constant 255 : i32
    %199 = tpu.dynamic_rotate %161 by %c255_i32_67 dim 1 : vector<8x256xf32>, i32 -> vector<8x256xf32>
    %cst_68 = arith.constant 0.000000e+00 : f32
    %200 = vector.broadcast %cst_68 : f32 to vector<8x256xf32>
    %201 = arith.select %89, %199, %200 : vector<8x256xi1>, vector<8x256xf32>
    %202 = vector.extract_strided_slice %162 {offsets = [1, 2, 0, 0], sizes = [1, 1, 8, 1], strides = [1, 1, 1, 1]} : vector<3x3x8x1xf32> to vector<1x1x8x1xf32>
    %203 = vector.shape_cast %202 : vector<1x1x8x1xf32> to vector<8x1xf32>
    %204 = vector.broadcast %203 : vector<8x1xf32> to vector<8x256xf32>
    %205 = arith.mulf %201, %204 : vector<8x256xf32>
    %206 = arith.addf %198, %205 : vector<8x256xf32>
    %c241_i32_69 = arith.constant 241 : i32
    %207 = tpu.dynamic_rotate %161 by %c241_i32_69 dim 1 : vector<8x256xf32>, i32 -> vector<8x256xf32>
    %cst_70 = arith.constant 0.000000e+00 : f32
    %208 = vector.broadcast %cst_70 : f32 to vector<8x256xf32>
    %209 = arith.select %107, %207, %208 : vector<8x256xi1>, vector<8x256xf32>
    %210 = vector.extract_strided_slice %162 {offsets = [2, 0, 0, 0], sizes = [1, 1, 8, 1], strides = [1, 1, 1, 1]} : vector<3x3x8x1xf32> to vector<1x1x8x1xf32>
    %211 = vector.shape_cast %210 : vector<1x1x8x1xf32> to vector<8x1xf32>
    %212 = vector.broadcast %211 : vector<8x1xf32> to vector<8x256xf32>
    %213 = arith.mulf %209, %212 : vector<8x256xf32>
    %214 = arith.addf %206, %213 : vector<8x256xf32>
    %c240_i32_71 = arith.constant 240 : i32
    %215 = tpu.dynamic_rotate %161 by %c240_i32_71 dim 1 : vector<8x256xf32>, i32 -> vector<8x256xf32>
    %cst_72 = arith.constant 0.000000e+00 : f32
    %216 = vector.broadcast %cst_72 : f32 to vector<8x256xf32>
    %217 = arith.select %125, %215, %216 : vector<8x256xi1>, vector<8x256xf32>
    %218 = vector.extract_strided_slice %162 {offsets = [2, 1, 0, 0], sizes = [1, 1, 8, 1], strides = [1, 1, 1, 1]} : vector<3x3x8x1xf32> to vector<1x1x8x1xf32>
    %219 = vector.shape_cast %218 : vector<1x1x8x1xf32> to vector<8x1xf32>
    %220 = vector.broadcast %219 : vector<8x1xf32> to vector<8x256xf32>
    %221 = arith.mulf %217, %220 : vector<8x256xf32>
    %222 = arith.addf %214, %221 : vector<8x256xf32>
    %c239_i32_73 = arith.constant 239 : i32
    %223 = tpu.dynamic_rotate %161 by %c239_i32_73 dim 1 : vector<8x256xf32>, i32 -> vector<8x256xf32>
    %cst_74 = arith.constant 0.000000e+00 : f32
    %224 = vector.broadcast %cst_74 : f32 to vector<8x256xf32>
    %225 = arith.select %143, %223, %224 : vector<8x256xi1>, vector<8x256xf32>
    %226 = vector.extract_strided_slice %162 {offsets = [2, 2, 0, 0], sizes = [1, 1, 8, 1], strides = [1, 1, 1, 1]} : vector<3x3x8x1xf32> to vector<1x1x8x1xf32>
    %227 = vector.shape_cast %226 : vector<1x1x8x1xf32> to vector<8x1xf32>
    %228 = vector.broadcast %227 : vector<8x1xf32> to vector<8x256xf32>
    %229 = arith.mulf %225, %228 : vector<8x256xf32>
    %230 = arith.addf %222, %229 : vector<8x256xf32>
    %c0_75 = arith.constant 0 : index
    %c0_76 = arith.constant 0 : index
    %c0_77 = arith.constant 0 : index
    %231 = vector.load %arg7[%c0_75, %c0_76, %c0_77] : memref<7x8x1xf32, #tpu.memory_space<vmem>>, vector<7x8x1xf32>
    %c5_i32 = arith.constant 5 : i32
    %232 = tpu.dynamic_rotate %230 by %c5_i32 dim 0 : vector<8x256xf32>, i32 -> vector<8x256xf32>
    %233 = vector.extract_strided_slice %231 {offsets = [0, 0, 0], sizes = [1, 8, 1], strides = [1, 1, 1]} : vector<7x8x1xf32> to vector<1x8x1xf32>
    %234 = vector.shape_cast %233 : vector<1x8x1xf32> to vector<8x1xf32>
    %235 = vector.broadcast %234 : vector<8x1xf32> to vector<8x256xf32>
    %236 = arith.mulf %232, %235 : vector<8x256xf32>
    %c6_i32 = arith.constant 6 : i32
    %237 = tpu.dynamic_rotate %230 by %c6_i32 dim 0 : vector<8x256xf32>, i32 -> vector<8x256xf32>
    %238 = vector.extract_strided_slice %231 {offsets = [1, 0, 0], sizes = [1, 8, 1], strides = [1, 1, 1]} : vector<7x8x1xf32> to vector<1x8x1xf32>
    %239 = vector.shape_cast %238 : vector<1x8x1xf32> to vector<8x1xf32>
    %240 = vector.broadcast %239 : vector<8x1xf32> to vector<8x256xf32>
    %241 = arith.mulf %237, %240 : vector<8x256xf32>
    %242 = arith.addf %236, %241 : vector<8x256xf32>
    %c7_i32 = arith.constant 7 : i32
    %243 = tpu.dynamic_rotate %230 by %c7_i32 dim 0 : vector<8x256xf32>, i32 -> vector<8x256xf32>
    %244 = vector.extract_strided_slice %231 {offsets = [2, 0, 0], sizes = [1, 8, 1], strides = [1, 1, 1]} : vector<7x8x1xf32> to vector<1x8x1xf32>
    %245 = vector.shape_cast %244 : vector<1x8x1xf32> to vector<8x1xf32>
    %246 = vector.broadcast %245 : vector<8x1xf32> to vector<8x256xf32>
    %247 = arith.mulf %243, %246 : vector<8x256xf32>
    %248 = arith.addf %242, %247 : vector<8x256xf32>
    %249 = vector.extract_strided_slice %231 {offsets = [3, 0, 0], sizes = [1, 8, 1], strides = [1, 1, 1]} : vector<7x8x1xf32> to vector<1x8x1xf32>
    %250 = vector.shape_cast %249 : vector<1x8x1xf32> to vector<8x1xf32>
    %251 = vector.broadcast %250 : vector<8x1xf32> to vector<8x256xf32>
    %252 = arith.mulf %230, %251 : vector<8x256xf32>
    %253 = arith.addf %248, %252 : vector<8x256xf32>
    %c1_i32_78 = arith.constant 1 : i32
    %254 = tpu.dynamic_rotate %230 by %c1_i32_78 dim 0 : vector<8x256xf32>, i32 -> vector<8x256xf32>
    %255 = vector.extract_strided_slice %231 {offsets = [4, 0, 0], sizes = [1, 8, 1], strides = [1, 1, 1]} : vector<7x8x1xf32> to vector<1x8x1xf32>
    %256 = vector.shape_cast %255 : vector<1x8x1xf32> to vector<8x1xf32>
    %257 = vector.broadcast %256 : vector<8x1xf32> to vector<8x256xf32>
    %258 = arith.mulf %254, %257 : vector<8x256xf32>
    %259 = arith.addf %253, %258 : vector<8x256xf32>
    %c2_i32 = arith.constant 2 : i32
    %260 = tpu.dynamic_rotate %230 by %c2_i32 dim 0 : vector<8x256xf32>, i32 -> vector<8x256xf32>
    %261 = vector.extract_strided_slice %231 {offsets = [5, 0, 0], sizes = [1, 8, 1], strides = [1, 1, 1]} : vector<7x8x1xf32> to vector<1x8x1xf32>
    %262 = vector.shape_cast %261 : vector<1x8x1xf32> to vector<8x1xf32>
    %263 = vector.broadcast %262 : vector<8x1xf32> to vector<8x256xf32>
    %264 = arith.mulf %260, %263 : vector<8x256xf32>
    %265 = arith.addf %259, %264 : vector<8x256xf32>
    %c3_i32 = arith.constant 3 : i32
    %266 = tpu.dynamic_rotate %230 by %c3_i32 dim 0 : vector<8x256xf32>, i32 -> vector<8x256xf32>
    %267 = vector.extract_strided_slice %231 {offsets = [6, 0, 0], sizes = [1, 8, 1], strides = [1, 1, 1]} : vector<7x8x1xf32> to vector<1x8x1xf32>
    %268 = vector.shape_cast %267 : vector<1x8x1xf32> to vector<8x1xf32>
    %269 = vector.broadcast %268 : vector<8x1xf32> to vector<8x256xf32>
    %270 = arith.mulf %266, %269 : vector<8x256xf32>
    %271 = arith.addf %265, %270 : vector<8x256xf32>
    %272 = arith.mulf %271, %271 : vector<8x256xf32>
    %c4_i32 = arith.constant 4 : i32
    %273 = tpu.dynamic_rotate %271 by %c4_i32 dim 0 : vector<8x256xf32>, i32 -> vector<8x256xf32>
    %274 = arith.addf %271, %273 : vector<8x256xf32>
    %c4_i32_79 = arith.constant 4 : i32
    %275 = tpu.dynamic_rotate %272 by %c4_i32_79 dim 0 : vector<8x256xf32>, i32 -> vector<8x256xf32>
    %276 = arith.addf %272, %275 : vector<8x256xf32>
    %cst_80 = arith.constant dense<0.000000e+00> : vector<8xf32>
    %277 = vector.multi_reduction <add>, %274, %cst_80 [1] : vector<8x256xf32> to vector<8xf32>
    %278 = vector.shape_cast %277 : vector<8xf32> to vector<8x1xf32>
    %cst_81 = arith.constant dense<0.000000e+00> : vector<8xf32>
    %279 = vector.multi_reduction <add>, %276, %cst_81 [1] : vector<8x256xf32> to vector<8xf32>
    %280 = vector.shape_cast %279 : vector<8xf32> to vector<8x1xf32>
    %cst_82 = arith.constant 0.001953125 : f32
    %281 = vector.broadcast %cst_82 : f32 to vector<8x1xf32>
    %282 = arith.mulf %278, %281 : vector<8x1xf32>
    %cst_83 = arith.constant 0.001953125 : f32
    %283 = vector.broadcast %cst_83 : f32 to vector<8x1xf32>
    %284 = arith.mulf %280, %283 : vector<8x1xf32>
    %285 = arith.mulf %282, %282 : vector<8x1xf32>
    %286 = arith.subf %284, %285 : vector<8x1xf32>
    %287 = vector.broadcast %282 : vector<8x1xf32> to vector<8x256xf32>
    %288 = arith.subf %271, %287 : vector<8x256xf32>
    %cst_84 = arith.constant 9.99999974E-6 : f32
    %289 = vector.broadcast %cst_84 : f32 to vector<8x1xf32>
    %290 = arith.addf %286, %289 : vector<8x1xf32>
    %291 = math.rsqrt %290 : vector<8x1xf32>
    %292 = vector.broadcast %291 : vector<8x1xf32> to vector<8x256xf32>
    %293 = arith.mulf %288, %292 : vector<8x256xf32>
    %cst_85 = arith.constant 0.000000e+00 : f32
    %294 = vector.broadcast %cst_85 : f32 to vector<8x256xf32>
    %295 = arith.maximumf %293, %294 : vector<8x256xf32>
    %c0_86 = arith.constant 0 : index
    %c0_87 = arith.constant 0 : index
    %c0_88 = arith.constant 0 : index
    %c0_89 = arith.constant 0 : index
    %296 = vector.load %arg8[%c0_86, %c0_87, %c0_88, %c0_89] : memref<3x3x8x1xf32, #tpu.memory_space<vmem>>, vector<3x3x8x1xf32>
    %c17_i32_90 = arith.constant 17 : i32
    %297 = tpu.dynamic_rotate %295 by %c17_i32_90 dim 1 : vector<8x256xf32>, i32 -> vector<8x256xf32>
    %cst_91 = arith.constant 0.000000e+00 : f32
    %298 = vector.broadcast %cst_91 : f32 to vector<8x256xf32>
    %299 = arith.select %17, %297, %298 : vector<8x256xi1>, vector<8x256xf32>
    %300 = vector.extract_strided_slice %296 {offsets = [0, 0, 0, 0], sizes = [1, 1, 8, 1], strides = [1, 1, 1, 1]} : vector<3x3x8x1xf32> to vector<1x1x8x1xf32>
    %301 = vector.shape_cast %300 : vector<1x1x8x1xf32> to vector<8x1xf32>
    %302 = vector.broadcast %301 : vector<8x1xf32> to vector<8x256xf32>
    %303 = arith.mulf %299, %302 : vector<8x256xf32>
    %c16_i32_92 = arith.constant 16 : i32
    %304 = tpu.dynamic_rotate %295 by %c16_i32_92 dim 1 : vector<8x256xf32>, i32 -> vector<8x256xf32>
    %cst_93 = arith.constant 0.000000e+00 : f32
    %305 = vector.broadcast %cst_93 : f32 to vector<8x256xf32>
    %306 = arith.select %35, %304, %305 : vector<8x256xi1>, vector<8x256xf32>
    %307 = vector.extract_strided_slice %296 {offsets = [0, 1, 0, 0], sizes = [1, 1, 8, 1], strides = [1, 1, 1, 1]} : vector<3x3x8x1xf32> to vector<1x1x8x1xf32>
    %308 = vector.shape_cast %307 : vector<1x1x8x1xf32> to vector<8x1xf32>
    %309 = vector.broadcast %308 : vector<8x1xf32> to vector<8x256xf32>
    %310 = arith.mulf %306, %309 : vector<8x256xf32>
    %311 = arith.addf %303, %310 : vector<8x256xf32>
    %c15_i32_94 = arith.constant 15 : i32
    %312 = tpu.dynamic_rotate %295 by %c15_i32_94 dim 1 : vector<8x256xf32>, i32 -> vector<8x256xf32>
    %cst_95 = arith.constant 0.000000e+00 : f32
    %313 = vector.broadcast %cst_95 : f32 to vector<8x256xf32>
    %314 = arith.select %53, %312, %313 : vector<8x256xi1>, vector<8x256xf32>
    %315 = vector.extract_strided_slice %296 {offsets = [0, 2, 0, 0], sizes = [1, 1, 8, 1], strides = [1, 1, 1, 1]} : vector<3x3x8x1xf32> to vector<1x1x8x1xf32>
    %316 = vector.shape_cast %315 : vector<1x1x8x1xf32> to vector<8x1xf32>
    %317 = vector.broadcast %316 : vector<8x1xf32> to vector<8x256xf32>
    %318 = arith.mulf %314, %317 : vector<8x256xf32>
    %319 = arith.addf %311, %318 : vector<8x256xf32>
    %c1_i32_96 = arith.constant 1 : i32
    %320 = tpu.dynamic_rotate %295 by %c1_i32_96 dim 1 : vector<8x256xf32>, i32 -> vector<8x256xf32>
    %cst_97 = arith.constant 0.000000e+00 : f32
    %321 = vector.broadcast %cst_97 : f32 to vector<8x256xf32>
    %322 = arith.select %71, %320, %321 : vector<8x256xi1>, vector<8x256xf32>
    %323 = vector.extract_strided_slice %296 {offsets = [1, 0, 0, 0], sizes = [1, 1, 8, 1], strides = [1, 1, 1, 1]} : vector<3x3x8x1xf32> to vector<1x1x8x1xf32>
    %324 = vector.shape_cast %323 : vector<1x1x8x1xf32> to vector<8x1xf32>
    %325 = vector.broadcast %324 : vector<8x1xf32> to vector<8x256xf32>
    %326 = arith.mulf %322, %325 : vector<8x256xf32>
    %327 = arith.addf %319, %326 : vector<8x256xf32>
    %328 = vector.extract_strided_slice %296 {offsets = [1, 1, 0, 0], sizes = [1, 1, 8, 1], strides = [1, 1, 1, 1]} : vector<3x3x8x1xf32> to vector<1x1x8x1xf32>
    %329 = vector.shape_cast %328 : vector<1x1x8x1xf32> to vector<8x1xf32>
    %330 = vector.broadcast %329 : vector<8x1xf32> to vector<8x256xf32>
    %331 = arith.mulf %295, %330 : vector<8x256xf32>
    %332 = arith.addf %327, %331 : vector<8x256xf32>
    %c255_i32_98 = arith.constant 255 : i32
    %333 = tpu.dynamic_rotate %295 by %c255_i32_98 dim 1 : vector<8x256xf32>, i32 -> vector<8x256xf32>
    %cst_99 = arith.constant 0.000000e+00 : f32
    %334 = vector.broadcast %cst_99 : f32 to vector<8x256xf32>
    %335 = arith.select %89, %333, %334 : vector<8x256xi1>, vector<8x256xf32>
    %336 = vector.extract_strided_slice %296 {offsets = [1, 2, 0, 0], sizes = [1, 1, 8, 1], strides = [1, 1, 1, 1]} : vector<3x3x8x1xf32> to vector<1x1x8x1xf32>
    %337 = vector.shape_cast %336 : vector<1x1x8x1xf32> to vector<8x1xf32>
    %338 = vector.broadcast %337 : vector<8x1xf32> to vector<8x256xf32>
    %339 = arith.mulf %335, %338 : vector<8x256xf32>
    %340 = arith.addf %332, %339 : vector<8x256xf32>
    %c241_i32_100 = arith.constant 241 : i32
    %341 = tpu.dynamic_rotate %295 by %c241_i32_100 dim 1 : vector<8x256xf32>, i32 -> vector<8x256xf32>
    %cst_101 = arith.constant 0.000000e+00 : f32
    %342 = vector.broadcast %cst_101 : f32 to vector<8x256xf32>
    %343 = arith.select %107, %341, %342 : vector<8x256xi1>, vector<8x256xf32>
    %344 = vector.extract_strided_slice %296 {offsets = [2, 0, 0, 0], sizes = [1, 1, 8, 1], strides = [1, 1, 1, 1]} : vector<3x3x8x1xf32> to vector<1x1x8x1xf32>
    %345 = vector.shape_cast %344 : vector<1x1x8x1xf32> to vector<8x1xf32>
    %346 = vector.broadcast %345 : vector<8x1xf32> to vector<8x256xf32>
    %347 = arith.mulf %343, %346 : vector<8x256xf32>
    %348 = arith.addf %340, %347 : vector<8x256xf32>
    %c240_i32_102 = arith.constant 240 : i32
    %349 = tpu.dynamic_rotate %295 by %c240_i32_102 dim 1 : vector<8x256xf32>, i32 -> vector<8x256xf32>
    %cst_103 = arith.constant 0.000000e+00 : f32
    %350 = vector.broadcast %cst_103 : f32 to vector<8x256xf32>
    %351 = arith.select %125, %349, %350 : vector<8x256xi1>, vector<8x256xf32>
    %352 = vector.extract_strided_slice %296 {offsets = [2, 1, 0, 0], sizes = [1, 1, 8, 1], strides = [1, 1, 1, 1]} : vector<3x3x8x1xf32> to vector<1x1x8x1xf32>
    %353 = vector.shape_cast %352 : vector<1x1x8x1xf32> to vector<8x1xf32>
    %354 = vector.broadcast %353 : vector<8x1xf32> to vector<8x256xf32>
    %355 = arith.mulf %351, %354 : vector<8x256xf32>
    %356 = arith.addf %348, %355 : vector<8x256xf32>
    %c239_i32_104 = arith.constant 239 : i32
    %357 = tpu.dynamic_rotate %295 by %c239_i32_104 dim 1 : vector<8x256xf32>, i32 -> vector<8x256xf32>
    %cst_105 = arith.constant 0.000000e+00 : f32
    %358 = vector.broadcast %cst_105 : f32 to vector<8x256xf32>
    %359 = arith.select %143, %357, %358 : vector<8x256xi1>, vector<8x256xf32>
    %360 = vector.extract_strided_slice %296 {offsets = [2, 2, 0, 0], sizes = [1, 1, 8, 1], strides = [1, 1, 1, 1]} : vector<3x3x8x1xf32> to vector<1x1x8x1xf32>
    %361 = vector.shape_cast %360 : vector<1x1x8x1xf32> to vector<8x1xf32>
    %362 = vector.broadcast %361 : vector<8x1xf32> to vector<8x256xf32>
    %363 = arith.mulf %359, %362 : vector<8x256xf32>
    %364 = arith.addf %356, %363 : vector<8x256xf32>
    %c0_106 = arith.constant 0 : index
    %c0_107 = arith.constant 0 : index
    %c0_108 = arith.constant 0 : index
    %365 = vector.load %arg9[%c0_106, %c0_107, %c0_108] : memref<7x8x1xf32, #tpu.memory_space<vmem>>, vector<7x8x1xf32>
    %c5_i32_109 = arith.constant 5 : i32
    %366 = tpu.dynamic_rotate %364 by %c5_i32_109 dim 0 : vector<8x256xf32>, i32 -> vector<8x256xf32>
    %367 = vector.extract_strided_slice %365 {offsets = [0, 0, 0], sizes = [1, 8, 1], strides = [1, 1, 1]} : vector<7x8x1xf32> to vector<1x8x1xf32>
    %368 = vector.shape_cast %367 : vector<1x8x1xf32> to vector<8x1xf32>
    %369 = vector.broadcast %368 : vector<8x1xf32> to vector<8x256xf32>
    %370 = arith.mulf %366, %369 : vector<8x256xf32>
    %c6_i32_110 = arith.constant 6 : i32
    %371 = tpu.dynamic_rotate %364 by %c6_i32_110 dim 0 : vector<8x256xf32>, i32 -> vector<8x256xf32>
    %372 = vector.extract_strided_slice %365 {offsets = [1, 0, 0], sizes = [1, 8, 1], strides = [1, 1, 1]} : vector<7x8x1xf32> to vector<1x8x1xf32>
    %373 = vector.shape_cast %372 : vector<1x8x1xf32> to vector<8x1xf32>
    %374 = vector.broadcast %373 : vector<8x1xf32> to vector<8x256xf32>
    %375 = arith.mulf %371, %374 : vector<8x256xf32>
    %376 = arith.addf %370, %375 : vector<8x256xf32>
    %c7_i32_111 = arith.constant 7 : i32
    %377 = tpu.dynamic_rotate %364 by %c7_i32_111 dim 0 : vector<8x256xf32>, i32 -> vector<8x256xf32>
    %378 = vector.extract_strided_slice %365 {offsets = [2, 0, 0], sizes = [1, 8, 1], strides = [1, 1, 1]} : vector<7x8x1xf32> to vector<1x8x1xf32>
    %379 = vector.shape_cast %378 : vector<1x8x1xf32> to vector<8x1xf32>
    %380 = vector.broadcast %379 : vector<8x1xf32> to vector<8x256xf32>
    %381 = arith.mulf %377, %380 : vector<8x256xf32>
    %382 = arith.addf %376, %381 : vector<8x256xf32>
    %383 = vector.extract_strided_slice %365 {offsets = [3, 0, 0], sizes = [1, 8, 1], strides = [1, 1, 1]} : vector<7x8x1xf32> to vector<1x8x1xf32>
    %384 = vector.shape_cast %383 : vector<1x8x1xf32> to vector<8x1xf32>
    %385 = vector.broadcast %384 : vector<8x1xf32> to vector<8x256xf32>
    %386 = arith.mulf %364, %385 : vector<8x256xf32>
    %387 = arith.addf %382, %386 : vector<8x256xf32>
    %c1_i32_112 = arith.constant 1 : i32
    %388 = tpu.dynamic_rotate %364 by %c1_i32_112 dim 0 : vector<8x256xf32>, i32 -> vector<8x256xf32>
    %389 = vector.extract_strided_slice %365 {offsets = [4, 0, 0], sizes = [1, 8, 1], strides = [1, 1, 1]} : vector<7x8x1xf32> to vector<1x8x1xf32>
    %390 = vector.shape_cast %389 : vector<1x8x1xf32> to vector<8x1xf32>
    %391 = vector.broadcast %390 : vector<8x1xf32> to vector<8x256xf32>
    %392 = arith.mulf %388, %391 : vector<8x256xf32>
    %393 = arith.addf %387, %392 : vector<8x256xf32>
    %c2_i32_113 = arith.constant 2 : i32
    %394 = tpu.dynamic_rotate %364 by %c2_i32_113 dim 0 : vector<8x256xf32>, i32 -> vector<8x256xf32>
    %395 = vector.extract_strided_slice %365 {offsets = [5, 0, 0], sizes = [1, 8, 1], strides = [1, 1, 1]} : vector<7x8x1xf32> to vector<1x8x1xf32>
    %396 = vector.shape_cast %395 : vector<1x8x1xf32> to vector<8x1xf32>
    %397 = vector.broadcast %396 : vector<8x1xf32> to vector<8x256xf32>
    %398 = arith.mulf %394, %397 : vector<8x256xf32>
    %399 = arith.addf %393, %398 : vector<8x256xf32>
    %c3_i32_114 = arith.constant 3 : i32
    %400 = tpu.dynamic_rotate %364 by %c3_i32_114 dim 0 : vector<8x256xf32>, i32 -> vector<8x256xf32>
    %401 = vector.extract_strided_slice %365 {offsets = [6, 0, 0], sizes = [1, 8, 1], strides = [1, 1, 1]} : vector<7x8x1xf32> to vector<1x8x1xf32>
    %402 = vector.shape_cast %401 : vector<1x8x1xf32> to vector<8x1xf32>
    %403 = vector.broadcast %402 : vector<8x1xf32> to vector<8x256xf32>
    %404 = arith.mulf %400, %403 : vector<8x256xf32>
    %405 = arith.addf %399, %404 : vector<8x256xf32>
    %406 = arith.mulf %405, %405 : vector<8x256xf32>
    %c4_i32_115 = arith.constant 4 : i32
    %407 = tpu.dynamic_rotate %405 by %c4_i32_115 dim 0 : vector<8x256xf32>, i32 -> vector<8x256xf32>
    %408 = arith.addf %405, %407 : vector<8x256xf32>
    %c4_i32_116 = arith.constant 4 : i32
    %409 = tpu.dynamic_rotate %406 by %c4_i32_116 dim 0 : vector<8x256xf32>, i32 -> vector<8x256xf32>
    %410 = arith.addf %406, %409 : vector<8x256xf32>
    %cst_117 = arith.constant dense<0.000000e+00> : vector<8xf32>
    %411 = vector.multi_reduction <add>, %408, %cst_117 [1] : vector<8x256xf32> to vector<8xf32>
    %412 = vector.shape_cast %411 : vector<8xf32> to vector<8x1xf32>
    %cst_118 = arith.constant dense<0.000000e+00> : vector<8xf32>
    %413 = vector.multi_reduction <add>, %410, %cst_118 [1] : vector<8x256xf32> to vector<8xf32>
    %414 = vector.shape_cast %413 : vector<8xf32> to vector<8x1xf32>
    %cst_119 = arith.constant 0.001953125 : f32
    %415 = vector.broadcast %cst_119 : f32 to vector<8x1xf32>
    %416 = arith.mulf %412, %415 : vector<8x1xf32>
    %cst_120 = arith.constant 0.001953125 : f32
    %417 = vector.broadcast %cst_120 : f32 to vector<8x1xf32>
    %418 = arith.mulf %414, %417 : vector<8x1xf32>
    %419 = arith.mulf %416, %416 : vector<8x1xf32>
    %420 = arith.subf %418, %419 : vector<8x1xf32>
    %421 = vector.broadcast %416 : vector<8x1xf32> to vector<8x256xf32>
    %422 = arith.subf %405, %421 : vector<8x256xf32>
    %cst_121 = arith.constant 9.99999974E-6 : f32
    %423 = vector.broadcast %cst_121 : f32 to vector<8x1xf32>
    %424 = arith.addf %420, %423 : vector<8x1xf32>
    %425 = math.rsqrt %424 : vector<8x1xf32>
    %426 = vector.broadcast %425 : vector<8x1xf32> to vector<8x256xf32>
    %427 = arith.mulf %422, %426 : vector<8x256xf32>
    %c4 = arith.constant 4 : index
    %428 = memref.load %arg1[%c4] : memref<8xf32, #tpu.memory_space<smem>>
    %429 = vector.broadcast %428 : f32 to vector<8x256xf32>
    %430 = arith.mulf %429, %427 : vector<8x256xf32>
    %431 = arith.addf %159, %430 : vector<8x256xf32>
    %c0_122 = arith.constant 0 : index
    %c0_123 = arith.constant 0 : index
    %c0_124 = arith.constant 0 : index
    %c0_125 = arith.constant 0 : index
    %432 = vector.load %arg10[%c0_122, %c0_123, %c0_124, %c0_125] : memref<5x5x8x1xf32, #tpu.memory_space<vmem>>, vector<5x5x8x1xf32>
    %cst_126 = arith.constant 2.000000e+00 : f32
    %433 = vector.broadcast %cst_126 : f32 to vector<8x256xf32>
    %434 = arith.cmpf oge, %1, %433 : vector<8x256xf32>
    %cst_127 = arith.constant 1.700000e+01 : f32
    %435 = vector.broadcast %cst_127 : f32 to vector<8x256xf32>
    %436 = arith.cmpf ole, %1, %435 : vector<8x256xf32>
    %437 = arith.andi %434, %436 : vector<8x256xi1>
    %cst_128 = arith.constant 2.000000e+00 : f32
    %438 = vector.broadcast %cst_128 : f32 to vector<8x256xf32>
    %439 = arith.cmpf oge, %2, %438 : vector<8x256xf32>
    %cst_129 = arith.constant 1.700000e+01 : f32
    %440 = vector.broadcast %cst_129 : f32 to vector<8x256xf32>
    %441 = arith.cmpf ole, %2, %440 : vector<8x256xf32>
    %442 = arith.andi %439, %441 : vector<8x256xi1>
    %443 = arith.andi %437, %442 : vector<8x256xi1>
    %c34_i32 = arith.constant 34 : i32
    %444 = tpu.dynamic_rotate %161 by %c34_i32 dim 1 : vector<8x256xf32>, i32 -> vector<8x256xf32>
    %cst_130 = arith.constant 0.000000e+00 : f32
    %445 = vector.broadcast %cst_130 : f32 to vector<8x256xf32>
    %446 = arith.select %443, %444, %445 : vector<8x256xi1>, vector<8x256xf32>
    %447 = vector.extract_strided_slice %432 {offsets = [0, 0, 0, 0], sizes = [1, 1, 8, 1], strides = [1, 1, 1, 1]} : vector<5x5x8x1xf32> to vector<1x1x8x1xf32>
    %448 = vector.shape_cast %447 : vector<1x1x8x1xf32> to vector<8x1xf32>
    %449 = vector.broadcast %448 : vector<8x1xf32> to vector<8x256xf32>
    %450 = arith.mulf %446, %449 : vector<8x256xf32>
    %cst_131 = arith.constant 2.000000e+00 : f32
    %451 = vector.broadcast %cst_131 : f32 to vector<8x256xf32>
    %452 = arith.cmpf oge, %1, %451 : vector<8x256xf32>
    %cst_132 = arith.constant 1.700000e+01 : f32
    %453 = vector.broadcast %cst_132 : f32 to vector<8x256xf32>
    %454 = arith.cmpf ole, %1, %453 : vector<8x256xf32>
    %455 = arith.andi %452, %454 : vector<8x256xi1>
    %cst_133 = arith.constant 1.000000e+00 : f32
    %456 = vector.broadcast %cst_133 : f32 to vector<8x256xf32>
    %457 = arith.cmpf oge, %2, %456 : vector<8x256xf32>
    %cst_134 = arith.constant 1.600000e+01 : f32
    %458 = vector.broadcast %cst_134 : f32 to vector<8x256xf32>
    %459 = arith.cmpf ole, %2, %458 : vector<8x256xf32>
    %460 = arith.andi %457, %459 : vector<8x256xi1>
    %461 = arith.andi %455, %460 : vector<8x256xi1>
    %c33_i32 = arith.constant 33 : i32
    %462 = tpu.dynamic_rotate %161 by %c33_i32 dim 1 : vector<8x256xf32>, i32 -> vector<8x256xf32>
    %cst_135 = arith.constant 0.000000e+00 : f32
    %463 = vector.broadcast %cst_135 : f32 to vector<8x256xf32>
    %464 = arith.select %461, %462, %463 : vector<8x256xi1>, vector<8x256xf32>
    %465 = vector.extract_strided_slice %432 {offsets = [0, 1, 0, 0], sizes = [1, 1, 8, 1], strides = [1, 1, 1, 1]} : vector<5x5x8x1xf32> to vector<1x1x8x1xf32>
    %466 = vector.shape_cast %465 : vector<1x1x8x1xf32> to vector<8x1xf32>
    %467 = vector.broadcast %466 : vector<8x1xf32> to vector<8x256xf32>
    %468 = arith.mulf %464, %467 : vector<8x256xf32>
    %469 = arith.addf %450, %468 : vector<8x256xf32>
    %cst_136 = arith.constant 2.000000e+00 : f32
    %470 = vector.broadcast %cst_136 : f32 to vector<8x256xf32>
    %471 = arith.cmpf oge, %1, %470 : vector<8x256xf32>
    %cst_137 = arith.constant 1.700000e+01 : f32
    %472 = vector.broadcast %cst_137 : f32 to vector<8x256xf32>
    %473 = arith.cmpf ole, %1, %472 : vector<8x256xf32>
    %474 = arith.andi %471, %473 : vector<8x256xi1>
    %cst_138 = arith.constant 0.000000e+00 : f32
    %475 = vector.broadcast %cst_138 : f32 to vector<8x256xf32>
    %476 = arith.cmpf oge, %2, %475 : vector<8x256xf32>
    %cst_139 = arith.constant 1.500000e+01 : f32
    %477 = vector.broadcast %cst_139 : f32 to vector<8x256xf32>
    %478 = arith.cmpf ole, %2, %477 : vector<8x256xf32>
    %479 = arith.andi %476, %478 : vector<8x256xi1>
    %480 = arith.andi %474, %479 : vector<8x256xi1>
    %c32_i32 = arith.constant 32 : i32
    %481 = tpu.dynamic_rotate %161 by %c32_i32 dim 1 : vector<8x256xf32>, i32 -> vector<8x256xf32>
    %cst_140 = arith.constant 0.000000e+00 : f32
    %482 = vector.broadcast %cst_140 : f32 to vector<8x256xf32>
    %483 = arith.select %480, %481, %482 : vector<8x256xi1>, vector<8x256xf32>
    %484 = vector.extract_strided_slice %432 {offsets = [0, 2, 0, 0], sizes = [1, 1, 8, 1], strides = [1, 1, 1, 1]} : vector<5x5x8x1xf32> to vector<1x1x8x1xf32>
    %485 = vector.shape_cast %484 : vector<1x1x8x1xf32> to vector<8x1xf32>
    %486 = vector.broadcast %485 : vector<8x1xf32> to vector<8x256xf32>
    %487 = arith.mulf %483, %486 : vector<8x256xf32>
    %488 = arith.addf %469, %487 : vector<8x256xf32>
    %cst_141 = arith.constant 2.000000e+00 : f32
    %489 = vector.broadcast %cst_141 : f32 to vector<8x256xf32>
    %490 = arith.cmpf oge, %1, %489 : vector<8x256xf32>
    %cst_142 = arith.constant 1.700000e+01 : f32
    %491 = vector.broadcast %cst_142 : f32 to vector<8x256xf32>
    %492 = arith.cmpf ole, %1, %491 : vector<8x256xf32>
    %493 = arith.andi %490, %492 : vector<8x256xi1>
    %cst_143 = arith.constant -1.000000e+00 : f32
    %494 = vector.broadcast %cst_143 : f32 to vector<8x256xf32>
    %495 = arith.cmpf oge, %2, %494 : vector<8x256xf32>
    %cst_144 = arith.constant 1.400000e+01 : f32
    %496 = vector.broadcast %cst_144 : f32 to vector<8x256xf32>
    %497 = arith.cmpf ole, %2, %496 : vector<8x256xf32>
    %498 = arith.andi %495, %497 : vector<8x256xi1>
    %499 = arith.andi %493, %498 : vector<8x256xi1>
    %c31_i32 = arith.constant 31 : i32
    %500 = tpu.dynamic_rotate %161 by %c31_i32 dim 1 : vector<8x256xf32>, i32 -> vector<8x256xf32>
    %cst_145 = arith.constant 0.000000e+00 : f32
    %501 = vector.broadcast %cst_145 : f32 to vector<8x256xf32>
    %502 = arith.select %499, %500, %501 : vector<8x256xi1>, vector<8x256xf32>
    %503 = vector.extract_strided_slice %432 {offsets = [0, 3, 0, 0], sizes = [1, 1, 8, 1], strides = [1, 1, 1, 1]} : vector<5x5x8x1xf32> to vector<1x1x8x1xf32>
    %504 = vector.shape_cast %503 : vector<1x1x8x1xf32> to vector<8x1xf32>
    %505 = vector.broadcast %504 : vector<8x1xf32> to vector<8x256xf32>
    %506 = arith.mulf %502, %505 : vector<8x256xf32>
    %507 = arith.addf %488, %506 : vector<8x256xf32>
    %cst_146 = arith.constant 2.000000e+00 : f32
    %508 = vector.broadcast %cst_146 : f32 to vector<8x256xf32>
    %509 = arith.cmpf oge, %1, %508 : vector<8x256xf32>
    %cst_147 = arith.constant 1.700000e+01 : f32
    %510 = vector.broadcast %cst_147 : f32 to vector<8x256xf32>
    %511 = arith.cmpf ole, %1, %510 : vector<8x256xf32>
    %512 = arith.andi %509, %511 : vector<8x256xi1>
    %cst_148 = arith.constant -2.000000e+00 : f32
    %513 = vector.broadcast %cst_148 : f32 to vector<8x256xf32>
    %514 = arith.cmpf oge, %2, %513 : vector<8x256xf32>
    %cst_149 = arith.constant 1.300000e+01 : f32
    %515 = vector.broadcast %cst_149 : f32 to vector<8x256xf32>
    %516 = arith.cmpf ole, %2, %515 : vector<8x256xf32>
    %517 = arith.andi %514, %516 : vector<8x256xi1>
    %518 = arith.andi %512, %517 : vector<8x256xi1>
    %c30_i32 = arith.constant 30 : i32
    %519 = tpu.dynamic_rotate %161 by %c30_i32 dim 1 : vector<8x256xf32>, i32 -> vector<8x256xf32>
    %cst_150 = arith.constant 0.000000e+00 : f32
    %520 = vector.broadcast %cst_150 : f32 to vector<8x256xf32>
    %521 = arith.select %518, %519, %520 : vector<8x256xi1>, vector<8x256xf32>
    %522 = vector.extract_strided_slice %432 {offsets = [0, 4, 0, 0], sizes = [1, 1, 8, 1], strides = [1, 1, 1, 1]} : vector<5x5x8x1xf32> to vector<1x1x8x1xf32>
    %523 = vector.shape_cast %522 : vector<1x1x8x1xf32> to vector<8x1xf32>
    %524 = vector.broadcast %523 : vector<8x1xf32> to vector<8x256xf32>
    %525 = arith.mulf %521, %524 : vector<8x256xf32>
    %526 = arith.addf %507, %525 : vector<8x256xf32>
    %cst_151 = arith.constant 1.000000e+00 : f32
    %527 = vector.broadcast %cst_151 : f32 to vector<8x256xf32>
    %528 = arith.cmpf oge, %1, %527 : vector<8x256xf32>
    %cst_152 = arith.constant 1.600000e+01 : f32
    %529 = vector.broadcast %cst_152 : f32 to vector<8x256xf32>
    %530 = arith.cmpf ole, %1, %529 : vector<8x256xf32>
    %531 = arith.andi %528, %530 : vector<8x256xi1>
    %cst_153 = arith.constant 2.000000e+00 : f32
    %532 = vector.broadcast %cst_153 : f32 to vector<8x256xf32>
    %533 = arith.cmpf oge, %2, %532 : vector<8x256xf32>
    %cst_154 = arith.constant 1.700000e+01 : f32
    %534 = vector.broadcast %cst_154 : f32 to vector<8x256xf32>
    %535 = arith.cmpf ole, %2, %534 : vector<8x256xf32>
    %536 = arith.andi %533, %535 : vector<8x256xi1>
    %537 = arith.andi %531, %536 : vector<8x256xi1>
    %c18_i32 = arith.constant 18 : i32
    %538 = tpu.dynamic_rotate %161 by %c18_i32 dim 1 : vector<8x256xf32>, i32 -> vector<8x256xf32>
    %cst_155 = arith.constant 0.000000e+00 : f32
    %539 = vector.broadcast %cst_155 : f32 to vector<8x256xf32>
    %540 = arith.select %537, %538, %539 : vector<8x256xi1>, vector<8x256xf32>
    %541 = vector.extract_strided_slice %432 {offsets = [1, 0, 0, 0], sizes = [1, 1, 8, 1], strides = [1, 1, 1, 1]} : vector<5x5x8x1xf32> to vector<1x1x8x1xf32>
    %542 = vector.shape_cast %541 : vector<1x1x8x1xf32> to vector<8x1xf32>
    %543 = vector.broadcast %542 : vector<8x1xf32> to vector<8x256xf32>
    %544 = arith.mulf %540, %543 : vector<8x256xf32>
    %545 = arith.addf %526, %544 : vector<8x256xf32>
    %c17_i32_156 = arith.constant 17 : i32
    %546 = tpu.dynamic_rotate %161 by %c17_i32_156 dim 1 : vector<8x256xf32>, i32 -> vector<8x256xf32>
    %cst_157 = arith.constant 0.000000e+00 : f32
    %547 = vector.broadcast %cst_157 : f32 to vector<8x256xf32>
    %548 = arith.select %17, %546, %547 : vector<8x256xi1>, vector<8x256xf32>
    %549 = vector.extract_strided_slice %432 {offsets = [1, 1, 0, 0], sizes = [1, 1, 8, 1], strides = [1, 1, 1, 1]} : vector<5x5x8x1xf32> to vector<1x1x8x1xf32>
    %550 = vector.shape_cast %549 : vector<1x1x8x1xf32> to vector<8x1xf32>
    %551 = vector.broadcast %550 : vector<8x1xf32> to vector<8x256xf32>
    %552 = arith.mulf %548, %551 : vector<8x256xf32>
    %553 = arith.addf %545, %552 : vector<8x256xf32>
    %c16_i32_158 = arith.constant 16 : i32
    %554 = tpu.dynamic_rotate %161 by %c16_i32_158 dim 1 : vector<8x256xf32>, i32 -> vector<8x256xf32>
    %cst_159 = arith.constant 0.000000e+00 : f32
    %555 = vector.broadcast %cst_159 : f32 to vector<8x256xf32>
    %556 = arith.select %35, %554, %555 : vector<8x256xi1>, vector<8x256xf32>
    %557 = vector.extract_strided_slice %432 {offsets = [1, 2, 0, 0], sizes = [1, 1, 8, 1], strides = [1, 1, 1, 1]} : vector<5x5x8x1xf32> to vector<1x1x8x1xf32>
    %558 = vector.shape_cast %557 : vector<1x1x8x1xf32> to vector<8x1xf32>
    %559 = vector.broadcast %558 : vector<8x1xf32> to vector<8x256xf32>
    %560 = arith.mulf %556, %559 : vector<8x256xf32>
    %561 = arith.addf %553, %560 : vector<8x256xf32>
    %c15_i32_160 = arith.constant 15 : i32
    %562 = tpu.dynamic_rotate %161 by %c15_i32_160 dim 1 : vector<8x256xf32>, i32 -> vector<8x256xf32>
    %cst_161 = arith.constant 0.000000e+00 : f32
    %563 = vector.broadcast %cst_161 : f32 to vector<8x256xf32>
    %564 = arith.select %53, %562, %563 : vector<8x256xi1>, vector<8x256xf32>
    %565 = vector.extract_strided_slice %432 {offsets = [1, 3, 0, 0], sizes = [1, 1, 8, 1], strides = [1, 1, 1, 1]} : vector<5x5x8x1xf32> to vector<1x1x8x1xf32>
    %566 = vector.shape_cast %565 : vector<1x1x8x1xf32> to vector<8x1xf32>
    %567 = vector.broadcast %566 : vector<8x1xf32> to vector<8x256xf32>
    %568 = arith.mulf %564, %567 : vector<8x256xf32>
    %569 = arith.addf %561, %568 : vector<8x256xf32>
    %cst_162 = arith.constant 1.000000e+00 : f32
    %570 = vector.broadcast %cst_162 : f32 to vector<8x256xf32>
    %571 = arith.cmpf oge, %1, %570 : vector<8x256xf32>
    %cst_163 = arith.constant 1.600000e+01 : f32
    %572 = vector.broadcast %cst_163 : f32 to vector<8x256xf32>
    %573 = arith.cmpf ole, %1, %572 : vector<8x256xf32>
    %574 = arith.andi %571, %573 : vector<8x256xi1>
    %cst_164 = arith.constant -2.000000e+00 : f32
    %575 = vector.broadcast %cst_164 : f32 to vector<8x256xf32>
    %576 = arith.cmpf oge, %2, %575 : vector<8x256xf32>
    %cst_165 = arith.constant 1.300000e+01 : f32
    %577 = vector.broadcast %cst_165 : f32 to vector<8x256xf32>
    %578 = arith.cmpf ole, %2, %577 : vector<8x256xf32>
    %579 = arith.andi %576, %578 : vector<8x256xi1>
    %580 = arith.andi %574, %579 : vector<8x256xi1>
    %c14_i32 = arith.constant 14 : i32
    %581 = tpu.dynamic_rotate %161 by %c14_i32 dim 1 : vector<8x256xf32>, i32 -> vector<8x256xf32>
    %cst_166 = arith.constant 0.000000e+00 : f32
    %582 = vector.broadcast %cst_166 : f32 to vector<8x256xf32>
    %583 = arith.select %580, %581, %582 : vector<8x256xi1>, vector<8x256xf32>
    %584 = vector.extract_strided_slice %432 {offsets = [1, 4, 0, 0], sizes = [1, 1, 8, 1], strides = [1, 1, 1, 1]} : vector<5x5x8x1xf32> to vector<1x1x8x1xf32>
    %585 = vector.shape_cast %584 : vector<1x1x8x1xf32> to vector<8x1xf32>
    %586 = vector.broadcast %585 : vector<8x1xf32> to vector<8x256xf32>
    %587 = arith.mulf %583, %586 : vector<8x256xf32>
    %588 = arith.addf %569, %587 : vector<8x256xf32>
    %cst_167 = arith.constant 0.000000e+00 : f32
    %589 = vector.broadcast %cst_167 : f32 to vector<8x256xf32>
    %590 = arith.cmpf oge, %1, %589 : vector<8x256xf32>
    %cst_168 = arith.constant 1.500000e+01 : f32
    %591 = vector.broadcast %cst_168 : f32 to vector<8x256xf32>
    %592 = arith.cmpf ole, %1, %591 : vector<8x256xf32>
    %593 = arith.andi %590, %592 : vector<8x256xi1>
    %cst_169 = arith.constant 2.000000e+00 : f32
    %594 = vector.broadcast %cst_169 : f32 to vector<8x256xf32>
    %595 = arith.cmpf oge, %2, %594 : vector<8x256xf32>
    %cst_170 = arith.constant 1.700000e+01 : f32
    %596 = vector.broadcast %cst_170 : f32 to vector<8x256xf32>
    %597 = arith.cmpf ole, %2, %596 : vector<8x256xf32>
    %598 = arith.andi %595, %597 : vector<8x256xi1>
    %599 = arith.andi %593, %598 : vector<8x256xi1>
    %c2_i32_171 = arith.constant 2 : i32
    %600 = tpu.dynamic_rotate %161 by %c2_i32_171 dim 1 : vector<8x256xf32>, i32 -> vector<8x256xf32>
    %cst_172 = arith.constant 0.000000e+00 : f32
    %601 = vector.broadcast %cst_172 : f32 to vector<8x256xf32>
    %602 = arith.select %599, %600, %601 : vector<8x256xi1>, vector<8x256xf32>
    %603 = vector.extract_strided_slice %432 {offsets = [2, 0, 0, 0], sizes = [1, 1, 8, 1], strides = [1, 1, 1, 1]} : vector<5x5x8x1xf32> to vector<1x1x8x1xf32>
    %604 = vector.shape_cast %603 : vector<1x1x8x1xf32> to vector<8x1xf32>
    %605 = vector.broadcast %604 : vector<8x1xf32> to vector<8x256xf32>
    %606 = arith.mulf %602, %605 : vector<8x256xf32>
    %607 = arith.addf %588, %606 : vector<8x256xf32>
    %c1_i32_173 = arith.constant 1 : i32
    %608 = tpu.dynamic_rotate %161 by %c1_i32_173 dim 1 : vector<8x256xf32>, i32 -> vector<8x256xf32>
    %cst_174 = arith.constant 0.000000e+00 : f32
    %609 = vector.broadcast %cst_174 : f32 to vector<8x256xf32>
    %610 = arith.select %71, %608, %609 : vector<8x256xi1>, vector<8x256xf32>
    %611 = vector.extract_strided_slice %432 {offsets = [2, 1, 0, 0], sizes = [1, 1, 8, 1], strides = [1, 1, 1, 1]} : vector<5x5x8x1xf32> to vector<1x1x8x1xf32>
    %612 = vector.shape_cast %611 : vector<1x1x8x1xf32> to vector<8x1xf32>
    %613 = vector.broadcast %612 : vector<8x1xf32> to vector<8x256xf32>
    %614 = arith.mulf %610, %613 : vector<8x256xf32>
    %615 = arith.addf %607, %614 : vector<8x256xf32>
    %616 = vector.extract_strided_slice %432 {offsets = [2, 2, 0, 0], sizes = [1, 1, 8, 1], strides = [1, 1, 1, 1]} : vector<5x5x8x1xf32> to vector<1x1x8x1xf32>
    %617 = vector.shape_cast %616 : vector<1x1x8x1xf32> to vector<8x1xf32>
    %618 = vector.broadcast %617 : vector<8x1xf32> to vector<8x256xf32>
    %619 = arith.mulf %161, %618 : vector<8x256xf32>
    %620 = arith.addf %615, %619 : vector<8x256xf32>
    %c255_i32_175 = arith.constant 255 : i32
    %621 = tpu.dynamic_rotate %161 by %c255_i32_175 dim 1 : vector<8x256xf32>, i32 -> vector<8x256xf32>
    %cst_176 = arith.constant 0.000000e+00 : f32
    %622 = vector.broadcast %cst_176 : f32 to vector<8x256xf32>
    %623 = arith.select %89, %621, %622 : vector<8x256xi1>, vector<8x256xf32>
    %624 = vector.extract_strided_slice %432 {offsets = [2, 3, 0, 0], sizes = [1, 1, 8, 1], strides = [1, 1, 1, 1]} : vector<5x5x8x1xf32> to vector<1x1x8x1xf32>
    %625 = vector.shape_cast %624 : vector<1x1x8x1xf32> to vector<8x1xf32>
    %626 = vector.broadcast %625 : vector<8x1xf32> to vector<8x256xf32>
    %627 = arith.mulf %623, %626 : vector<8x256xf32>
    %628 = arith.addf %620, %627 : vector<8x256xf32>
    %cst_177 = arith.constant 0.000000e+00 : f32
    %629 = vector.broadcast %cst_177 : f32 to vector<8x256xf32>
    %630 = arith.cmpf oge, %1, %629 : vector<8x256xf32>
    %cst_178 = arith.constant 1.500000e+01 : f32
    %631 = vector.broadcast %cst_178 : f32 to vector<8x256xf32>
    %632 = arith.cmpf ole, %1, %631 : vector<8x256xf32>
    %633 = arith.andi %630, %632 : vector<8x256xi1>
    %cst_179 = arith.constant -2.000000e+00 : f32
    %634 = vector.broadcast %cst_179 : f32 to vector<8x256xf32>
    %635 = arith.cmpf oge, %2, %634 : vector<8x256xf32>
    %cst_180 = arith.constant 1.300000e+01 : f32
    %636 = vector.broadcast %cst_180 : f32 to vector<8x256xf32>
    %637 = arith.cmpf ole, %2, %636 : vector<8x256xf32>
    %638 = arith.andi %635, %637 : vector<8x256xi1>
    %639 = arith.andi %633, %638 : vector<8x256xi1>
    %c254_i32 = arith.constant 254 : i32
    %640 = tpu.dynamic_rotate %161 by %c254_i32 dim 1 : vector<8x256xf32>, i32 -> vector<8x256xf32>
    %cst_181 = arith.constant 0.000000e+00 : f32
    %641 = vector.broadcast %cst_181 : f32 to vector<8x256xf32>
    %642 = arith.select %639, %640, %641 : vector<8x256xi1>, vector<8x256xf32>
    %643 = vector.extract_strided_slice %432 {offsets = [2, 4, 0, 0], sizes = [1, 1, 8, 1], strides = [1, 1, 1, 1]} : vector<5x5x8x1xf32> to vector<1x1x8x1xf32>
    %644 = vector.shape_cast %643 : vector<1x1x8x1xf32> to vector<8x1xf32>
    %645 = vector.broadcast %644 : vector<8x1xf32> to vector<8x256xf32>
    %646 = arith.mulf %642, %645 : vector<8x256xf32>
    %647 = arith.addf %628, %646 : vector<8x256xf32>
    %cst_182 = arith.constant -1.000000e+00 : f32
    %648 = vector.broadcast %cst_182 : f32 to vector<8x256xf32>
    %649 = arith.cmpf oge, %1, %648 : vector<8x256xf32>
    %cst_183 = arith.constant 1.400000e+01 : f32
    %650 = vector.broadcast %cst_183 : f32 to vector<8x256xf32>
    %651 = arith.cmpf ole, %1, %650 : vector<8x256xf32>
    %652 = arith.andi %649, %651 : vector<8x256xi1>
    %cst_184 = arith.constant 2.000000e+00 : f32
    %653 = vector.broadcast %cst_184 : f32 to vector<8x256xf32>
    %654 = arith.cmpf oge, %2, %653 : vector<8x256xf32>
    %cst_185 = arith.constant 1.700000e+01 : f32
    %655 = vector.broadcast %cst_185 : f32 to vector<8x256xf32>
    %656 = arith.cmpf ole, %2, %655 : vector<8x256xf32>
    %657 = arith.andi %654, %656 : vector<8x256xi1>
    %658 = arith.andi %652, %657 : vector<8x256xi1>
    %c242_i32 = arith.constant 242 : i32
    %659 = tpu.dynamic_rotate %161 by %c242_i32 dim 1 : vector<8x256xf32>, i32 -> vector<8x256xf32>
    %cst_186 = arith.constant 0.000000e+00 : f32
    %660 = vector.broadcast %cst_186 : f32 to vector<8x256xf32>
    %661 = arith.select %658, %659, %660 : vector<8x256xi1>, vector<8x256xf32>
    %662 = vector.extract_strided_slice %432 {offsets = [3, 0, 0, 0], sizes = [1, 1, 8, 1], strides = [1, 1, 1, 1]} : vector<5x5x8x1xf32> to vector<1x1x8x1xf32>
    %663 = vector.shape_cast %662 : vector<1x1x8x1xf32> to vector<8x1xf32>
    %664 = vector.broadcast %663 : vector<8x1xf32> to vector<8x256xf32>
    %665 = arith.mulf %661, %664 : vector<8x256xf32>
    %666 = arith.addf %647, %665 : vector<8x256xf32>
    %c241_i32_187 = arith.constant 241 : i32
    %667 = tpu.dynamic_rotate %161 by %c241_i32_187 dim 1 : vector<8x256xf32>, i32 -> vector<8x256xf32>
    %cst_188 = arith.constant 0.000000e+00 : f32
    %668 = vector.broadcast %cst_188 : f32 to vector<8x256xf32>
    %669 = arith.select %107, %667, %668 : vector<8x256xi1>, vector<8x256xf32>
    %670 = vector.extract_strided_slice %432 {offsets = [3, 1, 0, 0], sizes = [1, 1, 8, 1], strides = [1, 1, 1, 1]} : vector<5x5x8x1xf32> to vector<1x1x8x1xf32>
    %671 = vector.shape_cast %670 : vector<1x1x8x1xf32> to vector<8x1xf32>
    %672 = vector.broadcast %671 : vector<8x1xf32> to vector<8x256xf32>
    %673 = arith.mulf %669, %672 : vector<8x256xf32>
    %674 = arith.addf %666, %673 : vector<8x256xf32>
    %c240_i32_189 = arith.constant 240 : i32
    %675 = tpu.dynamic_rotate %161 by %c240_i32_189 dim 1 : vector<8x256xf32>, i32 -> vector<8x256xf32>
    %cst_190 = arith.constant 0.000000e+00 : f32
    %676 = vector.broadcast %cst_190 : f32 to vector<8x256xf32>
    %677 = arith.select %125, %675, %676 : vector<8x256xi1>, vector<8x256xf32>
    %678 = vector.extract_strided_slice %432 {offsets = [3, 2, 0, 0], sizes = [1, 1, 8, 1], strides = [1, 1, 1, 1]} : vector<5x5x8x1xf32> to vector<1x1x8x1xf32>
    %679 = vector.shape_cast %678 : vector<1x1x8x1xf32> to vector<8x1xf32>
    %680 = vector.broadcast %679 : vector<8x1xf32> to vector<8x256xf32>
    %681 = arith.mulf %677, %680 : vector<8x256xf32>
    %682 = arith.addf %674, %681 : vector<8x256xf32>
    %c239_i32_191 = arith.constant 239 : i32
    %683 = tpu.dynamic_rotate %161 by %c239_i32_191 dim 1 : vector<8x256xf32>, i32 -> vector<8x256xf32>
    %cst_192 = arith.constant 0.000000e+00 : f32
    %684 = vector.broadcast %cst_192 : f32 to vector<8x256xf32>
    %685 = arith.select %143, %683, %684 : vector<8x256xi1>, vector<8x256xf32>
    %686 = vector.extract_strided_slice %432 {offsets = [3, 3, 0, 0], sizes = [1, 1, 8, 1], strides = [1, 1, 1, 1]} : vector<5x5x8x1xf32> to vector<1x1x8x1xf32>
    %687 = vector.shape_cast %686 : vector<1x1x8x1xf32> to vector<8x1xf32>
    %688 = vector.broadcast %687 : vector<8x1xf32> to vector<8x256xf32>
    %689 = arith.mulf %685, %688 : vector<8x256xf32>
    %690 = arith.addf %682, %689 : vector<8x256xf32>
    %cst_193 = arith.constant -1.000000e+00 : f32
    %691 = vector.broadcast %cst_193 : f32 to vector<8x256xf32>
    %692 = arith.cmpf oge, %1, %691 : vector<8x256xf32>
    %cst_194 = arith.constant 1.400000e+01 : f32
    %693 = vector.broadcast %cst_194 : f32 to vector<8x256xf32>
    %694 = arith.cmpf ole, %1, %693 : vector<8x256xf32>
    %695 = arith.andi %692, %694 : vector<8x256xi1>
    %cst_195 = arith.constant -2.000000e+00 : f32
    %696 = vector.broadcast %cst_195 : f32 to vector<8x256xf32>
    %697 = arith.cmpf oge, %2, %696 : vector<8x256xf32>
    %cst_196 = arith.constant 1.300000e+01 : f32
    %698 = vector.broadcast %cst_196 : f32 to vector<8x256xf32>
    %699 = arith.cmpf ole, %2, %698 : vector<8x256xf32>
    %700 = arith.andi %697, %699 : vector<8x256xi1>
    %701 = arith.andi %695, %700 : vector<8x256xi1>
    %c238_i32 = arith.constant 238 : i32
    %702 = tpu.dynamic_rotate %161 by %c238_i32 dim 1 : vector<8x256xf32>, i32 -> vector<8x256xf32>
    %cst_197 = arith.constant 0.000000e+00 : f32
    %703 = vector.broadcast %cst_197 : f32 to vector<8x256xf32>
    %704 = arith.select %701, %702, %703 : vector<8x256xi1>, vector<8x256xf32>
    %705 = vector.extract_strided_slice %432 {offsets = [3, 4, 0, 0], sizes = [1, 1, 8, 1], strides = [1, 1, 1, 1]} : vector<5x5x8x1xf32> to vector<1x1x8x1xf32>
    %706 = vector.shape_cast %705 : vector<1x1x8x1xf32> to vector<8x1xf32>
    %707 = vector.broadcast %706 : vector<8x1xf32> to vector<8x256xf32>
    %708 = arith.mulf %704, %707 : vector<8x256xf32>
    %709 = arith.addf %690, %708 : vector<8x256xf32>
    %cst_198 = arith.constant -2.000000e+00 : f32
    %710 = vector.broadcast %cst_198 : f32 to vector<8x256xf32>
    %711 = arith.cmpf oge, %1, %710 : vector<8x256xf32>
    %cst_199 = arith.constant 1.300000e+01 : f32
    %712 = vector.broadcast %cst_199 : f32 to vector<8x256xf32>
    %713 = arith.cmpf ole, %1, %712 : vector<8x256xf32>
    %714 = arith.andi %711, %713 : vector<8x256xi1>
    %cst_200 = arith.constant 2.000000e+00 : f32
    %715 = vector.broadcast %cst_200 : f32 to vector<8x256xf32>
    %716 = arith.cmpf oge, %2, %715 : vector<8x256xf32>
    %cst_201 = arith.constant 1.700000e+01 : f32
    %717 = vector.broadcast %cst_201 : f32 to vector<8x256xf32>
    %718 = arith.cmpf ole, %2, %717 : vector<8x256xf32>
    %719 = arith.andi %716, %718 : vector<8x256xi1>
    %720 = arith.andi %714, %719 : vector<8x256xi1>
    %c226_i32 = arith.constant 226 : i32
    %721 = tpu.dynamic_rotate %161 by %c226_i32 dim 1 : vector<8x256xf32>, i32 -> vector<8x256xf32>
    %cst_202 = arith.constant 0.000000e+00 : f32
    %722 = vector.broadcast %cst_202 : f32 to vector<8x256xf32>
    %723 = arith.select %720, %721, %722 : vector<8x256xi1>, vector<8x256xf32>
    %724 = vector.extract_strided_slice %432 {offsets = [4, 0, 0, 0], sizes = [1, 1, 8, 1], strides = [1, 1, 1, 1]} : vector<5x5x8x1xf32> to vector<1x1x8x1xf32>
    %725 = vector.shape_cast %724 : vector<1x1x8x1xf32> to vector<8x1xf32>
    %726 = vector.broadcast %725 : vector<8x1xf32> to vector<8x256xf32>
    %727 = arith.mulf %723, %726 : vector<8x256xf32>
    %728 = arith.addf %709, %727 : vector<8x256xf32>
    %cst_203 = arith.constant -2.000000e+00 : f32
    %729 = vector.broadcast %cst_203 : f32 to vector<8x256xf32>
    %730 = arith.cmpf oge, %1, %729 : vector<8x256xf32>
    %cst_204 = arith.constant 1.300000e+01 : f32
    %731 = vector.broadcast %cst_204 : f32 to vector<8x256xf32>
    %732 = arith.cmpf ole, %1, %731 : vector<8x256xf32>
    %733 = arith.andi %730, %732 : vector<8x256xi1>
    %cst_205 = arith.constant 1.000000e+00 : f32
    %734 = vector.broadcast %cst_205 : f32 to vector<8x256xf32>
    %735 = arith.cmpf oge, %2, %734 : vector<8x256xf32>
    %cst_206 = arith.constant 1.600000e+01 : f32
    %736 = vector.broadcast %cst_206 : f32 to vector<8x256xf32>
    %737 = arith.cmpf ole, %2, %736 : vector<8x256xf32>
    %738 = arith.andi %735, %737 : vector<8x256xi1>
    %739 = arith.andi %733, %738 : vector<8x256xi1>
    %c225_i32 = arith.constant 225 : i32
    %740 = tpu.dynamic_rotate %161 by %c225_i32 dim 1 : vector<8x256xf32>, i32 -> vector<8x256xf32>
    %cst_207 = arith.constant 0.000000e+00 : f32
    %741 = vector.broadcast %cst_207 : f32 to vector<8x256xf32>
    %742 = arith.select %739, %740, %741 : vector<8x256xi1>, vector<8x256xf32>
    %743 = vector.extract_strided_slice %432 {offsets = [4, 1, 0, 0], sizes = [1, 1, 8, 1], strides = [1, 1, 1, 1]} : vector<5x5x8x1xf32> to vector<1x1x8x1xf32>
    %744 = vector.shape_cast %743 : vector<1x1x8x1xf32> to vector<8x1xf32>
    %745 = vector.broadcast %744 : vector<8x1xf32> to vector<8x256xf32>
    %746 = arith.mulf %742, %745 : vector<8x256xf32>
    %747 = arith.addf %728, %746 : vector<8x256xf32>
    %cst_208 = arith.constant -2.000000e+00 : f32
    %748 = vector.broadcast %cst_208 : f32 to vector<8x256xf32>
    %749 = arith.cmpf oge, %1, %748 : vector<8x256xf32>
    %cst_209 = arith.constant 1.300000e+01 : f32
    %750 = vector.broadcast %cst_209 : f32 to vector<8x256xf32>
    %751 = arith.cmpf ole, %1, %750 : vector<8x256xf32>
    %752 = arith.andi %749, %751 : vector<8x256xi1>
    %cst_210 = arith.constant 0.000000e+00 : f32
    %753 = vector.broadcast %cst_210 : f32 to vector<8x256xf32>
    %754 = arith.cmpf oge, %2, %753 : vector<8x256xf32>
    %cst_211 = arith.constant 1.500000e+01 : f32
    %755 = vector.broadcast %cst_211 : f32 to vector<8x256xf32>
    %756 = arith.cmpf ole, %2, %755 : vector<8x256xf32>
    %757 = arith.andi %754, %756 : vector<8x256xi1>
    %758 = arith.andi %752, %757 : vector<8x256xi1>
    %c224_i32 = arith.constant 224 : i32
    %759 = tpu.dynamic_rotate %161 by %c224_i32 dim 1 : vector<8x256xf32>, i32 -> vector<8x256xf32>
    %cst_212 = arith.constant 0.000000e+00 : f32
    %760 = vector.broadcast %cst_212 : f32 to vector<8x256xf32>
    %761 = arith.select %758, %759, %760 : vector<8x256xi1>, vector<8x256xf32>
    %762 = vector.extract_strided_slice %432 {offsets = [4, 2, 0, 0], sizes = [1, 1, 8, 1], strides = [1, 1, 1, 1]} : vector<5x5x8x1xf32> to vector<1x1x8x1xf32>
    %763 = vector.shape_cast %762 : vector<1x1x8x1xf32> to vector<8x1xf32>
    %764 = vector.broadcast %763 : vector<8x1xf32> to vector<8x256xf32>
    %765 = arith.mulf %761, %764 : vector<8x256xf32>
    %766 = arith.addf %747, %765 : vector<8x256xf32>
    %cst_213 = arith.constant -2.000000e+00 : f32
    %767 = vector.broadcast %cst_213 : f32 to vector<8x256xf32>
    %768 = arith.cmpf oge, %1, %767 : vector<8x256xf32>
    %cst_214 = arith.constant 1.300000e+01 : f32
    %769 = vector.broadcast %cst_214 : f32 to vector<8x256xf32>
    %770 = arith.cmpf ole, %1, %769 : vector<8x256xf32>
    %771 = arith.andi %768, %770 : vector<8x256xi1>
    %cst_215 = arith.constant -1.000000e+00 : f32
    %772 = vector.broadcast %cst_215 : f32 to vector<8x256xf32>
    %773 = arith.cmpf oge, %2, %772 : vector<8x256xf32>
    %cst_216 = arith.constant 1.400000e+01 : f32
    %774 = vector.broadcast %cst_216 : f32 to vector<8x256xf32>
    %775 = arith.cmpf ole, %2, %774 : vector<8x256xf32>
    %776 = arith.andi %773, %775 : vector<8x256xi1>
    %777 = arith.andi %771, %776 : vector<8x256xi1>
    %c223_i32 = arith.constant 223 : i32
    %778 = tpu.dynamic_rotate %161 by %c223_i32 dim 1 : vector<8x256xf32>, i32 -> vector<8x256xf32>
    %cst_217 = arith.constant 0.000000e+00 : f32
    %779 = vector.broadcast %cst_217 : f32 to vector<8x256xf32>
    %780 = arith.select %777, %778, %779 : vector<8x256xi1>, vector<8x256xf32>
    %781 = vector.extract_strided_slice %432 {offsets = [4, 3, 0, 0], sizes = [1, 1, 8, 1], strides = [1, 1, 1, 1]} : vector<5x5x8x1xf32> to vector<1x1x8x1xf32>
    %782 = vector.shape_cast %781 : vector<1x1x8x1xf32> to vector<8x1xf32>
    %783 = vector.broadcast %782 : vector<8x1xf32> to vector<8x256xf32>
    %784 = arith.mulf %780, %783 : vector<8x256xf32>
    %785 = arith.addf %766, %784 : vector<8x256xf32>
    %cst_218 = arith.constant -2.000000e+00 : f32
    %786 = vector.broadcast %cst_218 : f32 to vector<8x256xf32>
    %787 = arith.cmpf oge, %1, %786 : vector<8x256xf32>
    %cst_219 = arith.constant 1.300000e+01 : f32
    %788 = vector.broadcast %cst_219 : f32 to vector<8x256xf32>
    %789 = arith.cmpf ole, %1, %788 : vector<8x256xf32>
    %790 = arith.andi %787, %789 : vector<8x256xi1>
    %cst_220 = arith.constant -2.000000e+00 : f32
    %791 = vector.broadcast %cst_220 : f32 to vector<8x256xf32>
    %792 = arith.cmpf oge, %2, %791 : vector<8x256xf32>
    %cst_221 = arith.constant 1.300000e+01 : f32
    %793 = vector.broadcast %cst_221 : f32 to vector<8x256xf32>
    %794 = arith.cmpf ole, %2, %793 : vector<8x256xf32>
    %795 = arith.andi %792, %794 : vector<8x256xi1>
    %796 = arith.andi %790, %795 : vector<8x256xi1>
    %c222_i32 = arith.constant 222 : i32
    %797 = tpu.dynamic_rotate %161 by %c222_i32 dim 1 : vector<8x256xf32>, i32 -> vector<8x256xf32>
    %cst_222 = arith.constant 0.000000e+00 : f32
    %798 = vector.broadcast %cst_222 : f32 to vector<8x256xf32>
    %799 = arith.select %796, %797, %798 : vector<8x256xi1>, vector<8x256xf32>
    %800 = vector.extract_strided_slice %432 {offsets = [4, 4, 0, 0], sizes = [1, 1, 8, 1], strides = [1, 1, 1, 1]} : vector<5x5x8x1xf32> to vector<1x1x8x1xf32>
    %801 = vector.shape_cast %800 : vector<1x1x8x1xf32> to vector<8x1xf32>
    %802 = vector.broadcast %801 : vector<8x1xf32> to vector<8x256xf32>
    %803 = arith.mulf %799, %802 : vector<8x256xf32>
    %804 = arith.addf %785, %803 : vector<8x256xf32>
    %c0_223 = arith.constant 0 : index
    %c0_224 = arith.constant 0 : index
    %c0_225 = arith.constant 0 : index
    %805 = vector.load %arg11[%c0_223, %c0_224, %c0_225] : memref<7x8x1xf32, #tpu.memory_space<vmem>>, vector<7x8x1xf32>
    %c5_i32_226 = arith.constant 5 : i32
    %806 = tpu.dynamic_rotate %804 by %c5_i32_226 dim 0 : vector<8x256xf32>, i32 -> vector<8x256xf32>
    %807 = vector.extract_strided_slice %805 {offsets = [0, 0, 0], sizes = [1, 8, 1], strides = [1, 1, 1]} : vector<7x8x1xf32> to vector<1x8x1xf32>
    %808 = vector.shape_cast %807 : vector<1x8x1xf32> to vector<8x1xf32>
    %809 = vector.broadcast %808 : vector<8x1xf32> to vector<8x256xf32>
    %810 = arith.mulf %806, %809 : vector<8x256xf32>
    %c6_i32_227 = arith.constant 6 : i32
    %811 = tpu.dynamic_rotate %804 by %c6_i32_227 dim 0 : vector<8x256xf32>, i32 -> vector<8x256xf32>
    %812 = vector.extract_strided_slice %805 {offsets = [1, 0, 0], sizes = [1, 8, 1], strides = [1, 1, 1]} : vector<7x8x1xf32> to vector<1x8x1xf32>
    %813 = vector.shape_cast %812 : vector<1x8x1xf32> to vector<8x1xf32>
    %814 = vector.broadcast %813 : vector<8x1xf32> to vector<8x256xf32>
    %815 = arith.mulf %811, %814 : vector<8x256xf32>
    %816 = arith.addf %810, %815 : vector<8x256xf32>
    %c7_i32_228 = arith.constant 7 : i32
    %817 = tpu.dynamic_rotate %804 by %c7_i32_228 dim 0 : vector<8x256xf32>, i32 -> vector<8x256xf32>
    %818 = vector.extract_strided_slice %805 {offsets = [2, 0, 0], sizes = [1, 8, 1], strides = [1, 1, 1]} : vector<7x8x1xf32> to vector<1x8x1xf32>
    %819 = vector.shape_cast %818 : vector<1x8x1xf32> to vector<8x1xf32>
    %820 = vector.broadcast %819 : vector<8x1xf32> to vector<8x256xf32>
    %821 = arith.mulf %817, %820 : vector<8x256xf32>
    %822 = arith.addf %816, %821 : vector<8x256xf32>
    %823 = vector.extract_strided_slice %805 {offsets = [3, 0, 0], sizes = [1, 8, 1], strides = [1, 1, 1]} : vector<7x8x1xf32> to vector<1x8x1xf32>
    %824 = vector.shape_cast %823 : vector<1x8x1xf32> to vector<8x1xf32>
    %825 = vector.broadcast %824 : vector<8x1xf32> to vector<8x256xf32>
    %826 = arith.mulf %804, %825 : vector<8x256xf32>
    %827 = arith.addf %822, %826 : vector<8x256xf32>
    %c1_i32_229 = arith.constant 1 : i32
    %828 = tpu.dynamic_rotate %804 by %c1_i32_229 dim 0 : vector<8x256xf32>, i32 -> vector<8x256xf32>
    %829 = vector.extract_strided_slice %805 {offsets = [4, 0, 0], sizes = [1, 8, 1], strides = [1, 1, 1]} : vector<7x8x1xf32> to vector<1x8x1xf32>
    %830 = vector.shape_cast %829 : vector<1x8x1xf32> to vector<8x1xf32>
    %831 = vector.broadcast %830 : vector<8x1xf32> to vector<8x256xf32>
    %832 = arith.mulf %828, %831 : vector<8x256xf32>
    %833 = arith.addf %827, %832 : vector<8x256xf32>
    %c2_i32_230 = arith.constant 2 : i32
    %834 = tpu.dynamic_rotate %804 by %c2_i32_230 dim 0 : vector<8x256xf32>, i32 -> vector<8x256xf32>
    %835 = vector.extract_strided_slice %805 {offsets = [5, 0, 0], sizes = [1, 8, 1], strides = [1, 1, 1]} : vector<7x8x1xf32> to vector<1x8x1xf32>
    %836 = vector.shape_cast %835 : vector<1x8x1xf32> to vector<8x1xf32>
    %837 = vector.broadcast %836 : vector<8x1xf32> to vector<8x256xf32>
    %838 = arith.mulf %834, %837 : vector<8x256xf32>
    %839 = arith.addf %833, %838 : vector<8x256xf32>
    %c3_i32_231 = arith.constant 3 : i32
    %840 = tpu.dynamic_rotate %804 by %c3_i32_231 dim 0 : vector<8x256xf32>, i32 -> vector<8x256xf32>
    %841 = vector.extract_strided_slice %805 {offsets = [6, 0, 0], sizes = [1, 8, 1], strides = [1, 1, 1]} : vector<7x8x1xf32> to vector<1x8x1xf32>
    %842 = vector.shape_cast %841 : vector<1x8x1xf32> to vector<8x1xf32>
    %843 = vector.broadcast %842 : vector<8x1xf32> to vector<8x256xf32>
    %844 = arith.mulf %840, %843 : vector<8x256xf32>
    %845 = arith.addf %839, %844 : vector<8x256xf32>
    %846 = arith.mulf %845, %845 : vector<8x256xf32>
    %c4_i32_232 = arith.constant 4 : i32
    %847 = tpu.dynamic_rotate %845 by %c4_i32_232 dim 0 : vector<8x256xf32>, i32 -> vector<8x256xf32>
    %848 = arith.addf %845, %847 : vector<8x256xf32>
    %c4_i32_233 = arith.constant 4 : i32
    %849 = tpu.dynamic_rotate %846 by %c4_i32_233 dim 0 : vector<8x256xf32>, i32 -> vector<8x256xf32>
    %850 = arith.addf %846, %849 : vector<8x256xf32>
    %cst_234 = arith.constant dense<0.000000e+00> : vector<8xf32>
    %851 = vector.multi_reduction <add>, %848, %cst_234 [1] : vector<8x256xf32> to vector<8xf32>
    %852 = vector.shape_cast %851 : vector<8xf32> to vector<8x1xf32>
    %cst_235 = arith.constant dense<0.000000e+00> : vector<8xf32>
    %853 = vector.multi_reduction <add>, %850, %cst_235 [1] : vector<8x256xf32> to vector<8xf32>
    %854 = vector.shape_cast %853 : vector<8xf32> to vector<8x1xf32>
    %cst_236 = arith.constant 0.001953125 : f32
    %855 = vector.broadcast %cst_236 : f32 to vector<8x1xf32>
    %856 = arith.mulf %852, %855 : vector<8x1xf32>
    %cst_237 = arith.constant 0.001953125 : f32
    %857 = vector.broadcast %cst_237 : f32 to vector<8x1xf32>
    %858 = arith.mulf %854, %857 : vector<8x1xf32>
    %859 = arith.mulf %856, %856 : vector<8x1xf32>
    %860 = arith.subf %858, %859 : vector<8x1xf32>
    %861 = vector.broadcast %856 : vector<8x1xf32> to vector<8x256xf32>
    %862 = arith.subf %845, %861 : vector<8x256xf32>
    %cst_238 = arith.constant 9.99999974E-6 : f32
    %863 = vector.broadcast %cst_238 : f32 to vector<8x1xf32>
    %864 = arith.addf %860, %863 : vector<8x1xf32>
    %865 = math.rsqrt %864 : vector<8x1xf32>
    %866 = vector.broadcast %865 : vector<8x1xf32> to vector<8x256xf32>
    %867 = arith.mulf %862, %866 : vector<8x256xf32>
    %cst_239 = arith.constant 0.000000e+00 : f32
    %868 = vector.broadcast %cst_239 : f32 to vector<8x256xf32>
    %869 = arith.maximumf %867, %868 : vector<8x256xf32>
    %c0_240 = arith.constant 0 : index
    %c0_241 = arith.constant 0 : index
    %c0_242 = arith.constant 0 : index
    %c0_243 = arith.constant 0 : index
    %870 = vector.load %arg12[%c0_240, %c0_241, %c0_242, %c0_243] : memref<5x5x8x1xf32, #tpu.memory_space<vmem>>, vector<5x5x8x1xf32>
    %c34_i32_244 = arith.constant 34 : i32
    %871 = tpu.dynamic_rotate %869 by %c34_i32_244 dim 1 : vector<8x256xf32>, i32 -> vector<8x256xf32>
    %cst_245 = arith.constant 0.000000e+00 : f32
    %872 = vector.broadcast %cst_245 : f32 to vector<8x256xf32>
    %873 = arith.select %443, %871, %872 : vector<8x256xi1>, vector<8x256xf32>
    %874 = vector.extract_strided_slice %870 {offsets = [0, 0, 0, 0], sizes = [1, 1, 8, 1], strides = [1, 1, 1, 1]} : vector<5x5x8x1xf32> to vector<1x1x8x1xf32>
    %875 = vector.shape_cast %874 : vector<1x1x8x1xf32> to vector<8x1xf32>
    %876 = vector.broadcast %875 : vector<8x1xf32> to vector<8x256xf32>
    %877 = arith.mulf %873, %876 : vector<8x256xf32>
    %c33_i32_246 = arith.constant 33 : i32
    %878 = tpu.dynamic_rotate %869 by %c33_i32_246 dim 1 : vector<8x256xf32>, i32 -> vector<8x256xf32>
    %cst_247 = arith.constant 0.000000e+00 : f32
    %879 = vector.broadcast %cst_247 : f32 to vector<8x256xf32>
    %880 = arith.select %461, %878, %879 : vector<8x256xi1>, vector<8x256xf32>
    %881 = vector.extract_strided_slice %870 {offsets = [0, 1, 0, 0], sizes = [1, 1, 8, 1], strides = [1, 1, 1, 1]} : vector<5x5x8x1xf32> to vector<1x1x8x1xf32>
    %882 = vector.shape_cast %881 : vector<1x1x8x1xf32> to vector<8x1xf32>
    %883 = vector.broadcast %882 : vector<8x1xf32> to vector<8x256xf32>
    %884 = arith.mulf %880, %883 : vector<8x256xf32>
    %885 = arith.addf %877, %884 : vector<8x256xf32>
    %c32_i32_248 = arith.constant 32 : i32
    %886 = tpu.dynamic_rotate %869 by %c32_i32_248 dim 1 : vector<8x256xf32>, i32 -> vector<8x256xf32>
    %cst_249 = arith.constant 0.000000e+00 : f32
    %887 = vector.broadcast %cst_249 : f32 to vector<8x256xf32>
    %888 = arith.select %480, %886, %887 : vector<8x256xi1>, vector<8x256xf32>
    %889 = vector.extract_strided_slice %870 {offsets = [0, 2, 0, 0], sizes = [1, 1, 8, 1], strides = [1, 1, 1, 1]} : vector<5x5x8x1xf32> to vector<1x1x8x1xf32>
    %890 = vector.shape_cast %889 : vector<1x1x8x1xf32> to vector<8x1xf32>
    %891 = vector.broadcast %890 : vector<8x1xf32> to vector<8x256xf32>
    %892 = arith.mulf %888, %891 : vector<8x256xf32>
    %893 = arith.addf %885, %892 : vector<8x256xf32>
    %c31_i32_250 = arith.constant 31 : i32
    %894 = tpu.dynamic_rotate %869 by %c31_i32_250 dim 1 : vector<8x256xf32>, i32 -> vector<8x256xf32>
    %cst_251 = arith.constant 0.000000e+00 : f32
    %895 = vector.broadcast %cst_251 : f32 to vector<8x256xf32>
    %896 = arith.select %499, %894, %895 : vector<8x256xi1>, vector<8x256xf32>
    %897 = vector.extract_strided_slice %870 {offsets = [0, 3, 0, 0], sizes = [1, 1, 8, 1], strides = [1, 1, 1, 1]} : vector<5x5x8x1xf32> to vector<1x1x8x1xf32>
    %898 = vector.shape_cast %897 : vector<1x1x8x1xf32> to vector<8x1xf32>
    %899 = vector.broadcast %898 : vector<8x1xf32> to vector<8x256xf32>
    %900 = arith.mulf %896, %899 : vector<8x256xf32>
    %901 = arith.addf %893, %900 : vector<8x256xf32>
    %c30_i32_252 = arith.constant 30 : i32
    %902 = tpu.dynamic_rotate %869 by %c30_i32_252 dim 1 : vector<8x256xf32>, i32 -> vector<8x256xf32>
    %cst_253 = arith.constant 0.000000e+00 : f32
    %903 = vector.broadcast %cst_253 : f32 to vector<8x256xf32>
    %904 = arith.select %518, %902, %903 : vector<8x256xi1>, vector<8x256xf32>
    %905 = vector.extract_strided_slice %870 {offsets = [0, 4, 0, 0], sizes = [1, 1, 8, 1], strides = [1, 1, 1, 1]} : vector<5x5x8x1xf32> to vector<1x1x8x1xf32>
    %906 = vector.shape_cast %905 : vector<1x1x8x1xf32> to vector<8x1xf32>
    %907 = vector.broadcast %906 : vector<8x1xf32> to vector<8x256xf32>
    %908 = arith.mulf %904, %907 : vector<8x256xf32>
    %909 = arith.addf %901, %908 : vector<8x256xf32>
    %c18_i32_254 = arith.constant 18 : i32
    %910 = tpu.dynamic_rotate %869 by %c18_i32_254 dim 1 : vector<8x256xf32>, i32 -> vector<8x256xf32>
    %cst_255 = arith.constant 0.000000e+00 : f32
    %911 = vector.broadcast %cst_255 : f32 to vector<8x256xf32>
    %912 = arith.select %537, %910, %911 : vector<8x256xi1>, vector<8x256xf32>
    %913 = vector.extract_strided_slice %870 {offsets = [1, 0, 0, 0], sizes = [1, 1, 8, 1], strides = [1, 1, 1, 1]} : vector<5x5x8x1xf32> to vector<1x1x8x1xf32>
    %914 = vector.shape_cast %913 : vector<1x1x8x1xf32> to vector<8x1xf32>
    %915 = vector.broadcast %914 : vector<8x1xf32> to vector<8x256xf32>
    %916 = arith.mulf %912, %915 : vector<8x256xf32>
    %917 = arith.addf %909, %916 : vector<8x256xf32>
    %c17_i32_256 = arith.constant 17 : i32
    %918 = tpu.dynamic_rotate %869 by %c17_i32_256 dim 1 : vector<8x256xf32>, i32 -> vector<8x256xf32>
    %cst_257 = arith.constant 0.000000e+00 : f32
    %919 = vector.broadcast %cst_257 : f32 to vector<8x256xf32>
    %920 = arith.select %17, %918, %919 : vector<8x256xi1>, vector<8x256xf32>
    %921 = vector.extract_strided_slice %870 {offsets = [1, 1, 0, 0], sizes = [1, 1, 8, 1], strides = [1, 1, 1, 1]} : vector<5x5x8x1xf32> to vector<1x1x8x1xf32>
    %922 = vector.shape_cast %921 : vector<1x1x8x1xf32> to vector<8x1xf32>
    %923 = vector.broadcast %922 : vector<8x1xf32> to vector<8x256xf32>
    %924 = arith.mulf %920, %923 : vector<8x256xf32>
    %925 = arith.addf %917, %924 : vector<8x256xf32>
    %c16_i32_258 = arith.constant 16 : i32
    %926 = tpu.dynamic_rotate %869 by %c16_i32_258 dim 1 : vector<8x256xf32>, i32 -> vector<8x256xf32>
    %cst_259 = arith.constant 0.000000e+00 : f32
    %927 = vector.broadcast %cst_259 : f32 to vector<8x256xf32>
    %928 = arith.select %35, %926, %927 : vector<8x256xi1>, vector<8x256xf32>
    %929 = vector.extract_strided_slice %870 {offsets = [1, 2, 0, 0], sizes = [1, 1, 8, 1], strides = [1, 1, 1, 1]} : vector<5x5x8x1xf32> to vector<1x1x8x1xf32>
    %930 = vector.shape_cast %929 : vector<1x1x8x1xf32> to vector<8x1xf32>
    %931 = vector.broadcast %930 : vector<8x1xf32> to vector<8x256xf32>
    %932 = arith.mulf %928, %931 : vector<8x256xf32>
    %933 = arith.addf %925, %932 : vector<8x256xf32>
    %c15_i32_260 = arith.constant 15 : i32
    %934 = tpu.dynamic_rotate %869 by %c15_i32_260 dim 1 : vector<8x256xf32>, i32 -> vector<8x256xf32>
    %cst_261 = arith.constant 0.000000e+00 : f32
    %935 = vector.broadcast %cst_261 : f32 to vector<8x256xf32>
    %936 = arith.select %53, %934, %935 : vector<8x256xi1>, vector<8x256xf32>
    %937 = vector.extract_strided_slice %870 {offsets = [1, 3, 0, 0], sizes = [1, 1, 8, 1], strides = [1, 1, 1, 1]} : vector<5x5x8x1xf32> to vector<1x1x8x1xf32>
    %938 = vector.shape_cast %937 : vector<1x1x8x1xf32> to vector<8x1xf32>
    %939 = vector.broadcast %938 : vector<8x1xf32> to vector<8x256xf32>
    %940 = arith.mulf %936, %939 : vector<8x256xf32>
    %941 = arith.addf %933, %940 : vector<8x256xf32>
    %c14_i32_262 = arith.constant 14 : i32
    %942 = tpu.dynamic_rotate %869 by %c14_i32_262 dim 1 : vector<8x256xf32>, i32 -> vector<8x256xf32>
    %cst_263 = arith.constant 0.000000e+00 : f32
    %943 = vector.broadcast %cst_263 : f32 to vector<8x256xf32>
    %944 = arith.select %580, %942, %943 : vector<8x256xi1>, vector<8x256xf32>
    %945 = vector.extract_strided_slice %870 {offsets = [1, 4, 0, 0], sizes = [1, 1, 8, 1], strides = [1, 1, 1, 1]} : vector<5x5x8x1xf32> to vector<1x1x8x1xf32>
    %946 = vector.shape_cast %945 : vector<1x1x8x1xf32> to vector<8x1xf32>
    %947 = vector.broadcast %946 : vector<8x1xf32> to vector<8x256xf32>
    %948 = arith.mulf %944, %947 : vector<8x256xf32>
    %949 = arith.addf %941, %948 : vector<8x256xf32>
    %c2_i32_264 = arith.constant 2 : i32
    %950 = tpu.dynamic_rotate %869 by %c2_i32_264 dim 1 : vector<8x256xf32>, i32 -> vector<8x256xf32>
    %cst_265 = arith.constant 0.000000e+00 : f32
    %951 = vector.broadcast %cst_265 : f32 to vector<8x256xf32>
    %952 = arith.select %599, %950, %951 : vector<8x256xi1>, vector<8x256xf32>
    %953 = vector.extract_strided_slice %870 {offsets = [2, 0, 0, 0], sizes = [1, 1, 8, 1], strides = [1, 1, 1, 1]} : vector<5x5x8x1xf32> to vector<1x1x8x1xf32>
    %954 = vector.shape_cast %953 : vector<1x1x8x1xf32> to vector<8x1xf32>
    %955 = vector.broadcast %954 : vector<8x1xf32> to vector<8x256xf32>
    %956 = arith.mulf %952, %955 : vector<8x256xf32>
    %957 = arith.addf %949, %956 : vector<8x256xf32>
    %c1_i32_266 = arith.constant 1 : i32
    %958 = tpu.dynamic_rotate %869 by %c1_i32_266 dim 1 : vector<8x256xf32>, i32 -> vector<8x256xf32>
    %cst_267 = arith.constant 0.000000e+00 : f32
    %959 = vector.broadcast %cst_267 : f32 to vector<8x256xf32>
    %960 = arith.select %71, %958, %959 : vector<8x256xi1>, vector<8x256xf32>
    %961 = vector.extract_strided_slice %870 {offsets = [2, 1, 0, 0], sizes = [1, 1, 8, 1], strides = [1, 1, 1, 1]} : vector<5x5x8x1xf32> to vector<1x1x8x1xf32>
    %962 = vector.shape_cast %961 : vector<1x1x8x1xf32> to vector<8x1xf32>
    %963 = vector.broadcast %962 : vector<8x1xf32> to vector<8x256xf32>
    %964 = arith.mulf %960, %963 : vector<8x256xf32>
    %965 = arith.addf %957, %964 : vector<8x256xf32>
    %966 = vector.extract_strided_slice %870 {offsets = [2, 2, 0, 0], sizes = [1, 1, 8, 1], strides = [1, 1, 1, 1]} : vector<5x5x8x1xf32> to vector<1x1x8x1xf32>
    %967 = vector.shape_cast %966 : vector<1x1x8x1xf32> to vector<8x1xf32>
    %968 = vector.broadcast %967 : vector<8x1xf32> to vector<8x256xf32>
    %969 = arith.mulf %869, %968 : vector<8x256xf32>
    %970 = arith.addf %965, %969 : vector<8x256xf32>
    %c255_i32_268 = arith.constant 255 : i32
    %971 = tpu.dynamic_rotate %869 by %c255_i32_268 dim 1 : vector<8x256xf32>, i32 -> vector<8x256xf32>
    %cst_269 = arith.constant 0.000000e+00 : f32
    %972 = vector.broadcast %cst_269 : f32 to vector<8x256xf32>
    %973 = arith.select %89, %971, %972 : vector<8x256xi1>, vector<8x256xf32>
    %974 = vector.extract_strided_slice %870 {offsets = [2, 3, 0, 0], sizes = [1, 1, 8, 1], strides = [1, 1, 1, 1]} : vector<5x5x8x1xf32> to vector<1x1x8x1xf32>
    %975 = vector.shape_cast %974 : vector<1x1x8x1xf32> to vector<8x1xf32>
    %976 = vector.broadcast %975 : vector<8x1xf32> to vector<8x256xf32>
    %977 = arith.mulf %973, %976 : vector<8x256xf32>
    %978 = arith.addf %970, %977 : vector<8x256xf32>
    %c254_i32_270 = arith.constant 254 : i32
    %979 = tpu.dynamic_rotate %869 by %c254_i32_270 dim 1 : vector<8x256xf32>, i32 -> vector<8x256xf32>
    %cst_271 = arith.constant 0.000000e+00 : f32
    %980 = vector.broadcast %cst_271 : f32 to vector<8x256xf32>
    %981 = arith.select %639, %979, %980 : vector<8x256xi1>, vector<8x256xf32>
    %982 = vector.extract_strided_slice %870 {offsets = [2, 4, 0, 0], sizes = [1, 1, 8, 1], strides = [1, 1, 1, 1]} : vector<5x5x8x1xf32> to vector<1x1x8x1xf32>
    %983 = vector.shape_cast %982 : vector<1x1x8x1xf32> to vector<8x1xf32>
    %984 = vector.broadcast %983 : vector<8x1xf32> to vector<8x256xf32>
    %985 = arith.mulf %981, %984 : vector<8x256xf32>
    %986 = arith.addf %978, %985 : vector<8x256xf32>
    %c242_i32_272 = arith.constant 242 : i32
    %987 = tpu.dynamic_rotate %869 by %c242_i32_272 dim 1 : vector<8x256xf32>, i32 -> vector<8x256xf32>
    %cst_273 = arith.constant 0.000000e+00 : f32
    %988 = vector.broadcast %cst_273 : f32 to vector<8x256xf32>
    %989 = arith.select %658, %987, %988 : vector<8x256xi1>, vector<8x256xf32>
    %990 = vector.extract_strided_slice %870 {offsets = [3, 0, 0, 0], sizes = [1, 1, 8, 1], strides = [1, 1, 1, 1]} : vector<5x5x8x1xf32> to vector<1x1x8x1xf32>
    %991 = vector.shape_cast %990 : vector<1x1x8x1xf32> to vector<8x1xf32>
    %992 = vector.broadcast %991 : vector<8x1xf32> to vector<8x256xf32>
    %993 = arith.mulf %989, %992 : vector<8x256xf32>
    %994 = arith.addf %986, %993 : vector<8x256xf32>
    %c241_i32_274 = arith.constant 241 : i32
    %995 = tpu.dynamic_rotate %869 by %c241_i32_274 dim 1 : vector<8x256xf32>, i32 -> vector<8x256xf32>
    %cst_275 = arith.constant 0.000000e+00 : f32
    %996 = vector.broadcast %cst_275 : f32 to vector<8x256xf32>
    %997 = arith.select %107, %995, %996 : vector<8x256xi1>, vector<8x256xf32>
    %998 = vector.extract_strided_slice %870 {offsets = [3, 1, 0, 0], sizes = [1, 1, 8, 1], strides = [1, 1, 1, 1]} : vector<5x5x8x1xf32> to vector<1x1x8x1xf32>
    %999 = vector.shape_cast %998 : vector<1x1x8x1xf32> to vector<8x1xf32>
    %1000 = vector.broadcast %999 : vector<8x1xf32> to vector<8x256xf32>
    %1001 = arith.mulf %997, %1000 : vector<8x256xf32>
    %1002 = arith.addf %994, %1001 : vector<8x256xf32>
    %c240_i32_276 = arith.constant 240 : i32
    %1003 = tpu.dynamic_rotate %869 by %c240_i32_276 dim 1 : vector<8x256xf32>, i32 -> vector<8x256xf32>
    %cst_277 = arith.constant 0.000000e+00 : f32
    %1004 = vector.broadcast %cst_277 : f32 to vector<8x256xf32>
    %1005 = arith.select %125, %1003, %1004 : vector<8x256xi1>, vector<8x256xf32>
    %1006 = vector.extract_strided_slice %870 {offsets = [3, 2, 0, 0], sizes = [1, 1, 8, 1], strides = [1, 1, 1, 1]} : vector<5x5x8x1xf32> to vector<1x1x8x1xf32>
    %1007 = vector.shape_cast %1006 : vector<1x1x8x1xf32> to vector<8x1xf32>
    %1008 = vector.broadcast %1007 : vector<8x1xf32> to vector<8x256xf32>
    %1009 = arith.mulf %1005, %1008 : vector<8x256xf32>
    %1010 = arith.addf %1002, %1009 : vector<8x256xf32>
    %c239_i32_278 = arith.constant 239 : i32
    %1011 = tpu.dynamic_rotate %869 by %c239_i32_278 dim 1 : vector<8x256xf32>, i32 -> vector<8x256xf32>
    %cst_279 = arith.constant 0.000000e+00 : f32
    %1012 = vector.broadcast %cst_279 : f32 to vector<8x256xf32>
    %1013 = arith.select %143, %1011, %1012 : vector<8x256xi1>, vector<8x256xf32>
    %1014 = vector.extract_strided_slice %870 {offsets = [3, 3, 0, 0], sizes = [1, 1, 8, 1], strides = [1, 1, 1, 1]} : vector<5x5x8x1xf32> to vector<1x1x8x1xf32>
    %1015 = vector.shape_cast %1014 : vector<1x1x8x1xf32> to vector<8x1xf32>
    %1016 = vector.broadcast %1015 : vector<8x1xf32> to vector<8x256xf32>
    %1017 = arith.mulf %1013, %1016 : vector<8x256xf32>
    %1018 = arith.addf %1010, %1017 : vector<8x256xf32>
    %c238_i32_280 = arith.constant 238 : i32
    %1019 = tpu.dynamic_rotate %869 by %c238_i32_280 dim 1 : vector<8x256xf32>, i32 -> vector<8x256xf32>
    %cst_281 = arith.constant 0.000000e+00 : f32
    %1020 = vector.broadcast %cst_281 : f32 to vector<8x256xf32>
    %1021 = arith.select %701, %1019, %1020 : vector<8x256xi1>, vector<8x256xf32>
    %1022 = vector.extract_strided_slice %870 {offsets = [3, 4, 0, 0], sizes = [1, 1, 8, 1], strides = [1, 1, 1, 1]} : vector<5x5x8x1xf32> to vector<1x1x8x1xf32>
    %1023 = vector.shape_cast %1022 : vector<1x1x8x1xf32> to vector<8x1xf32>
    %1024 = vector.broadcast %1023 : vector<8x1xf32> to vector<8x256xf32>
    %1025 = arith.mulf %1021, %1024 : vector<8x256xf32>
    %1026 = arith.addf %1018, %1025 : vector<8x256xf32>
    %c226_i32_282 = arith.constant 226 : i32
    %1027 = tpu.dynamic_rotate %869 by %c226_i32_282 dim 1 : vector<8x256xf32>, i32 -> vector<8x256xf32>
    %cst_283 = arith.constant 0.000000e+00 : f32
    %1028 = vector.broadcast %cst_283 : f32 to vector<8x256xf32>
    %1029 = arith.select %720, %1027, %1028 : vector<8x256xi1>, vector<8x256xf32>
    %1030 = vector.extract_strided_slice %870 {offsets = [4, 0, 0, 0], sizes = [1, 1, 8, 1], strides = [1, 1, 1, 1]} : vector<5x5x8x1xf32> to vector<1x1x8x1xf32>
    %1031 = vector.shape_cast %1030 : vector<1x1x8x1xf32> to vector<8x1xf32>
    %1032 = vector.broadcast %1031 : vector<8x1xf32> to vector<8x256xf32>
    %1033 = arith.mulf %1029, %1032 : vector<8x256xf32>
    %1034 = arith.addf %1026, %1033 : vector<8x256xf32>
    %c225_i32_284 = arith.constant 225 : i32
    %1035 = tpu.dynamic_rotate %869 by %c225_i32_284 dim 1 : vector<8x256xf32>, i32 -> vector<8x256xf32>
    %cst_285 = arith.constant 0.000000e+00 : f32
    %1036 = vector.broadcast %cst_285 : f32 to vector<8x256xf32>
    %1037 = arith.select %739, %1035, %1036 : vector<8x256xi1>, vector<8x256xf32>
    %1038 = vector.extract_strided_slice %870 {offsets = [4, 1, 0, 0], sizes = [1, 1, 8, 1], strides = [1, 1, 1, 1]} : vector<5x5x8x1xf32> to vector<1x1x8x1xf32>
    %1039 = vector.shape_cast %1038 : vector<1x1x8x1xf32> to vector<8x1xf32>
    %1040 = vector.broadcast %1039 : vector<8x1xf32> to vector<8x256xf32>
    %1041 = arith.mulf %1037, %1040 : vector<8x256xf32>
    %1042 = arith.addf %1034, %1041 : vector<8x256xf32>
    %c224_i32_286 = arith.constant 224 : i32
    %1043 = tpu.dynamic_rotate %869 by %c224_i32_286 dim 1 : vector<8x256xf32>, i32 -> vector<8x256xf32>
    %cst_287 = arith.constant 0.000000e+00 : f32
    %1044 = vector.broadcast %cst_287 : f32 to vector<8x256xf32>
    %1045 = arith.select %758, %1043, %1044 : vector<8x256xi1>, vector<8x256xf32>
    %1046 = vector.extract_strided_slice %870 {offsets = [4, 2, 0, 0], sizes = [1, 1, 8, 1], strides = [1, 1, 1, 1]} : vector<5x5x8x1xf32> to vector<1x1x8x1xf32>
    %1047 = vector.shape_cast %1046 : vector<1x1x8x1xf32> to vector<8x1xf32>
    %1048 = vector.broadcast %1047 : vector<8x1xf32> to vector<8x256xf32>
    %1049 = arith.mulf %1045, %1048 : vector<8x256xf32>
    %1050 = arith.addf %1042, %1049 : vector<8x256xf32>
    %c223_i32_288 = arith.constant 223 : i32
    %1051 = tpu.dynamic_rotate %869 by %c223_i32_288 dim 1 : vector<8x256xf32>, i32 -> vector<8x256xf32>
    %cst_289 = arith.constant 0.000000e+00 : f32
    %1052 = vector.broadcast %cst_289 : f32 to vector<8x256xf32>
    %1053 = arith.select %777, %1051, %1052 : vector<8x256xi1>, vector<8x256xf32>
    %1054 = vector.extract_strided_slice %870 {offsets = [4, 3, 0, 0], sizes = [1, 1, 8, 1], strides = [1, 1, 1, 1]} : vector<5x5x8x1xf32> to vector<1x1x8x1xf32>
    %1055 = vector.shape_cast %1054 : vector<1x1x8x1xf32> to vector<8x1xf32>
    %1056 = vector.broadcast %1055 : vector<8x1xf32> to vector<8x256xf32>
    %1057 = arith.mulf %1053, %1056 : vector<8x256xf32>
    %1058 = arith.addf %1050, %1057 : vector<8x256xf32>
    %c222_i32_290 = arith.constant 222 : i32
    %1059 = tpu.dynamic_rotate %869 by %c222_i32_290 dim 1 : vector<8x256xf32>, i32 -> vector<8x256xf32>
    %cst_291 = arith.constant 0.000000e+00 : f32
    %1060 = vector.broadcast %cst_291 : f32 to vector<8x256xf32>
    %1061 = arith.select %796, %1059, %1060 : vector<8x256xi1>, vector<8x256xf32>
    %1062 = vector.extract_strided_slice %870 {offsets = [4, 4, 0, 0], sizes = [1, 1, 8, 1], strides = [1, 1, 1, 1]} : vector<5x5x8x1xf32> to vector<1x1x8x1xf32>
    %1063 = vector.shape_cast %1062 : vector<1x1x8x1xf32> to vector<8x1xf32>
    %1064 = vector.broadcast %1063 : vector<8x1xf32> to vector<8x256xf32>
    %1065 = arith.mulf %1061, %1064 : vector<8x256xf32>
    %1066 = arith.addf %1058, %1065 : vector<8x256xf32>
    %c0_292 = arith.constant 0 : index
    %c0_293 = arith.constant 0 : index
    %c0_294 = arith.constant 0 : index
    %1067 = vector.load %arg13[%c0_292, %c0_293, %c0_294] : memref<7x8x1xf32, #tpu.memory_space<vmem>>, vector<7x8x1xf32>
    %c5_i32_295 = arith.constant 5 : i32
    %1068 = tpu.dynamic_rotate %1066 by %c5_i32_295 dim 0 : vector<8x256xf32>, i32 -> vector<8x256xf32>
    %1069 = vector.extract_strided_slice %1067 {offsets = [0, 0, 0], sizes = [1, 8, 1], strides = [1, 1, 1]} : vector<7x8x1xf32> to vector<1x8x1xf32>
    %1070 = vector.shape_cast %1069 : vector<1x8x1xf32> to vector<8x1xf32>
    %1071 = vector.broadcast %1070 : vector<8x1xf32> to vector<8x256xf32>
    %1072 = arith.mulf %1068, %1071 : vector<8x256xf32>
    %c6_i32_296 = arith.constant 6 : i32
    %1073 = tpu.dynamic_rotate %1066 by %c6_i32_296 dim 0 : vector<8x256xf32>, i32 -> vector<8x256xf32>
    %1074 = vector.extract_strided_slice %1067 {offsets = [1, 0, 0], sizes = [1, 8, 1], strides = [1, 1, 1]} : vector<7x8x1xf32> to vector<1x8x1xf32>
    %1075 = vector.shape_cast %1074 : vector<1x8x1xf32> to vector<8x1xf32>
    %1076 = vector.broadcast %1075 : vector<8x1xf32> to vector<8x256xf32>
    %1077 = arith.mulf %1073, %1076 : vector<8x256xf32>
    %1078 = arith.addf %1072, %1077 : vector<8x256xf32>
    %c7_i32_297 = arith.constant 7 : i32
    %1079 = tpu.dynamic_rotate %1066 by %c7_i32_297 dim 0 : vector<8x256xf32>, i32 -> vector<8x256xf32>
    %1080 = vector.extract_strided_slice %1067 {offsets = [2, 0, 0], sizes = [1, 8, 1], strides = [1, 1, 1]} : vector<7x8x1xf32> to vector<1x8x1xf32>
    %1081 = vector.shape_cast %1080 : vector<1x8x1xf32> to vector<8x1xf32>
    %1082 = vector.broadcast %1081 : vector<8x1xf32> to vector<8x256xf32>
    %1083 = arith.mulf %1079, %1082 : vector<8x256xf32>
    %1084 = arith.addf %1078, %1083 : vector<8x256xf32>
    %1085 = vector.extract_strided_slice %1067 {offsets = [3, 0, 0], sizes = [1, 8, 1], strides = [1, 1, 1]} : vector<7x8x1xf32> to vector<1x8x1xf32>
    %1086 = vector.shape_cast %1085 : vector<1x8x1xf32> to vector<8x1xf32>
    %1087 = vector.broadcast %1086 : vector<8x1xf32> to vector<8x256xf32>
    %1088 = arith.mulf %1066, %1087 : vector<8x256xf32>
    %1089 = arith.addf %1084, %1088 : vector<8x256xf32>
    %c1_i32_298 = arith.constant 1 : i32
    %1090 = tpu.dynamic_rotate %1066 by %c1_i32_298 dim 0 : vector<8x256xf32>, i32 -> vector<8x256xf32>
    %1091 = vector.extract_strided_slice %1067 {offsets = [4, 0, 0], sizes = [1, 8, 1], strides = [1, 1, 1]} : vector<7x8x1xf32> to vector<1x8x1xf32>
    %1092 = vector.shape_cast %1091 : vector<1x8x1xf32> to vector<8x1xf32>
    %1093 = vector.broadcast %1092 : vector<8x1xf32> to vector<8x256xf32>
    %1094 = arith.mulf %1090, %1093 : vector<8x256xf32>
    %1095 = arith.addf %1089, %1094 : vector<8x256xf32>
    %c2_i32_299 = arith.constant 2 : i32
    %1096 = tpu.dynamic_rotate %1066 by %c2_i32_299 dim 0 : vector<8x256xf32>, i32 -> vector<8x256xf32>
    %1097 = vector.extract_strided_slice %1067 {offsets = [5, 0, 0], sizes = [1, 8, 1], strides = [1, 1, 1]} : vector<7x8x1xf32> to vector<1x8x1xf32>
    %1098 = vector.shape_cast %1097 : vector<1x8x1xf32> to vector<8x1xf32>
    %1099 = vector.broadcast %1098 : vector<8x1xf32> to vector<8x256xf32>
    %1100 = arith.mulf %1096, %1099 : vector<8x256xf32>
    %1101 = arith.addf %1095, %1100 : vector<8x256xf32>
    %c3_i32_300 = arith.constant 3 : i32
    %1102 = tpu.dynamic_rotate %1066 by %c3_i32_300 dim 0 : vector<8x256xf32>, i32 -> vector<8x256xf32>
    %1103 = vector.extract_strided_slice %1067 {offsets = [6, 0, 0], sizes = [1, 8, 1], strides = [1, 1, 1]} : vector<7x8x1xf32> to vector<1x8x1xf32>
    %1104 = vector.shape_cast %1103 : vector<1x8x1xf32> to vector<8x1xf32>
    %1105 = vector.broadcast %1104 : vector<8x1xf32> to vector<8x256xf32>
    %1106 = arith.mulf %1102, %1105 : vector<8x256xf32>
    %1107 = arith.addf %1101, %1106 : vector<8x256xf32>
    %1108 = arith.mulf %1107, %1107 : vector<8x256xf32>
    %c4_i32_301 = arith.constant 4 : i32
    %1109 = tpu.dynamic_rotate %1107 by %c4_i32_301 dim 0 : vector<8x256xf32>, i32 -> vector<8x256xf32>
    %1110 = arith.addf %1107, %1109 : vector<8x256xf32>
    %c4_i32_302 = arith.constant 4 : i32
    %1111 = tpu.dynamic_rotate %1108 by %c4_i32_302 dim 0 : vector<8x256xf32>, i32 -> vector<8x256xf32>
    %1112 = arith.addf %1108, %1111 : vector<8x256xf32>
    %cst_303 = arith.constant dense<0.000000e+00> : vector<8xf32>
    %1113 = vector.multi_reduction <add>, %1110, %cst_303 [1] : vector<8x256xf32> to vector<8xf32>
    %1114 = vector.shape_cast %1113 : vector<8xf32> to vector<8x1xf32>
    %cst_304 = arith.constant dense<0.000000e+00> : vector<8xf32>
    %1115 = vector.multi_reduction <add>, %1112, %cst_304 [1] : vector<8x256xf32> to vector<8xf32>
    %1116 = vector.shape_cast %1115 : vector<8xf32> to vector<8x1xf32>
    %cst_305 = arith.constant 0.001953125 : f32
    %1117 = vector.broadcast %cst_305 : f32 to vector<8x1xf32>
    %1118 = arith.mulf %1114, %1117 : vector<8x1xf32>
    %cst_306 = arith.constant 0.001953125 : f32
    %1119 = vector.broadcast %cst_306 : f32 to vector<8x1xf32>
    %1120 = arith.mulf %1116, %1119 : vector<8x1xf32>
    %1121 = arith.mulf %1118, %1118 : vector<8x1xf32>
    %1122 = arith.subf %1120, %1121 : vector<8x1xf32>
    %1123 = vector.broadcast %1118 : vector<8x1xf32> to vector<8x256xf32>
    %1124 = arith.subf %1107, %1123 : vector<8x256xf32>
    %cst_307 = arith.constant 9.99999974E-6 : f32
    %1125 = vector.broadcast %cst_307 : f32 to vector<8x1xf32>
    %1126 = arith.addf %1122, %1125 : vector<8x1xf32>
    %1127 = math.rsqrt %1126 : vector<8x1xf32>
    %1128 = vector.broadcast %1127 : vector<8x1xf32> to vector<8x256xf32>
    %1129 = arith.mulf %1124, %1128 : vector<8x256xf32>
    %c5 = arith.constant 5 : index
    %1130 = memref.load %arg1[%c5] : memref<8xf32, #tpu.memory_space<smem>>
    %1131 = vector.broadcast %1130 : f32 to vector<8x256xf32>
    %1132 = arith.mulf %1131, %1129 : vector<8x256xf32>
    %1133 = arith.addf %431, %1132 : vector<8x256xf32>
    %c6 = arith.constant 6 : index
    %1134 = memref.load %arg1[%c6] : memref<8xf32, #tpu.memory_space<smem>>
    %c0_308 = arith.constant 0 : index
    %c0_309 = arith.constant 0 : index
    %c0_310 = arith.constant 0 : index
    %c0_311 = arith.constant 0 : index
    %1135 = vector.load %arg14[%c0_308, %c0_309, %c0_310, %c0_311] : memref<3x3x8x1xf32, #tpu.memory_space<vmem>>, vector<3x3x8x1xf32>
    %c34_i32_312 = arith.constant 34 : i32
    %1136 = tpu.dynamic_rotate %161 by %c34_i32_312 dim 1 : vector<8x256xf32>, i32 -> vector<8x256xf32>
    %cst_313 = arith.constant 0.000000e+00 : f32
    %1137 = vector.broadcast %cst_313 : f32 to vector<8x256xf32>
    %1138 = arith.select %443, %1136, %1137 : vector<8x256xi1>, vector<8x256xf32>
    %1139 = vector.extract_strided_slice %1135 {offsets = [0, 0, 0, 0], sizes = [1, 1, 8, 1], strides = [1, 1, 1, 1]} : vector<3x3x8x1xf32> to vector<1x1x8x1xf32>
    %1140 = vector.shape_cast %1139 : vector<1x1x8x1xf32> to vector<8x1xf32>
    %1141 = vector.broadcast %1140 : vector<8x1xf32> to vector<8x256xf32>
    %1142 = arith.mulf %1138, %1141 : vector<8x256xf32>
    %c32_i32_314 = arith.constant 32 : i32
    %1143 = tpu.dynamic_rotate %161 by %c32_i32_314 dim 1 : vector<8x256xf32>, i32 -> vector<8x256xf32>
    %cst_315 = arith.constant 0.000000e+00 : f32
    %1144 = vector.broadcast %cst_315 : f32 to vector<8x256xf32>
    %1145 = arith.select %480, %1143, %1144 : vector<8x256xi1>, vector<8x256xf32>
    %1146 = vector.extract_strided_slice %1135 {offsets = [0, 1, 0, 0], sizes = [1, 1, 8, 1], strides = [1, 1, 1, 1]} : vector<3x3x8x1xf32> to vector<1x1x8x1xf32>
    %1147 = vector.shape_cast %1146 : vector<1x1x8x1xf32> to vector<8x1xf32>
    %1148 = vector.broadcast %1147 : vector<8x1xf32> to vector<8x256xf32>
    %1149 = arith.mulf %1145, %1148 : vector<8x256xf32>
    %1150 = arith.addf %1142, %1149 : vector<8x256xf32>
    %c30_i32_316 = arith.constant 30 : i32
    %1151 = tpu.dynamic_rotate %161 by %c30_i32_316 dim 1 : vector<8x256xf32>, i32 -> vector<8x256xf32>
    %cst_317 = arith.constant 0.000000e+00 : f32
    %1152 = vector.broadcast %cst_317 : f32 to vector<8x256xf32>
    %1153 = arith.select %518, %1151, %1152 : vector<8x256xi1>, vector<8x256xf32>
    %1154 = vector.extract_strided_slice %1135 {offsets = [0, 2, 0, 0], sizes = [1, 1, 8, 1], strides = [1, 1, 1, 1]} : vector<3x3x8x1xf32> to vector<1x1x8x1xf32>
    %1155 = vector.shape_cast %1154 : vector<1x1x8x1xf32> to vector<8x1xf32>
    %1156 = vector.broadcast %1155 : vector<8x1xf32> to vector<8x256xf32>
    %1157 = arith.mulf %1153, %1156 : vector<8x256xf32>
    %1158 = arith.addf %1150, %1157 : vector<8x256xf32>
    %c2_i32_318 = arith.constant 2 : i32
    %1159 = tpu.dynamic_rotate %161 by %c2_i32_318 dim 1 : vector<8x256xf32>, i32 -> vector<8x256xf32>
    %cst_319 = arith.constant 0.000000e+00 : f32
    %1160 = vector.broadcast %cst_319 : f32 to vector<8x256xf32>
    %1161 = arith.select %599, %1159, %1160 : vector<8x256xi1>, vector<8x256xf32>
    %1162 = vector.extract_strided_slice %1135 {offsets = [1, 0, 0, 0], sizes = [1, 1, 8, 1], strides = [1, 1, 1, 1]} : vector<3x3x8x1xf32> to vector<1x1x8x1xf32>
    %1163 = vector.shape_cast %1162 : vector<1x1x8x1xf32> to vector<8x1xf32>
    %1164 = vector.broadcast %1163 : vector<8x1xf32> to vector<8x256xf32>
    %1165 = arith.mulf %1161, %1164 : vector<8x256xf32>
    %1166 = arith.addf %1158, %1165 : vector<8x256xf32>
    %1167 = vector.extract_strided_slice %1135 {offsets = [1, 1, 0, 0], sizes = [1, 1, 8, 1], strides = [1, 1, 1, 1]} : vector<3x3x8x1xf32> to vector<1x1x8x1xf32>
    %1168 = vector.shape_cast %1167 : vector<1x1x8x1xf32> to vector<8x1xf32>
    %1169 = vector.broadcast %1168 : vector<8x1xf32> to vector<8x256xf32>
    %1170 = arith.mulf %161, %1169 : vector<8x256xf32>
    %1171 = arith.addf %1166, %1170 : vector<8x256xf32>
    %c254_i32_320 = arith.constant 254 : i32
    %1172 = tpu.dynamic_rotate %161 by %c254_i32_320 dim 1 : vector<8x256xf32>, i32 -> vector<8x256xf32>
    %cst_321 = arith.constant 0.000000e+00 : f32
    %1173 = vector.broadcast %cst_321 : f32 to vector<8x256xf32>
    %1174 = arith.select %639, %1172, %1173 : vector<8x256xi1>, vector<8x256xf32>
    %1175 = vector.extract_strided_slice %1135 {offsets = [1, 2, 0, 0], sizes = [1, 1, 8, 1], strides = [1, 1, 1, 1]} : vector<3x3x8x1xf32> to vector<1x1x8x1xf32>
    %1176 = vector.shape_cast %1175 : vector<1x1x8x1xf32> to vector<8x1xf32>
    %1177 = vector.broadcast %1176 : vector<8x1xf32> to vector<8x256xf32>
    %1178 = arith.mulf %1174, %1177 : vector<8x256xf32>
    %1179 = arith.addf %1171, %1178 : vector<8x256xf32>
    %c226_i32_322 = arith.constant 226 : i32
    %1180 = tpu.dynamic_rotate %161 by %c226_i32_322 dim 1 : vector<8x256xf32>, i32 -> vector<8x256xf32>
    %cst_323 = arith.constant 0.000000e+00 : f32
    %1181 = vector.broadcast %cst_323 : f32 to vector<8x256xf32>
    %1182 = arith.select %720, %1180, %1181 : vector<8x256xi1>, vector<8x256xf32>
    %1183 = vector.extract_strided_slice %1135 {offsets = [2, 0, 0, 0], sizes = [1, 1, 8, 1], strides = [1, 1, 1, 1]} : vector<3x3x8x1xf32> to vector<1x1x8x1xf32>
    %1184 = vector.shape_cast %1183 : vector<1x1x8x1xf32> to vector<8x1xf32>
    %1185 = vector.broadcast %1184 : vector<8x1xf32> to vector<8x256xf32>
    %1186 = arith.mulf %1182, %1185 : vector<8x256xf32>
    %1187 = arith.addf %1179, %1186 : vector<8x256xf32>
    %c224_i32_324 = arith.constant 224 : i32
    %1188 = tpu.dynamic_rotate %161 by %c224_i32_324 dim 1 : vector<8x256xf32>, i32 -> vector<8x256xf32>
    %cst_325 = arith.constant 0.000000e+00 : f32
    %1189 = vector.broadcast %cst_325 : f32 to vector<8x256xf32>
    %1190 = arith.select %758, %1188, %1189 : vector<8x256xi1>, vector<8x256xf32>
    %1191 = vector.extract_strided_slice %1135 {offsets = [2, 1, 0, 0], sizes = [1, 1, 8, 1], strides = [1, 1, 1, 1]} : vector<3x3x8x1xf32> to vector<1x1x8x1xf32>
    %1192 = vector.shape_cast %1191 : vector<1x1x8x1xf32> to vector<8x1xf32>
    %1193 = vector.broadcast %1192 : vector<8x1xf32> to vector<8x256xf32>
    %1194 = arith.mulf %1190, %1193 : vector<8x256xf32>
    %1195 = arith.addf %1187, %1194 : vector<8x256xf32>
    %c222_i32_326 = arith.constant 222 : i32
    %1196 = tpu.dynamic_rotate %161 by %c222_i32_326 dim 1 : vector<8x256xf32>, i32 -> vector<8x256xf32>
    %cst_327 = arith.constant 0.000000e+00 : f32
    %1197 = vector.broadcast %cst_327 : f32 to vector<8x256xf32>
    %1198 = arith.select %796, %1196, %1197 : vector<8x256xi1>, vector<8x256xf32>
    %1199 = vector.extract_strided_slice %1135 {offsets = [2, 2, 0, 0], sizes = [1, 1, 8, 1], strides = [1, 1, 1, 1]} : vector<3x3x8x1xf32> to vector<1x1x8x1xf32>
    %1200 = vector.shape_cast %1199 : vector<1x1x8x1xf32> to vector<8x1xf32>
    %1201 = vector.broadcast %1200 : vector<8x1xf32> to vector<8x256xf32>
    %1202 = arith.mulf %1198, %1201 : vector<8x256xf32>
    %1203 = arith.addf %1195, %1202 : vector<8x256xf32>
    %c0_328 = arith.constant 0 : index
    %c0_329 = arith.constant 0 : index
    %c0_330 = arith.constant 0 : index
    %1204 = vector.load %arg15[%c0_328, %c0_329, %c0_330] : memref<7x8x1xf32, #tpu.memory_space<vmem>>, vector<7x8x1xf32>
    %c5_i32_331 = arith.constant 5 : i32
    %1205 = tpu.dynamic_rotate %1203 by %c5_i32_331 dim 0 : vector<8x256xf32>, i32 -> vector<8x256xf32>
    %1206 = vector.extract_strided_slice %1204 {offsets = [0, 0, 0], sizes = [1, 8, 1], strides = [1, 1, 1]} : vector<7x8x1xf32> to vector<1x8x1xf32>
    %1207 = vector.shape_cast %1206 : vector<1x8x1xf32> to vector<8x1xf32>
    %1208 = vector.broadcast %1207 : vector<8x1xf32> to vector<8x256xf32>
    %1209 = arith.mulf %1205, %1208 : vector<8x256xf32>
    %c6_i32_332 = arith.constant 6 : i32
    %1210 = tpu.dynamic_rotate %1203 by %c6_i32_332 dim 0 : vector<8x256xf32>, i32 -> vector<8x256xf32>
    %1211 = vector.extract_strided_slice %1204 {offsets = [1, 0, 0], sizes = [1, 8, 1], strides = [1, 1, 1]} : vector<7x8x1xf32> to vector<1x8x1xf32>
    %1212 = vector.shape_cast %1211 : vector<1x8x1xf32> to vector<8x1xf32>
    %1213 = vector.broadcast %1212 : vector<8x1xf32> to vector<8x256xf32>
    %1214 = arith.mulf %1210, %1213 : vector<8x256xf32>
    %1215 = arith.addf %1209, %1214 : vector<8x256xf32>
    %c7_i32_333 = arith.constant 7 : i32
    %1216 = tpu.dynamic_rotate %1203 by %c7_i32_333 dim 0 : vector<8x256xf32>, i32 -> vector<8x256xf32>
    %1217 = vector.extract_strided_slice %1204 {offsets = [2, 0, 0], sizes = [1, 8, 1], strides = [1, 1, 1]} : vector<7x8x1xf32> to vector<1x8x1xf32>
    %1218 = vector.shape_cast %1217 : vector<1x8x1xf32> to vector<8x1xf32>
    %1219 = vector.broadcast %1218 : vector<8x1xf32> to vector<8x256xf32>
    %1220 = arith.mulf %1216, %1219 : vector<8x256xf32>
    %1221 = arith.addf %1215, %1220 : vector<8x256xf32>
    %1222 = vector.extract_strided_slice %1204 {offsets = [3, 0, 0], sizes = [1, 8, 1], strides = [1, 1, 1]} : vector<7x8x1xf32> to vector<1x8x1xf32>
    %1223 = vector.shape_cast %1222 : vector<1x8x1xf32> to vector<8x1xf32>
    %1224 = vector.broadcast %1223 : vector<8x1xf32> to vector<8x256xf32>
    %1225 = arith.mulf %1203, %1224 : vector<8x256xf32>
    %1226 = arith.addf %1221, %1225 : vector<8x256xf32>
    %c1_i32_334 = arith.constant 1 : i32
    %1227 = tpu.dynamic_rotate %1203 by %c1_i32_334 dim 0 : vector<8x256xf32>, i32 -> vector<8x256xf32>
    %1228 = vector.extract_strided_slice %1204 {offsets = [4, 0, 0], sizes = [1, 8, 1], strides = [1, 1, 1]} : vector<7x8x1xf32> to vector<1x8x1xf32>
    %1229 = vector.shape_cast %1228 : vector<1x8x1xf32> to vector<8x1xf32>
    %1230 = vector.broadcast %1229 : vector<8x1xf32> to vector<8x256xf32>
    %1231 = arith.mulf %1227, %1230 : vector<8x256xf32>
    %1232 = arith.addf %1226, %1231 : vector<8x256xf32>
    %c2_i32_335 = arith.constant 2 : i32
    %1233 = tpu.dynamic_rotate %1203 by %c2_i32_335 dim 0 : vector<8x256xf32>, i32 -> vector<8x256xf32>
    %1234 = vector.extract_strided_slice %1204 {offsets = [5, 0, 0], sizes = [1, 8, 1], strides = [1, 1, 1]} : vector<7x8x1xf32> to vector<1x8x1xf32>
    %1235 = vector.shape_cast %1234 : vector<1x8x1xf32> to vector<8x1xf32>
    %1236 = vector.broadcast %1235 : vector<8x1xf32> to vector<8x256xf32>
    %1237 = arith.mulf %1233, %1236 : vector<8x256xf32>
    %1238 = arith.addf %1232, %1237 : vector<8x256xf32>
    %c3_i32_336 = arith.constant 3 : i32
    %1239 = tpu.dynamic_rotate %1203 by %c3_i32_336 dim 0 : vector<8x256xf32>, i32 -> vector<8x256xf32>
    %1240 = vector.extract_strided_slice %1204 {offsets = [6, 0, 0], sizes = [1, 8, 1], strides = [1, 1, 1]} : vector<7x8x1xf32> to vector<1x8x1xf32>
    %1241 = vector.shape_cast %1240 : vector<1x8x1xf32> to vector<8x1xf32>
    %1242 = vector.broadcast %1241 : vector<8x1xf32> to vector<8x256xf32>
    %1243 = arith.mulf %1239, %1242 : vector<8x256xf32>
    %1244 = arith.addf %1238, %1243 : vector<8x256xf32>
    %1245 = arith.mulf %1244, %1244 : vector<8x256xf32>
    %c4_i32_337 = arith.constant 4 : i32
    %1246 = tpu.dynamic_rotate %1244 by %c4_i32_337 dim 0 : vector<8x256xf32>, i32 -> vector<8x256xf32>
    %1247 = arith.addf %1244, %1246 : vector<8x256xf32>
    %c4_i32_338 = arith.constant 4 : i32
    %1248 = tpu.dynamic_rotate %1245 by %c4_i32_338 dim 0 : vector<8x256xf32>, i32 -> vector<8x256xf32>
    %1249 = arith.addf %1245, %1248 : vector<8x256xf32>
    %cst_339 = arith.constant dense<0.000000e+00> : vector<8xf32>
    %1250 = vector.multi_reduction <add>, %1247, %cst_339 [1] : vector<8x256xf32> to vector<8xf32>
    %1251 = vector.shape_cast %1250 : vector<8xf32> to vector<8x1xf32>
    %cst_340 = arith.constant dense<0.000000e+00> : vector<8xf32>
    %1252 = vector.multi_reduction <add>, %1249, %cst_340 [1] : vector<8x256xf32> to vector<8xf32>
    %1253 = vector.shape_cast %1252 : vector<8xf32> to vector<8x1xf32>
    %cst_341 = arith.constant 0.001953125 : f32
    %1254 = vector.broadcast %cst_341 : f32 to vector<8x1xf32>
    %1255 = arith.mulf %1251, %1254 : vector<8x1xf32>
    %cst_342 = arith.constant 0.001953125 : f32
    %1256 = vector.broadcast %cst_342 : f32 to vector<8x1xf32>
    %1257 = arith.mulf %1253, %1256 : vector<8x1xf32>
    %1258 = arith.mulf %1255, %1255 : vector<8x1xf32>
    %1259 = arith.subf %1257, %1258 : vector<8x1xf32>
    %1260 = vector.broadcast %1255 : vector<8x1xf32> to vector<8x256xf32>
    %1261 = arith.subf %1244, %1260 : vector<8x256xf32>
    %cst_343 = arith.constant 9.99999974E-6 : f32
    %1262 = vector.broadcast %cst_343 : f32 to vector<8x1xf32>
    %1263 = arith.addf %1259, %1262 : vector<8x1xf32>
    %1264 = math.rsqrt %1263 : vector<8x1xf32>
    %1265 = vector.broadcast %1264 : vector<8x1xf32> to vector<8x256xf32>
    %1266 = arith.mulf %1261, %1265 : vector<8x256xf32>
    %1267 = vector.broadcast %1134 : f32 to vector<8x256xf32>
    %1268 = arith.mulf %1267, %1266 : vector<8x256xf32>
    %1269 = arith.addf %1133, %1268 : vector<8x256xf32>
    %c7 = arith.constant 7 : index
    %1270 = memref.load %arg1[%c7] : memref<8xf32, #tpu.memory_space<smem>>
    %c0_344 = arith.constant 0 : index
    %c0_345 = arith.constant 0 : index
    %c0_346 = arith.constant 0 : index
    %c0_347 = arith.constant 0 : index
    %1271 = vector.load %arg16[%c0_344, %c0_345, %c0_346, %c0_347] : memref<5x5x8x1xf32, #tpu.memory_space<vmem>>, vector<5x5x8x1xf32>
    %cst_348 = arith.constant 4.000000e+00 : f32
    %1272 = vector.broadcast %cst_348 : f32 to vector<8x256xf32>
    %1273 = arith.cmpf oge, %1, %1272 : vector<8x256xf32>
    %cst_349 = arith.constant 1.900000e+01 : f32
    %1274 = vector.broadcast %cst_349 : f32 to vector<8x256xf32>
    %1275 = arith.cmpf ole, %1, %1274 : vector<8x256xf32>
    %1276 = arith.andi %1273, %1275 : vector<8x256xi1>
    %cst_350 = arith.constant 4.000000e+00 : f32
    %1277 = vector.broadcast %cst_350 : f32 to vector<8x256xf32>
    %1278 = arith.cmpf oge, %2, %1277 : vector<8x256xf32>
    %cst_351 = arith.constant 1.900000e+01 : f32
    %1279 = vector.broadcast %cst_351 : f32 to vector<8x256xf32>
    %1280 = arith.cmpf ole, %2, %1279 : vector<8x256xf32>
    %1281 = arith.andi %1278, %1280 : vector<8x256xi1>
    %1282 = arith.andi %1276, %1281 : vector<8x256xi1>
    %c68_i32 = arith.constant 68 : i32
    %1283 = tpu.dynamic_rotate %161 by %c68_i32 dim 1 : vector<8x256xf32>, i32 -> vector<8x256xf32>
    %cst_352 = arith.constant 0.000000e+00 : f32
    %1284 = vector.broadcast %cst_352 : f32 to vector<8x256xf32>
    %1285 = arith.select %1282, %1283, %1284 : vector<8x256xi1>, vector<8x256xf32>
    %1286 = vector.extract_strided_slice %1271 {offsets = [0, 0, 0, 0], sizes = [1, 1, 8, 1], strides = [1, 1, 1, 1]} : vector<5x5x8x1xf32> to vector<1x1x8x1xf32>
    %1287 = vector.shape_cast %1286 : vector<1x1x8x1xf32> to vector<8x1xf32>
    %1288 = vector.broadcast %1287 : vector<8x1xf32> to vector<8x256xf32>
    %1289 = arith.mulf %1285, %1288 : vector<8x256xf32>
    %cst_353 = arith.constant 4.000000e+00 : f32
    %1290 = vector.broadcast %cst_353 : f32 to vector<8x256xf32>
    %1291 = arith.cmpf oge, %1, %1290 : vector<8x256xf32>
    %cst_354 = arith.constant 1.900000e+01 : f32
    %1292 = vector.broadcast %cst_354 : f32 to vector<8x256xf32>
    %1293 = arith.cmpf ole, %1, %1292 : vector<8x256xf32>
    %1294 = arith.andi %1291, %1293 : vector<8x256xi1>
    %cst_355 = arith.constant 2.000000e+00 : f32
    %1295 = vector.broadcast %cst_355 : f32 to vector<8x256xf32>
    %1296 = arith.cmpf oge, %2, %1295 : vector<8x256xf32>
    %cst_356 = arith.constant 1.700000e+01 : f32
    %1297 = vector.broadcast %cst_356 : f32 to vector<8x256xf32>
    %1298 = arith.cmpf ole, %2, %1297 : vector<8x256xf32>
    %1299 = arith.andi %1296, %1298 : vector<8x256xi1>
    %1300 = arith.andi %1294, %1299 : vector<8x256xi1>
    %c66_i32 = arith.constant 66 : i32
    %1301 = tpu.dynamic_rotate %161 by %c66_i32 dim 1 : vector<8x256xf32>, i32 -> vector<8x256xf32>
    %cst_357 = arith.constant 0.000000e+00 : f32
    %1302 = vector.broadcast %cst_357 : f32 to vector<8x256xf32>
    %1303 = arith.select %1300, %1301, %1302 : vector<8x256xi1>, vector<8x256xf32>
    %1304 = vector.extract_strided_slice %1271 {offsets = [0, 1, 0, 0], sizes = [1, 1, 8, 1], strides = [1, 1, 1, 1]} : vector<5x5x8x1xf32> to vector<1x1x8x1xf32>
    %1305 = vector.shape_cast %1304 : vector<1x1x8x1xf32> to vector<8x1xf32>
    %1306 = vector.broadcast %1305 : vector<8x1xf32> to vector<8x256xf32>
    %1307 = arith.mulf %1303, %1306 : vector<8x256xf32>
    %1308 = arith.addf %1289, %1307 : vector<8x256xf32>
    %cst_358 = arith.constant 4.000000e+00 : f32
    %1309 = vector.broadcast %cst_358 : f32 to vector<8x256xf32>
    %1310 = arith.cmpf oge, %1, %1309 : vector<8x256xf32>
    %cst_359 = arith.constant 1.900000e+01 : f32
    %1311 = vector.broadcast %cst_359 : f32 to vector<8x256xf32>
    %1312 = arith.cmpf ole, %1, %1311 : vector<8x256xf32>
    %1313 = arith.andi %1310, %1312 : vector<8x256xi1>
    %cst_360 = arith.constant 0.000000e+00 : f32
    %1314 = vector.broadcast %cst_360 : f32 to vector<8x256xf32>
    %1315 = arith.cmpf oge, %2, %1314 : vector<8x256xf32>
    %cst_361 = arith.constant 1.500000e+01 : f32
    %1316 = vector.broadcast %cst_361 : f32 to vector<8x256xf32>
    %1317 = arith.cmpf ole, %2, %1316 : vector<8x256xf32>
    %1318 = arith.andi %1315, %1317 : vector<8x256xi1>
    %1319 = arith.andi %1313, %1318 : vector<8x256xi1>
    %c64_i32 = arith.constant 64 : i32
    %1320 = tpu.dynamic_rotate %161 by %c64_i32 dim 1 : vector<8x256xf32>, i32 -> vector<8x256xf32>
    %cst_362 = arith.constant 0.000000e+00 : f32
    %1321 = vector.broadcast %cst_362 : f32 to vector<8x256xf32>
    %1322 = arith.select %1319, %1320, %1321 : vector<8x256xi1>, vector<8x256xf32>
    %1323 = vector.extract_strided_slice %1271 {offsets = [0, 2, 0, 0], sizes = [1, 1, 8, 1], strides = [1, 1, 1, 1]} : vector<5x5x8x1xf32> to vector<1x1x8x1xf32>
    %1324 = vector.shape_cast %1323 : vector<1x1x8x1xf32> to vector<8x1xf32>
    %1325 = vector.broadcast %1324 : vector<8x1xf32> to vector<8x256xf32>
    %1326 = arith.mulf %1322, %1325 : vector<8x256xf32>
    %1327 = arith.addf %1308, %1326 : vector<8x256xf32>
    %cst_363 = arith.constant 4.000000e+00 : f32
    %1328 = vector.broadcast %cst_363 : f32 to vector<8x256xf32>
    %1329 = arith.cmpf oge, %1, %1328 : vector<8x256xf32>
    %cst_364 = arith.constant 1.900000e+01 : f32
    %1330 = vector.broadcast %cst_364 : f32 to vector<8x256xf32>
    %1331 = arith.cmpf ole, %1, %1330 : vector<8x256xf32>
    %1332 = arith.andi %1329, %1331 : vector<8x256xi1>
    %cst_365 = arith.constant -2.000000e+00 : f32
    %1333 = vector.broadcast %cst_365 : f32 to vector<8x256xf32>
    %1334 = arith.cmpf oge, %2, %1333 : vector<8x256xf32>
    %cst_366 = arith.constant 1.300000e+01 : f32
    %1335 = vector.broadcast %cst_366 : f32 to vector<8x256xf32>
    %1336 = arith.cmpf ole, %2, %1335 : vector<8x256xf32>
    %1337 = arith.andi %1334, %1336 : vector<8x256xi1>
    %1338 = arith.andi %1332, %1337 : vector<8x256xi1>
    %c62_i32 = arith.constant 62 : i32
    %1339 = tpu.dynamic_rotate %161 by %c62_i32 dim 1 : vector<8x256xf32>, i32 -> vector<8x256xf32>
    %cst_367 = arith.constant 0.000000e+00 : f32
    %1340 = vector.broadcast %cst_367 : f32 to vector<8x256xf32>
    %1341 = arith.select %1338, %1339, %1340 : vector<8x256xi1>, vector<8x256xf32>
    %1342 = vector.extract_strided_slice %1271 {offsets = [0, 3, 0, 0], sizes = [1, 1, 8, 1], strides = [1, 1, 1, 1]} : vector<5x5x8x1xf32> to vector<1x1x8x1xf32>
    %1343 = vector.shape_cast %1342 : vector<1x1x8x1xf32> to vector<8x1xf32>
    %1344 = vector.broadcast %1343 : vector<8x1xf32> to vector<8x256xf32>
    %1345 = arith.mulf %1341, %1344 : vector<8x256xf32>
    %1346 = arith.addf %1327, %1345 : vector<8x256xf32>
    %cst_368 = arith.constant 4.000000e+00 : f32
    %1347 = vector.broadcast %cst_368 : f32 to vector<8x256xf32>
    %1348 = arith.cmpf oge, %1, %1347 : vector<8x256xf32>
    %cst_369 = arith.constant 1.900000e+01 : f32
    %1349 = vector.broadcast %cst_369 : f32 to vector<8x256xf32>
    %1350 = arith.cmpf ole, %1, %1349 : vector<8x256xf32>
    %1351 = arith.andi %1348, %1350 : vector<8x256xi1>
    %cst_370 = arith.constant -4.000000e+00 : f32
    %1352 = vector.broadcast %cst_370 : f32 to vector<8x256xf32>
    %1353 = arith.cmpf oge, %2, %1352 : vector<8x256xf32>
    %cst_371 = arith.constant 1.100000e+01 : f32
    %1354 = vector.broadcast %cst_371 : f32 to vector<8x256xf32>
    %1355 = arith.cmpf ole, %2, %1354 : vector<8x256xf32>
    %1356 = arith.andi %1353, %1355 : vector<8x256xi1>
    %1357 = arith.andi %1351, %1356 : vector<8x256xi1>
    %c60_i32 = arith.constant 60 : i32
    %1358 = tpu.dynamic_rotate %161 by %c60_i32 dim 1 : vector<8x256xf32>, i32 -> vector<8x256xf32>
    %cst_372 = arith.constant 0.000000e+00 : f32
    %1359 = vector.broadcast %cst_372 : f32 to vector<8x256xf32>
    %1360 = arith.select %1357, %1358, %1359 : vector<8x256xi1>, vector<8x256xf32>
    %1361 = vector.extract_strided_slice %1271 {offsets = [0, 4, 0, 0], sizes = [1, 1, 8, 1], strides = [1, 1, 1, 1]} : vector<5x5x8x1xf32> to vector<1x1x8x1xf32>
    %1362 = vector.shape_cast %1361 : vector<1x1x8x1xf32> to vector<8x1xf32>
    %1363 = vector.broadcast %1362 : vector<8x1xf32> to vector<8x256xf32>
    %1364 = arith.mulf %1360, %1363 : vector<8x256xf32>
    %1365 = arith.addf %1346, %1364 : vector<8x256xf32>
    %cst_373 = arith.constant 2.000000e+00 : f32
    %1366 = vector.broadcast %cst_373 : f32 to vector<8x256xf32>
    %1367 = arith.cmpf oge, %1, %1366 : vector<8x256xf32>
    %cst_374 = arith.constant 1.700000e+01 : f32
    %1368 = vector.broadcast %cst_374 : f32 to vector<8x256xf32>
    %1369 = arith.cmpf ole, %1, %1368 : vector<8x256xf32>
    %1370 = arith.andi %1367, %1369 : vector<8x256xi1>
    %cst_375 = arith.constant 4.000000e+00 : f32
    %1371 = vector.broadcast %cst_375 : f32 to vector<8x256xf32>
    %1372 = arith.cmpf oge, %2, %1371 : vector<8x256xf32>
    %cst_376 = arith.constant 1.900000e+01 : f32
    %1373 = vector.broadcast %cst_376 : f32 to vector<8x256xf32>
    %1374 = arith.cmpf ole, %2, %1373 : vector<8x256xf32>
    %1375 = arith.andi %1372, %1374 : vector<8x256xi1>
    %1376 = arith.andi %1370, %1375 : vector<8x256xi1>
    %c36_i32 = arith.constant 36 : i32
    %1377 = tpu.dynamic_rotate %161 by %c36_i32 dim 1 : vector<8x256xf32>, i32 -> vector<8x256xf32>
    %cst_377 = arith.constant 0.000000e+00 : f32
    %1378 = vector.broadcast %cst_377 : f32 to vector<8x256xf32>
    %1379 = arith.select %1376, %1377, %1378 : vector<8x256xi1>, vector<8x256xf32>
    %1380 = vector.extract_strided_slice %1271 {offsets = [1, 0, 0, 0], sizes = [1, 1, 8, 1], strides = [1, 1, 1, 1]} : vector<5x5x8x1xf32> to vector<1x1x8x1xf32>
    %1381 = vector.shape_cast %1380 : vector<1x1x8x1xf32> to vector<8x1xf32>
    %1382 = vector.broadcast %1381 : vector<8x1xf32> to vector<8x256xf32>
    %1383 = arith.mulf %1379, %1382 : vector<8x256xf32>
    %1384 = arith.addf %1365, %1383 : vector<8x256xf32>
    %c34_i32_378 = arith.constant 34 : i32
    %1385 = tpu.dynamic_rotate %161 by %c34_i32_378 dim 1 : vector<8x256xf32>, i32 -> vector<8x256xf32>
    %cst_379 = arith.constant 0.000000e+00 : f32
    %1386 = vector.broadcast %cst_379 : f32 to vector<8x256xf32>
    %1387 = arith.select %443, %1385, %1386 : vector<8x256xi1>, vector<8x256xf32>
    %1388 = vector.extract_strided_slice %1271 {offsets = [1, 1, 0, 0], sizes = [1, 1, 8, 1], strides = [1, 1, 1, 1]} : vector<5x5x8x1xf32> to vector<1x1x8x1xf32>
    %1389 = vector.shape_cast %1388 : vector<1x1x8x1xf32> to vector<8x1xf32>
    %1390 = vector.broadcast %1389 : vector<8x1xf32> to vector<8x256xf32>
    %1391 = arith.mulf %1387, %1390 : vector<8x256xf32>
    %1392 = arith.addf %1384, %1391 : vector<8x256xf32>
    %c32_i32_380 = arith.constant 32 : i32
    %1393 = tpu.dynamic_rotate %161 by %c32_i32_380 dim 1 : vector<8x256xf32>, i32 -> vector<8x256xf32>
    %cst_381 = arith.constant 0.000000e+00 : f32
    %1394 = vector.broadcast %cst_381 : f32 to vector<8x256xf32>
    %1395 = arith.select %480, %1393, %1394 : vector<8x256xi1>, vector<8x256xf32>
    %1396 = vector.extract_strided_slice %1271 {offsets = [1, 2, 0, 0], sizes = [1, 1, 8, 1], strides = [1, 1, 1, 1]} : vector<5x5x8x1xf32> to vector<1x1x8x1xf32>
    %1397 = vector.shape_cast %1396 : vector<1x1x8x1xf32> to vector<8x1xf32>
    %1398 = vector.broadcast %1397 : vector<8x1xf32> to vector<8x256xf32>
    %1399 = arith.mulf %1395, %1398 : vector<8x256xf32>
    %1400 = arith.addf %1392, %1399 : vector<8x256xf32>
    %c30_i32_382 = arith.constant 30 : i32
    %1401 = tpu.dynamic_rotate %161 by %c30_i32_382 dim 1 : vector<8x256xf32>, i32 -> vector<8x256xf32>
    %cst_383 = arith.constant 0.000000e+00 : f32
    %1402 = vector.broadcast %cst_383 : f32 to vector<8x256xf32>
    %1403 = arith.select %518, %1401, %1402 : vector<8x256xi1>, vector<8x256xf32>
    %1404 = vector.extract_strided_slice %1271 {offsets = [1, 3, 0, 0], sizes = [1, 1, 8, 1], strides = [1, 1, 1, 1]} : vector<5x5x8x1xf32> to vector<1x1x8x1xf32>
    %1405 = vector.shape_cast %1404 : vector<1x1x8x1xf32> to vector<8x1xf32>
    %1406 = vector.broadcast %1405 : vector<8x1xf32> to vector<8x256xf32>
    %1407 = arith.mulf %1403, %1406 : vector<8x256xf32>
    %1408 = arith.addf %1400, %1407 : vector<8x256xf32>
    %cst_384 = arith.constant 2.000000e+00 : f32
    %1409 = vector.broadcast %cst_384 : f32 to vector<8x256xf32>
    %1410 = arith.cmpf oge, %1, %1409 : vector<8x256xf32>
    %cst_385 = arith.constant 1.700000e+01 : f32
    %1411 = vector.broadcast %cst_385 : f32 to vector<8x256xf32>
    %1412 = arith.cmpf ole, %1, %1411 : vector<8x256xf32>
    %1413 = arith.andi %1410, %1412 : vector<8x256xi1>
    %cst_386 = arith.constant -4.000000e+00 : f32
    %1414 = vector.broadcast %cst_386 : f32 to vector<8x256xf32>
    %1415 = arith.cmpf oge, %2, %1414 : vector<8x256xf32>
    %cst_387 = arith.constant 1.100000e+01 : f32
    %1416 = vector.broadcast %cst_387 : f32 to vector<8x256xf32>
    %1417 = arith.cmpf ole, %2, %1416 : vector<8x256xf32>
    %1418 = arith.andi %1415, %1417 : vector<8x256xi1>
    %1419 = arith.andi %1413, %1418 : vector<8x256xi1>
    %c28_i32 = arith.constant 28 : i32
    %1420 = tpu.dynamic_rotate %161 by %c28_i32 dim 1 : vector<8x256xf32>, i32 -> vector<8x256xf32>
    %cst_388 = arith.constant 0.000000e+00 : f32
    %1421 = vector.broadcast %cst_388 : f32 to vector<8x256xf32>
    %1422 = arith.select %1419, %1420, %1421 : vector<8x256xi1>, vector<8x256xf32>
    %1423 = vector.extract_strided_slice %1271 {offsets = [1, 4, 0, 0], sizes = [1, 1, 8, 1], strides = [1, 1, 1, 1]} : vector<5x5x8x1xf32> to vector<1x1x8x1xf32>
    %1424 = vector.shape_cast %1423 : vector<1x1x8x1xf32> to vector<8x1xf32>
    %1425 = vector.broadcast %1424 : vector<8x1xf32> to vector<8x256xf32>
    %1426 = arith.mulf %1422, %1425 : vector<8x256xf32>
    %1427 = arith.addf %1408, %1426 : vector<8x256xf32>
    %cst_389 = arith.constant 0.000000e+00 : f32
    %1428 = vector.broadcast %cst_389 : f32 to vector<8x256xf32>
    %1429 = arith.cmpf oge, %1, %1428 : vector<8x256xf32>
    %cst_390 = arith.constant 1.500000e+01 : f32
    %1430 = vector.broadcast %cst_390 : f32 to vector<8x256xf32>
    %1431 = arith.cmpf ole, %1, %1430 : vector<8x256xf32>
    %1432 = arith.andi %1429, %1431 : vector<8x256xi1>
    %cst_391 = arith.constant 4.000000e+00 : f32
    %1433 = vector.broadcast %cst_391 : f32 to vector<8x256xf32>
    %1434 = arith.cmpf oge, %2, %1433 : vector<8x256xf32>
    %cst_392 = arith.constant 1.900000e+01 : f32
    %1435 = vector.broadcast %cst_392 : f32 to vector<8x256xf32>
    %1436 = arith.cmpf ole, %2, %1435 : vector<8x256xf32>
    %1437 = arith.andi %1434, %1436 : vector<8x256xi1>
    %1438 = arith.andi %1432, %1437 : vector<8x256xi1>
    %c4_i32_393 = arith.constant 4 : i32
    %1439 = tpu.dynamic_rotate %161 by %c4_i32_393 dim 1 : vector<8x256xf32>, i32 -> vector<8x256xf32>
    %cst_394 = arith.constant 0.000000e+00 : f32
    %1440 = vector.broadcast %cst_394 : f32 to vector<8x256xf32>
    %1441 = arith.select %1438, %1439, %1440 : vector<8x256xi1>, vector<8x256xf32>
    %1442 = vector.extract_strided_slice %1271 {offsets = [2, 0, 0, 0], sizes = [1, 1, 8, 1], strides = [1, 1, 1, 1]} : vector<5x5x8x1xf32> to vector<1x1x8x1xf32>
    %1443 = vector.shape_cast %1442 : vector<1x1x8x1xf32> to vector<8x1xf32>
    %1444 = vector.broadcast %1443 : vector<8x1xf32> to vector<8x256xf32>
    %1445 = arith.mulf %1441, %1444 : vector<8x256xf32>
    %1446 = arith.addf %1427, %1445 : vector<8x256xf32>
    %c2_i32_395 = arith.constant 2 : i32
    %1447 = tpu.dynamic_rotate %161 by %c2_i32_395 dim 1 : vector<8x256xf32>, i32 -> vector<8x256xf32>
    %cst_396 = arith.constant 0.000000e+00 : f32
    %1448 = vector.broadcast %cst_396 : f32 to vector<8x256xf32>
    %1449 = arith.select %599, %1447, %1448 : vector<8x256xi1>, vector<8x256xf32>
    %1450 = vector.extract_strided_slice %1271 {offsets = [2, 1, 0, 0], sizes = [1, 1, 8, 1], strides = [1, 1, 1, 1]} : vector<5x5x8x1xf32> to vector<1x1x8x1xf32>
    %1451 = vector.shape_cast %1450 : vector<1x1x8x1xf32> to vector<8x1xf32>
    %1452 = vector.broadcast %1451 : vector<8x1xf32> to vector<8x256xf32>
    %1453 = arith.mulf %1449, %1452 : vector<8x256xf32>
    %1454 = arith.addf %1446, %1453 : vector<8x256xf32>
    %1455 = vector.extract_strided_slice %1271 {offsets = [2, 2, 0, 0], sizes = [1, 1, 8, 1], strides = [1, 1, 1, 1]} : vector<5x5x8x1xf32> to vector<1x1x8x1xf32>
    %1456 = vector.shape_cast %1455 : vector<1x1x8x1xf32> to vector<8x1xf32>
    %1457 = vector.broadcast %1456 : vector<8x1xf32> to vector<8x256xf32>
    %1458 = arith.mulf %161, %1457 : vector<8x256xf32>
    %1459 = arith.addf %1454, %1458 : vector<8x256xf32>
    %c254_i32_397 = arith.constant 254 : i32
    %1460 = tpu.dynamic_rotate %161 by %c254_i32_397 dim 1 : vector<8x256xf32>, i32 -> vector<8x256xf32>
    %cst_398 = arith.constant 0.000000e+00 : f32
    %1461 = vector.broadcast %cst_398 : f32 to vector<8x256xf32>
    %1462 = arith.select %639, %1460, %1461 : vector<8x256xi1>, vector<8x256xf32>
    %1463 = vector.extract_strided_slice %1271 {offsets = [2, 3, 0, 0], sizes = [1, 1, 8, 1], strides = [1, 1, 1, 1]} : vector<5x5x8x1xf32> to vector<1x1x8x1xf32>
    %1464 = vector.shape_cast %1463 : vector<1x1x8x1xf32> to vector<8x1xf32>
    %1465 = vector.broadcast %1464 : vector<8x1xf32> to vector<8x256xf32>
    %1466 = arith.mulf %1462, %1465 : vector<8x256xf32>
    %1467 = arith.addf %1459, %1466 : vector<8x256xf32>
    %cst_399 = arith.constant 0.000000e+00 : f32
    %1468 = vector.broadcast %cst_399 : f32 to vector<8x256xf32>
    %1469 = arith.cmpf oge, %1, %1468 : vector<8x256xf32>
    %cst_400 = arith.constant 1.500000e+01 : f32
    %1470 = vector.broadcast %cst_400 : f32 to vector<8x256xf32>
    %1471 = arith.cmpf ole, %1, %1470 : vector<8x256xf32>
    %1472 = arith.andi %1469, %1471 : vector<8x256xi1>
    %cst_401 = arith.constant -4.000000e+00 : f32
    %1473 = vector.broadcast %cst_401 : f32 to vector<8x256xf32>
    %1474 = arith.cmpf oge, %2, %1473 : vector<8x256xf32>
    %cst_402 = arith.constant 1.100000e+01 : f32
    %1475 = vector.broadcast %cst_402 : f32 to vector<8x256xf32>
    %1476 = arith.cmpf ole, %2, %1475 : vector<8x256xf32>
    %1477 = arith.andi %1474, %1476 : vector<8x256xi1>
    %1478 = arith.andi %1472, %1477 : vector<8x256xi1>
    %c252_i32 = arith.constant 252 : i32
    %1479 = tpu.dynamic_rotate %161 by %c252_i32 dim 1 : vector<8x256xf32>, i32 -> vector<8x256xf32>
    %cst_403 = arith.constant 0.000000e+00 : f32
    %1480 = vector.broadcast %cst_403 : f32 to vector<8x256xf32>
    %1481 = arith.select %1478, %1479, %1480 : vector<8x256xi1>, vector<8x256xf32>
    %1482 = vector.extract_strided_slice %1271 {offsets = [2, 4, 0, 0], sizes = [1, 1, 8, 1], strides = [1, 1, 1, 1]} : vector<5x5x8x1xf32> to vector<1x1x8x1xf32>
    %1483 = vector.shape_cast %1482 : vector<1x1x8x1xf32> to vector<8x1xf32>
    %1484 = vector.broadcast %1483 : vector<8x1xf32> to vector<8x256xf32>
    %1485 = arith.mulf %1481, %1484 : vector<8x256xf32>
    %1486 = arith.addf %1467, %1485 : vector<8x256xf32>
    %cst_404 = arith.constant -2.000000e+00 : f32
    %1487 = vector.broadcast %cst_404 : f32 to vector<8x256xf32>
    %1488 = arith.cmpf oge, %1, %1487 : vector<8x256xf32>
    %cst_405 = arith.constant 1.300000e+01 : f32
    %1489 = vector.broadcast %cst_405 : f32 to vector<8x256xf32>
    %1490 = arith.cmpf ole, %1, %1489 : vector<8x256xf32>
    %1491 = arith.andi %1488, %1490 : vector<8x256xi1>
    %cst_406 = arith.constant 4.000000e+00 : f32
    %1492 = vector.broadcast %cst_406 : f32 to vector<8x256xf32>
    %1493 = arith.cmpf oge, %2, %1492 : vector<8x256xf32>
    %cst_407 = arith.constant 1.900000e+01 : f32
    %1494 = vector.broadcast %cst_407 : f32 to vector<8x256xf32>
    %1495 = arith.cmpf ole, %2, %1494 : vector<8x256xf32>
    %1496 = arith.andi %1493, %1495 : vector<8x256xi1>
    %1497 = arith.andi %1491, %1496 : vector<8x256xi1>
    %c228_i32 = arith.constant 228 : i32
    %1498 = tpu.dynamic_rotate %161 by %c228_i32 dim 1 : vector<8x256xf32>, i32 -> vector<8x256xf32>
    %cst_408 = arith.constant 0.000000e+00 : f32
    %1499 = vector.broadcast %cst_408 : f32 to vector<8x256xf32>
    %1500 = arith.select %1497, %1498, %1499 : vector<8x256xi1>, vector<8x256xf32>
    %1501 = vector.extract_strided_slice %1271 {offsets = [3, 0, 0, 0], sizes = [1, 1, 8, 1], strides = [1, 1, 1, 1]} : vector<5x5x8x1xf32> to vector<1x1x8x1xf32>
    %1502 = vector.shape_cast %1501 : vector<1x1x8x1xf32> to vector<8x1xf32>
    %1503 = vector.broadcast %1502 : vector<8x1xf32> to vector<8x256xf32>
    %1504 = arith.mulf %1500, %1503 : vector<8x256xf32>
    %1505 = arith.addf %1486, %1504 : vector<8x256xf32>
    %c226_i32_409 = arith.constant 226 : i32
    %1506 = tpu.dynamic_rotate %161 by %c226_i32_409 dim 1 : vector<8x256xf32>, i32 -> vector<8x256xf32>
    %cst_410 = arith.constant 0.000000e+00 : f32
    %1507 = vector.broadcast %cst_410 : f32 to vector<8x256xf32>
    %1508 = arith.select %720, %1506, %1507 : vector<8x256xi1>, vector<8x256xf32>
    %1509 = vector.extract_strided_slice %1271 {offsets = [3, 1, 0, 0], sizes = [1, 1, 8, 1], strides = [1, 1, 1, 1]} : vector<5x5x8x1xf32> to vector<1x1x8x1xf32>
    %1510 = vector.shape_cast %1509 : vector<1x1x8x1xf32> to vector<8x1xf32>
    %1511 = vector.broadcast %1510 : vector<8x1xf32> to vector<8x256xf32>
    %1512 = arith.mulf %1508, %1511 : vector<8x256xf32>
    %1513 = arith.addf %1505, %1512 : vector<8x256xf32>
    %c224_i32_411 = arith.constant 224 : i32
    %1514 = tpu.dynamic_rotate %161 by %c224_i32_411 dim 1 : vector<8x256xf32>, i32 -> vector<8x256xf32>
    %cst_412 = arith.constant 0.000000e+00 : f32
    %1515 = vector.broadcast %cst_412 : f32 to vector<8x256xf32>
    %1516 = arith.select %758, %1514, %1515 : vector<8x256xi1>, vector<8x256xf32>
    %1517 = vector.extract_strided_slice %1271 {offsets = [3, 2, 0, 0], sizes = [1, 1, 8, 1], strides = [1, 1, 1, 1]} : vector<5x5x8x1xf32> to vector<1x1x8x1xf32>
    %1518 = vector.shape_cast %1517 : vector<1x1x8x1xf32> to vector<8x1xf32>
    %1519 = vector.broadcast %1518 : vector<8x1xf32> to vector<8x256xf32>
    %1520 = arith.mulf %1516, %1519 : vector<8x256xf32>
    %1521 = arith.addf %1513, %1520 : vector<8x256xf32>
    %c222_i32_413 = arith.constant 222 : i32
    %1522 = tpu.dynamic_rotate %161 by %c222_i32_413 dim 1 : vector<8x256xf32>, i32 -> vector<8x256xf32>
    %cst_414 = arith.constant 0.000000e+00 : f32
    %1523 = vector.broadcast %cst_414 : f32 to vector<8x256xf32>
    %1524 = arith.select %796, %1522, %1523 : vector<8x256xi1>, vector<8x256xf32>
    %1525 = vector.extract_strided_slice %1271 {offsets = [3, 3, 0, 0], sizes = [1, 1, 8, 1], strides = [1, 1, 1, 1]} : vector<5x5x8x1xf32> to vector<1x1x8x1xf32>
    %1526 = vector.shape_cast %1525 : vector<1x1x8x1xf32> to vector<8x1xf32>
    %1527 = vector.broadcast %1526 : vector<8x1xf32> to vector<8x256xf32>
    %1528 = arith.mulf %1524, %1527 : vector<8x256xf32>
    %1529 = arith.addf %1521, %1528 : vector<8x256xf32>
    %cst_415 = arith.constant -2.000000e+00 : f32
    %1530 = vector.broadcast %cst_415 : f32 to vector<8x256xf32>
    %1531 = arith.cmpf oge, %1, %1530 : vector<8x256xf32>
    %cst_416 = arith.constant 1.300000e+01 : f32
    %1532 = vector.broadcast %cst_416 : f32 to vector<8x256xf32>
    %1533 = arith.cmpf ole, %1, %1532 : vector<8x256xf32>
    %1534 = arith.andi %1531, %1533 : vector<8x256xi1>
    %cst_417 = arith.constant -4.000000e+00 : f32
    %1535 = vector.broadcast %cst_417 : f32 to vector<8x256xf32>
    %1536 = arith.cmpf oge, %2, %1535 : vector<8x256xf32>
    %cst_418 = arith.constant 1.100000e+01 : f32
    %1537 = vector.broadcast %cst_418 : f32 to vector<8x256xf32>
    %1538 = arith.cmpf ole, %2, %1537 : vector<8x256xf32>
    %1539 = arith.andi %1536, %1538 : vector<8x256xi1>
    %1540 = arith.andi %1534, %1539 : vector<8x256xi1>
    %c220_i32 = arith.constant 220 : i32
    %1541 = tpu.dynamic_rotate %161 by %c220_i32 dim 1 : vector<8x256xf32>, i32 -> vector<8x256xf32>
    %cst_419 = arith.constant 0.000000e+00 : f32
    %1542 = vector.broadcast %cst_419 : f32 to vector<8x256xf32>
    %1543 = arith.select %1540, %1541, %1542 : vector<8x256xi1>, vector<8x256xf32>
    %1544 = vector.extract_strided_slice %1271 {offsets = [3, 4, 0, 0], sizes = [1, 1, 8, 1], strides = [1, 1, 1, 1]} : vector<5x5x8x1xf32> to vector<1x1x8x1xf32>
    %1545 = vector.shape_cast %1544 : vector<1x1x8x1xf32> to vector<8x1xf32>
    %1546 = vector.broadcast %1545 : vector<8x1xf32> to vector<8x256xf32>
    %1547 = arith.mulf %1543, %1546 : vector<8x256xf32>
    %1548 = arith.addf %1529, %1547 : vector<8x256xf32>
    %cst_420 = arith.constant -4.000000e+00 : f32
    %1549 = vector.broadcast %cst_420 : f32 to vector<8x256xf32>
    %1550 = arith.cmpf oge, %1, %1549 : vector<8x256xf32>
    %cst_421 = arith.constant 1.100000e+01 : f32
    %1551 = vector.broadcast %cst_421 : f32 to vector<8x256xf32>
    %1552 = arith.cmpf ole, %1, %1551 : vector<8x256xf32>
    %1553 = arith.andi %1550, %1552 : vector<8x256xi1>
    %cst_422 = arith.constant 4.000000e+00 : f32
    %1554 = vector.broadcast %cst_422 : f32 to vector<8x256xf32>
    %1555 = arith.cmpf oge, %2, %1554 : vector<8x256xf32>
    %cst_423 = arith.constant 1.900000e+01 : f32
    %1556 = vector.broadcast %cst_423 : f32 to vector<8x256xf32>
    %1557 = arith.cmpf ole, %2, %1556 : vector<8x256xf32>
    %1558 = arith.andi %1555, %1557 : vector<8x256xi1>
    %1559 = arith.andi %1553, %1558 : vector<8x256xi1>
    %c196_i32 = arith.constant 196 : i32
    %1560 = tpu.dynamic_rotate %161 by %c196_i32 dim 1 : vector<8x256xf32>, i32 -> vector<8x256xf32>
    %cst_424 = arith.constant 0.000000e+00 : f32
    %1561 = vector.broadcast %cst_424 : f32 to vector<8x256xf32>
    %1562 = arith.select %1559, %1560, %1561 : vector<8x256xi1>, vector<8x256xf32>
    %1563 = vector.extract_strided_slice %1271 {offsets = [4, 0, 0, 0], sizes = [1, 1, 8, 1], strides = [1, 1, 1, 1]} : vector<5x5x8x1xf32> to vector<1x1x8x1xf32>
    %1564 = vector.shape_cast %1563 : vector<1x1x8x1xf32> to vector<8x1xf32>
    %1565 = vector.broadcast %1564 : vector<8x1xf32> to vector<8x256xf32>
    %1566 = arith.mulf %1562, %1565 : vector<8x256xf32>
    %1567 = arith.addf %1548, %1566 : vector<8x256xf32>
    %cst_425 = arith.constant -4.000000e+00 : f32
    %1568 = vector.broadcast %cst_425 : f32 to vector<8x256xf32>
    %1569 = arith.cmpf oge, %1, %1568 : vector<8x256xf32>
    %cst_426 = arith.constant 1.100000e+01 : f32
    %1570 = vector.broadcast %cst_426 : f32 to vector<8x256xf32>
    %1571 = arith.cmpf ole, %1, %1570 : vector<8x256xf32>
    %1572 = arith.andi %1569, %1571 : vector<8x256xi1>
    %cst_427 = arith.constant 2.000000e+00 : f32
    %1573 = vector.broadcast %cst_427 : f32 to vector<8x256xf32>
    %1574 = arith.cmpf oge, %2, %1573 : vector<8x256xf32>
    %cst_428 = arith.constant 1.700000e+01 : f32
    %1575 = vector.broadcast %cst_428 : f32 to vector<8x256xf32>
    %1576 = arith.cmpf ole, %2, %1575 : vector<8x256xf32>
    %1577 = arith.andi %1574, %1576 : vector<8x256xi1>
    %1578 = arith.andi %1572, %1577 : vector<8x256xi1>
    %c194_i32 = arith.constant 194 : i32
    %1579 = tpu.dynamic_rotate %161 by %c194_i32 dim 1 : vector<8x256xf32>, i32 -> vector<8x256xf32>
    %cst_429 = arith.constant 0.000000e+00 : f32
    %1580 = vector.broadcast %cst_429 : f32 to vector<8x256xf32>
    %1581 = arith.select %1578, %1579, %1580 : vector<8x256xi1>, vector<8x256xf32>
    %1582 = vector.extract_strided_slice %1271 {offsets = [4, 1, 0, 0], sizes = [1, 1, 8, 1], strides = [1, 1, 1, 1]} : vector<5x5x8x1xf32> to vector<1x1x8x1xf32>
    %1583 = vector.shape_cast %1582 : vector<1x1x8x1xf32> to vector<8x1xf32>
    %1584 = vector.broadcast %1583 : vector<8x1xf32> to vector<8x256xf32>
    %1585 = arith.mulf %1581, %1584 : vector<8x256xf32>
    %1586 = arith.addf %1567, %1585 : vector<8x256xf32>
    %cst_430 = arith.constant -4.000000e+00 : f32
    %1587 = vector.broadcast %cst_430 : f32 to vector<8x256xf32>
    %1588 = arith.cmpf oge, %1, %1587 : vector<8x256xf32>
    %cst_431 = arith.constant 1.100000e+01 : f32
    %1589 = vector.broadcast %cst_431 : f32 to vector<8x256xf32>
    %1590 = arith.cmpf ole, %1, %1589 : vector<8x256xf32>
    %1591 = arith.andi %1588, %1590 : vector<8x256xi1>
    %cst_432 = arith.constant 0.000000e+00 : f32
    %1592 = vector.broadcast %cst_432 : f32 to vector<8x256xf32>
    %1593 = arith.cmpf oge, %2, %1592 : vector<8x256xf32>
    %cst_433 = arith.constant 1.500000e+01 : f32
    %1594 = vector.broadcast %cst_433 : f32 to vector<8x256xf32>
    %1595 = arith.cmpf ole, %2, %1594 : vector<8x256xf32>
    %1596 = arith.andi %1593, %1595 : vector<8x256xi1>
    %1597 = arith.andi %1591, %1596 : vector<8x256xi1>
    %c192_i32 = arith.constant 192 : i32
    %1598 = tpu.dynamic_rotate %161 by %c192_i32 dim 1 : vector<8x256xf32>, i32 -> vector<8x256xf32>
    %cst_434 = arith.constant 0.000000e+00 : f32
    %1599 = vector.broadcast %cst_434 : f32 to vector<8x256xf32>
    %1600 = arith.select %1597, %1598, %1599 : vector<8x256xi1>, vector<8x256xf32>
    %1601 = vector.extract_strided_slice %1271 {offsets = [4, 2, 0, 0], sizes = [1, 1, 8, 1], strides = [1, 1, 1, 1]} : vector<5x5x8x1xf32> to vector<1x1x8x1xf32>
    %1602 = vector.shape_cast %1601 : vector<1x1x8x1xf32> to vector<8x1xf32>
    %1603 = vector.broadcast %1602 : vector<8x1xf32> to vector<8x256xf32>
    %1604 = arith.mulf %1600, %1603 : vector<8x256xf32>
    %1605 = arith.addf %1586, %1604 : vector<8x256xf32>
    %cst_435 = arith.constant -4.000000e+00 : f32
    %1606 = vector.broadcast %cst_435 : f32 to vector<8x256xf32>
    %1607 = arith.cmpf oge, %1, %1606 : vector<8x256xf32>
    %cst_436 = arith.constant 1.100000e+01 : f32
    %1608 = vector.broadcast %cst_436 : f32 to vector<8x256xf32>
    %1609 = arith.cmpf ole, %1, %1608 : vector<8x256xf32>
    %1610 = arith.andi %1607, %1609 : vector<8x256xi1>
    %cst_437 = arith.constant -2.000000e+00 : f32
    %1611 = vector.broadcast %cst_437 : f32 to vector<8x256xf32>
    %1612 = arith.cmpf oge, %2, %1611 : vector<8x256xf32>
    %cst_438 = arith.constant 1.300000e+01 : f32
    %1613 = vector.broadcast %cst_438 : f32 to vector<8x256xf32>
    %1614 = arith.cmpf ole, %2, %1613 : vector<8x256xf32>
    %1615 = arith.andi %1612, %1614 : vector<8x256xi1>
    %1616 = arith.andi %1610, %1615 : vector<8x256xi1>
    %c190_i32 = arith.constant 190 : i32
    %1617 = tpu.dynamic_rotate %161 by %c190_i32 dim 1 : vector<8x256xf32>, i32 -> vector<8x256xf32>
    %cst_439 = arith.constant 0.000000e+00 : f32
    %1618 = vector.broadcast %cst_439 : f32 to vector<8x256xf32>
    %1619 = arith.select %1616, %1617, %1618 : vector<8x256xi1>, vector<8x256xf32>
    %1620 = vector.extract_strided_slice %1271 {offsets = [4, 3, 0, 0], sizes = [1, 1, 8, 1], strides = [1, 1, 1, 1]} : vector<5x5x8x1xf32> to vector<1x1x8x1xf32>
    %1621 = vector.shape_cast %1620 : vector<1x1x8x1xf32> to vector<8x1xf32>
    %1622 = vector.broadcast %1621 : vector<8x1xf32> to vector<8x256xf32>
    %1623 = arith.mulf %1619, %1622 : vector<8x256xf32>
    %1624 = arith.addf %1605, %1623 : vector<8x256xf32>
    %cst_440 = arith.constant -4.000000e+00 : f32
    %1625 = vector.broadcast %cst_440 : f32 to vector<8x256xf32>
    %1626 = arith.cmpf oge, %1, %1625 : vector<8x256xf32>
    %cst_441 = arith.constant 1.100000e+01 : f32
    %1627 = vector.broadcast %cst_441 : f32 to vector<8x256xf32>
    %1628 = arith.cmpf ole, %1, %1627 : vector<8x256xf32>
    %1629 = arith.andi %1626, %1628 : vector<8x256xi1>
    %cst_442 = arith.constant -4.000000e+00 : f32
    %1630 = vector.broadcast %cst_442 : f32 to vector<8x256xf32>
    %1631 = arith.cmpf oge, %2, %1630 : vector<8x256xf32>
    %cst_443 = arith.constant 1.100000e+01 : f32
    %1632 = vector.broadcast %cst_443 : f32 to vector<8x256xf32>
    %1633 = arith.cmpf ole, %2, %1632 : vector<8x256xf32>
    %1634 = arith.andi %1631, %1633 : vector<8x256xi1>
    %1635 = arith.andi %1629, %1634 : vector<8x256xi1>
    %c188_i32 = arith.constant 188 : i32
    %1636 = tpu.dynamic_rotate %161 by %c188_i32 dim 1 : vector<8x256xf32>, i32 -> vector<8x256xf32>
    %cst_444 = arith.constant 0.000000e+00 : f32
    %1637 = vector.broadcast %cst_444 : f32 to vector<8x256xf32>
    %1638 = arith.select %1635, %1636, %1637 : vector<8x256xi1>, vector<8x256xf32>
    %1639 = vector.extract_strided_slice %1271 {offsets = [4, 4, 0, 0], sizes = [1, 1, 8, 1], strides = [1, 1, 1, 1]} : vector<5x5x8x1xf32> to vector<1x1x8x1xf32>
    %1640 = vector.shape_cast %1639 : vector<1x1x8x1xf32> to vector<8x1xf32>
    %1641 = vector.broadcast %1640 : vector<8x1xf32> to vector<8x256xf32>
    %1642 = arith.mulf %1638, %1641 : vector<8x256xf32>
    %1643 = arith.addf %1624, %1642 : vector<8x256xf32>
    %c0_445 = arith.constant 0 : index
    %c0_446 = arith.constant 0 : index
    %c0_447 = arith.constant 0 : index
    %1644 = vector.load %arg17[%c0_445, %c0_446, %c0_447] : memref<7x8x1xf32, #tpu.memory_space<vmem>>, vector<7x8x1xf32>
    %c5_i32_448 = arith.constant 5 : i32
    %1645 = tpu.dynamic_rotate %1643 by %c5_i32_448 dim 0 : vector<8x256xf32>, i32 -> vector<8x256xf32>
    %1646 = vector.extract_strided_slice %1644 {offsets = [0, 0, 0], sizes = [1, 8, 1], strides = [1, 1, 1]} : vector<7x8x1xf32> to vector<1x8x1xf32>
    %1647 = vector.shape_cast %1646 : vector<1x8x1xf32> to vector<8x1xf32>
    %1648 = vector.broadcast %1647 : vector<8x1xf32> to vector<8x256xf32>
    %1649 = arith.mulf %1645, %1648 : vector<8x256xf32>
    %c6_i32_449 = arith.constant 6 : i32
    %1650 = tpu.dynamic_rotate %1643 by %c6_i32_449 dim 0 : vector<8x256xf32>, i32 -> vector<8x256xf32>
    %1651 = vector.extract_strided_slice %1644 {offsets = [1, 0, 0], sizes = [1, 8, 1], strides = [1, 1, 1]} : vector<7x8x1xf32> to vector<1x8x1xf32>
    %1652 = vector.shape_cast %1651 : vector<1x8x1xf32> to vector<8x1xf32>
    %1653 = vector.broadcast %1652 : vector<8x1xf32> to vector<8x256xf32>
    %1654 = arith.mulf %1650, %1653 : vector<8x256xf32>
    %1655 = arith.addf %1649, %1654 : vector<8x256xf32>
    %c7_i32_450 = arith.constant 7 : i32
    %1656 = tpu.dynamic_rotate %1643 by %c7_i32_450 dim 0 : vector<8x256xf32>, i32 -> vector<8x256xf32>
    %1657 = vector.extract_strided_slice %1644 {offsets = [2, 0, 0], sizes = [1, 8, 1], strides = [1, 1, 1]} : vector<7x8x1xf32> to vector<1x8x1xf32>
    %1658 = vector.shape_cast %1657 : vector<1x8x1xf32> to vector<8x1xf32>
    %1659 = vector.broadcast %1658 : vector<8x1xf32> to vector<8x256xf32>
    %1660 = arith.mulf %1656, %1659 : vector<8x256xf32>
    %1661 = arith.addf %1655, %1660 : vector<8x256xf32>
    %1662 = vector.extract_strided_slice %1644 {offsets = [3, 0, 0], sizes = [1, 8, 1], strides = [1, 1, 1]} : vector<7x8x1xf32> to vector<1x8x1xf32>
    %1663 = vector.shape_cast %1662 : vector<1x8x1xf32> to vector<8x1xf32>
    %1664 = vector.broadcast %1663 : vector<8x1xf32> to vector<8x256xf32>
    %1665 = arith.mulf %1643, %1664 : vector<8x256xf32>
    %1666 = arith.addf %1661, %1665 : vector<8x256xf32>
    %c1_i32_451 = arith.constant 1 : i32
    %1667 = tpu.dynamic_rotate %1643 by %c1_i32_451 dim 0 : vector<8x256xf32>, i32 -> vector<8x256xf32>
    %1668 = vector.extract_strided_slice %1644 {offsets = [4, 0, 0], sizes = [1, 8, 1], strides = [1, 1, 1]} : vector<7x8x1xf32> to vector<1x8x1xf32>
    %1669 = vector.shape_cast %1668 : vector<1x8x1xf32> to vector<8x1xf32>
    %1670 = vector.broadcast %1669 : vector<8x1xf32> to vector<8x256xf32>
    %1671 = arith.mulf %1667, %1670 : vector<8x256xf32>
    %1672 = arith.addf %1666, %1671 : vector<8x256xf32>
    %c2_i32_452 = arith.constant 2 : i32
    %1673 = tpu.dynamic_rotate %1643 by %c2_i32_452 dim 0 : vector<8x256xf32>, i32 -> vector<8x256xf32>
    %1674 = vector.extract_strided_slice %1644 {offsets = [5, 0, 0], sizes = [1, 8, 1], strides = [1, 1, 1]} : vector<7x8x1xf32> to vector<1x8x1xf32>
    %1675 = vector.shape_cast %1674 : vector<1x8x1xf32> to vector<8x1xf32>
    %1676 = vector.broadcast %1675 : vector<8x1xf32> to vector<8x256xf32>
    %1677 = arith.mulf %1673, %1676 : vector<8x256xf32>
    %1678 = arith.addf %1672, %1677 : vector<8x256xf32>
    %c3_i32_453 = arith.constant 3 : i32
    %1679 = tpu.dynamic_rotate %1643 by %c3_i32_453 dim 0 : vector<8x256xf32>, i32 -> vector<8x256xf32>
    %1680 = vector.extract_strided_slice %1644 {offsets = [6, 0, 0], sizes = [1, 8, 1], strides = [1, 1, 1]} : vector<7x8x1xf32> to vector<1x8x1xf32>
    %1681 = vector.shape_cast %1680 : vector<1x8x1xf32> to vector<8x1xf32>
    %1682 = vector.broadcast %1681 : vector<8x1xf32> to vector<8x256xf32>
    %1683 = arith.mulf %1679, %1682 : vector<8x256xf32>
    %1684 = arith.addf %1678, %1683 : vector<8x256xf32>
    %1685 = arith.mulf %1684, %1684 : vector<8x256xf32>
    %c4_i32_454 = arith.constant 4 : i32
    %1686 = tpu.dynamic_rotate %1684 by %c4_i32_454 dim 0 : vector<8x256xf32>, i32 -> vector<8x256xf32>
    %1687 = arith.addf %1684, %1686 : vector<8x256xf32>
    %c4_i32_455 = arith.constant 4 : i32
    %1688 = tpu.dynamic_rotate %1685 by %c4_i32_455 dim 0 : vector<8x256xf32>, i32 -> vector<8x256xf32>
    %1689 = arith.addf %1685, %1688 : vector<8x256xf32>
    %cst_456 = arith.constant dense<0.000000e+00> : vector<8xf32>
    %1690 = vector.multi_reduction <add>, %1687, %cst_456 [1] : vector<8x256xf32> to vector<8xf32>
    %1691 = vector.shape_cast %1690 : vector<8xf32> to vector<8x1xf32>
    %cst_457 = arith.constant dense<0.000000e+00> : vector<8xf32>
    %1692 = vector.multi_reduction <add>, %1689, %cst_457 [1] : vector<8x256xf32> to vector<8xf32>
    %1693 = vector.shape_cast %1692 : vector<8xf32> to vector<8x1xf32>
    %cst_458 = arith.constant 0.001953125 : f32
    %1694 = vector.broadcast %cst_458 : f32 to vector<8x1xf32>
    %1695 = arith.mulf %1691, %1694 : vector<8x1xf32>
    %cst_459 = arith.constant 0.001953125 : f32
    %1696 = vector.broadcast %cst_459 : f32 to vector<8x1xf32>
    %1697 = arith.mulf %1693, %1696 : vector<8x1xf32>
    %1698 = arith.mulf %1695, %1695 : vector<8x1xf32>
    %1699 = arith.subf %1697, %1698 : vector<8x1xf32>
    %1700 = vector.broadcast %1695 : vector<8x1xf32> to vector<8x256xf32>
    %1701 = arith.subf %1684, %1700 : vector<8x256xf32>
    %cst_460 = arith.constant 9.99999974E-6 : f32
    %1702 = vector.broadcast %cst_460 : f32 to vector<8x1xf32>
    %1703 = arith.addf %1699, %1702 : vector<8x1xf32>
    %1704 = math.rsqrt %1703 : vector<8x1xf32>
    %1705 = vector.broadcast %1704 : vector<8x1xf32> to vector<8x256xf32>
    %1706 = arith.mulf %1701, %1705 : vector<8x256xf32>
    %1707 = vector.broadcast %1270 : f32 to vector<8x256xf32>
    %1708 = arith.mulf %1707, %1706 : vector<8x256xf32>
    %1709 = arith.addf %1269, %1708 : vector<8x256xf32>
    %c0_461 = arith.constant 0 : index
    %c0_462 = arith.constant 0 : index
    %1710 = vector.load %arg18[%c0_461, %c0_462] : memref<8x256xf32, #tpu.memory_space<vmem>>, vector<8x256xf32>
    tpu.vector_store %arg18[%c0_461, %c0_462], %1709 {strides = array<i32>} : memref<8x256xf32, #tpu.memory_space<vmem>>, vector<8x256xf32>,
    return
  }
  func.func @transform_0(%arg0: i32) -> i32 {
    %c0_i32 = arith.constant 0 : i32
    %c0_i32_0 = arith.constant 0 : i32
    return %c0_i32 : i32
  }
  func.func @transform_1(%arg0: i32) -> (i32, i32) {
    %c0_i32 = arith.constant 0 : i32
    %c0_i32_0 = arith.constant 0 : i32
    %c0_i32_1 = arith.constant 0 : i32
    return %c0_i32, %c0_i32_0 : i32, i32
  }
  func.func @transform_2(%arg0: i32) -> (i32, i32) {
    %c0_i32 = arith.constant 0 : i32
    %c0_i32_0 = arith.constant 0 : i32
    %c0_i32_1 = arith.constant 0 : i32
    return %c0_i32, %c0_i32_0 : i32, i32
  }
  func.func @transform_3(%arg0: i32) -> (i32, i32) {
    %c0_i32 = arith.constant 0 : i32
    %c0_i32_0 = arith.constant 0 : i32
    %c0_i32_1 = arith.constant 0 : i32
    return %c0_i32, %c0_i32_0 : i32, i32
  }
  func.func @transform_4(%arg0: i32) -> (i32, i32) {
    %c0_i32 = arith.constant 0 : i32
    %c0_i32_0 = arith.constant 0 : i32
    %c0_i32_1 = arith.constant 0 : i32
    return %c0_i32, %c0_i32_0 : i32, i32
  }
  func.func @transform_5(%arg0: i32) -> (i32, i32, i32, i32) {
    %c0_i32 = arith.constant 0 : i32
    %c0_i32_0 = arith.constant 0 : i32
    %c0_i32_1 = arith.constant 0 : i32
    %c0_i32_2 = arith.constant 0 : i32
    %c0_i32_3 = arith.constant 0 : i32
    return %c0_i32, %c0_i32_0, %c0_i32_1, %c0_i32_2 : i32, i32, i32, i32
  }
  func.func @transform_6(%arg0: i32) -> (i32, i32, i32) {
    %c0_i32 = arith.constant 0 : i32
    %c0_i32_0 = arith.constant 0 : i32
    %c0_i32_1 = arith.constant 0 : i32
    %c0_i32_2 = arith.constant 0 : i32
    return %c0_i32, %c0_i32_0, %c0_i32_1 : i32, i32, i32
  }
  func.func @transform_7(%arg0: i32) -> (i32, i32, i32, i32) {
    %c0_i32 = arith.constant 0 : i32
    %c0_i32_0 = arith.constant 0 : i32
    %c0_i32_1 = arith.constant 0 : i32
    %c0_i32_2 = arith.constant 0 : i32
    %c0_i32_3 = arith.constant 0 : i32
    return %c0_i32, %c0_i32_0, %c0_i32_1, %c0_i32_2 : i32, i32, i32, i32
  }
  func.func @transform_8(%arg0: i32) -> (i32, i32, i32) {
    %c0_i32 = arith.constant 0 : i32
    %c0_i32_0 = arith.constant 0 : i32
    %c0_i32_1 = arith.constant 0 : i32
    %c0_i32_2 = arith.constant 0 : i32
    return %c0_i32, %c0_i32_0, %c0_i32_1 : i32, i32, i32
  }
  func.func @transform_9(%arg0: i32) -> (i32, i32, i32, i32) {
    %c0_i32 = arith.constant 0 : i32
    %c0_i32_0 = arith.constant 0 : i32
    %c0_i32_1 = arith.constant 0 : i32
    %c0_i32_2 = arith.constant 0 : i32
    %c0_i32_3 = arith.constant 0 : i32
    return %c0_i32, %c0_i32_0, %c0_i32_1, %c0_i32_2 : i32, i32, i32, i32
  }
  func.func @transform_10(%arg0: i32) -> (i32, i32, i32) {
    %c0_i32 = arith.constant 0 : i32
    %c0_i32_0 = arith.constant 0 : i32
    %c0_i32_1 = arith.constant 0 : i32
    %c0_i32_2 = arith.constant 0 : i32
    return %c0_i32, %c0_i32_0, %c0_i32_1 : i32, i32, i32
  }
  func.func @transform_11(%arg0: i32) -> (i32, i32, i32, i32) {
    %c0_i32 = arith.constant 0 : i32
    %c0_i32_0 = arith.constant 0 : i32
    %c0_i32_1 = arith.constant 0 : i32
    %c0_i32_2 = arith.constant 0 : i32
    %c0_i32_3 = arith.constant 0 : i32
    return %c0_i32, %c0_i32_0, %c0_i32_1, %c0_i32_2 : i32, i32, i32, i32
  }
  func.func @transform_12(%arg0: i32) -> (i32, i32, i32) {
    %c0_i32 = arith.constant 0 : i32
    %c0_i32_0 = arith.constant 0 : i32
    %c0_i32_1 = arith.constant 0 : i32
    %c0_i32_2 = arith.constant 0 : i32
    return %c0_i32, %c0_i32_0, %c0_i32_1 : i32, i32, i32
  }
  func.func @transform_13(%arg0: i32) -> (i32, i32, i32, i32) {
    %c0_i32 = arith.constant 0 : i32
    %c0_i32_0 = arith.constant 0 : i32
    %c0_i32_1 = arith.constant 0 : i32
    %c0_i32_2 = arith.constant 0 : i32
    %c0_i32_3 = arith.constant 0 : i32
    return %c0_i32, %c0_i32_0, %c0_i32_1, %c0_i32_2 : i32, i32, i32, i32
  }
  func.func @transform_14(%arg0: i32) -> (i32, i32, i32) {
    %c0_i32 = arith.constant 0 : i32
    %c0_i32_0 = arith.constant 0 : i32
    %c0_i32_1 = arith.constant 0 : i32
    %c0_i32_2 = arith.constant 0 : i32
    return %c0_i32, %c0_i32_0, %c0_i32_1 : i32, i32, i32
  }
  func.func @transform_15(%arg0: i32) -> (i32, i32, i32, i32) {
    %c0_i32 = arith.constant 0 : i32
    %c0_i32_0 = arith.constant 0 : i32
    %c0_i32_1 = arith.constant 0 : i32
    %c0_i32_2 = arith.constant 0 : i32
    %c0_i32_3 = arith.constant 0 : i32
    return %c0_i32, %c0_i32_0, %c0_i32_1, %c0_i32_2 : i32, i32, i32, i32
  }
  func.func @transform_16(%arg0: i32) -> (i32, i32, i32) {
    %c0_i32 = arith.constant 0 : i32
    %c0_i32_0 = arith.constant 0 : i32
    %c0_i32_1 = arith.constant 0 : i32
    %c0_i32_2 = arith.constant 0 : i32
    return %c0_i32, %c0_i32_0, %c0_i32_1 : i32, i32, i32
  }
  func.func @transform_17(%arg0: i32) -> (i32, i32) {
    %c0_i32 = arith.constant 0 : i32
    %c0_i32_0 = arith.constant 0 : i32
    %c0_i32_1 = arith.constant 0 : i32
    return %c0_i32, %c0_i32_0 : i32, i32
  }
}

</mosaic_0001>

<llo_original>
// kernel: tile.248
$region0: #{tile.248}
  #allocation0 [shape = 's32[1]{0}', space=sflag, size = 0x4, scoped, tag = 'scoped memory for tile.248']
  %s0 = inlined_call_operand.vmem [shape: f32[4], index: 0, kind: input, shape index: {}]
  %s1 = inlined_call_operand.vmem [shape: f32[2,4], index: 1, kind: output, shape index: {}]
  // Predicated region
  $region2: #{tile.248} parent=0 // pred_check
    _
  $region3: #{tile.248} parent=0 // pred_check_branch
    %3 = sbr.rel (0) target = $region5
  $region4: #{tile.248} parent=0 // pred_region
    _
  $region5: #{tile.248} parent=0 // pred_fallthru
    _
  %v4 = vld [vmem:[%s0] ss:$0 sm:$0xff]
  %5 = vst [vmem:[%s1] sm:$0x3] %v4

// kernel: tile.273
$region0: #{tile.273}
  %s0 = inlined_call_operand.vmem [shape: f32[2,4], index: 0, kind: input, shape index: {}]
  %s1 = inlined_call_operand.vmem [shape: f32[1,8], index: 1, kind: output, shape index: {}]
  $region1: #{tile.273} parent=0
    #allocation0 [shape = 'u8[4096]{0}', space=vmem, size = 0x1000, scoped, tag = 'scoped mem for output reshape']
    #allocation1 [shape = 'u8[4096]{0}', space=vmem, size = 0x1000, scoped, tag = 'scoped mem for input reshape']
    %s3 = sshllo.u32 0, 2
    %v4 = vld [vmem:[%s0] sm:%s3]
    %5 = vst [vmem:[#allocation1] sm:%s3] %v4
    %v6 = vld [vmem:[#allocation1] sm:$0x1]
    %vm7 = vcmask 31744
    %8 = vst.msk [vmem:[#allocation0] sm:$0x1] %vm7, %v6
    %s9 = scalar_lea.vmem [#allocation1], 1
    %v10 = vld [vmem:[%s9] sm:$0x1]
    %11 = vrot.lane.b32.xlu0 %v10, 4
    %v12 = vpop.permute.xlu0 %11
    %vm13 = vcmask 64544
    %14 = vst.msk [vmem:[#allocation0] sm:$0x1] %vm13, %v12
    %s16 = sshllo.u32 0, 1
    %v18 = vld [vmem:[#allocation0] sm:%s16]
    %s19 = sshllo.u32 0, 1
    %20 = vst [vmem:[%s1] sm:%s19] %v18

// kernel: mixed_op_forward.1
$region0: #{mixed_op_forward.1}
  #allocation0 [shape = 'u32[]', space=smem, size = 0x4, offset = 0x4, fixed_abs, tag = 'smem constant byte address 0x4 - core index']
  #allocation1 [shape = 'u32[144,128]{1,0:T(1,128)}', space=vmem, size = 0x12000, scoped, tag = 'internal scratch']
  %s0 = inlined_call_operand.vmem [shape: f32[8], index: 0, kind: input, shape index: {}]
  %s1 = inlined_call_operand.vmem [shape: f32[8,256], index: 1, kind: input, shape index: {}]
  %s2 = inlined_call_operand.vmem [shape: f32[8,256], index: 2, kind: input, shape index: {}]
  %s3 = inlined_call_operand.vmem [shape: f32[8,256], index: 3, kind: input, shape index: {}]
  %s4 = inlined_call_operand.vmem [shape: f32[8,256], index: 4, kind: input, shape index: {}]
  %s5 = inlined_call_operand.vmem [shape: f32[3,3,8,1], index: 5, kind: input, shape index: {}]
  %s6 = inlined_call_operand.vmem [shape: f32[7,8,1], index: 6, kind: input, shape index: {}]
  %s7 = inlined_call_operand.vmem [shape: f32[3,3,8,1], index: 7, kind: input, shape index: {}]
  %s8 = inlined_call_operand.vmem [shape: f32[7,8,1], index: 8, kind: input, shape index: {}]
  %s9 = inlined_call_operand.vmem [shape: f32[5,5,8,1], index: 9, kind: input, shape index: {}]
  %s10 = inlined_call_operand.vmem [shape: f32[7,8,1], index: 10, kind: input, shape index: {}]
  %s11 = inlined_call_operand.vmem [shape: f32[5,5,8,1], index: 11, kind: input, shape index: {}]
  %s12 = inlined_call_operand.vmem [shape: f32[7,8,1], index: 12, kind: input, shape index: {}]
  %s13 = inlined_call_operand.vmem [shape: f32[3,3,8,1], index: 13, kind: input, shape index: {}]
  %s14 = inlined_call_operand.vmem [shape: f32[7,8,1], index: 14, kind: input, shape index: {}]
  %s15 = inlined_call_operand.vmem [shape: f32[5,5,8,1], index: 15, kind: input, shape index: {}]
  %s16 = inlined_call_operand.vmem [shape: f32[7,8,1], index: 16, kind: input, shape index: {}]
  %s17 = inlined_call_operand.vmem [shape: f32[8,256], index: 17, kind: output, shape index: {}]
  %s18 = sld [smem:[#allocation0]]
  $region82: #{mixed_op_forward.1} parent=0
    _
  %s20 = ssub.s32 1, %s18
  %s21 = scalar_select 0, %s20, %s18
  $region1: #{mixed_op_forward.1} parent=0
    #allocation2 [shape = 'u8[512]{0}', space=smem, size = 0x200, scoped, tag = 'input window, operand 0, single buffered']
    #allocation3 [shape = 's32[1]{0}', space=sflag, size = 0x4, scoped, tag = 'scoped memory for mixed_op_forward.1']
    %22 = vsyncpa [#allocation3], 0
    // Predicated region
    $region2: #{mixed_op_forward.1} parent=1 // pred_check
      _
    $region3: #{mixed_op_forward.1} parent=1 // pred_check_branch
      %24 = sbr.rel (0) target = $region5
    $region4: #{mixed_op_forward.1} parent=1 // pred_region
      %s26 = ssub.s32 16, 16
      %27 = vsyncadd [#allocation3], %s26
      %s29 = sshll.u32 %s0, 4
      %s30 = int_to_ptr.vmem [resolvable:$true] %s29
      %32 = dma.vmem_to_smem %s30, 16, [#allocation2], [#allocation3]
    $region5: #{mixed_op_forward.1} parent=1 // pred_fallthru
      _
    // Predicated region
    $region6: #{mixed_op_forward.1} parent=1 // pred_check
      _
    $region7: #{mixed_op_forward.1} parent=1 // pred_check_branch
      %34 = sbr.rel (0) target = $region9
    $region8: #{mixed_op_forward.1} parent=1 // pred_region
      _
    $region9: #{mixed_op_forward.1} parent=1 // pred_fallthru
      _
    // Predicated region
    $region10: #{mixed_op_forward.1} parent=1 // pred_check
      _
    $region11: #{mixed_op_forward.1} parent=1 // pred_check_branch
      %36 = sbr.rel (0) target = $region13
    $region12: #{mixed_op_forward.1} parent=1 // pred_region
      _
    $region13: #{mixed_op_forward.1} parent=1 // pred_fallthru
      _
    // Predicated region
    $region14: #{mixed_op_forward.1} parent=1 // pred_check
      _
    $region15: #{mixed_op_forward.1} parent=1 // pred_check_branch
      %38 = sbr.rel (0) target = $region17
    $region16: #{mixed_op_forward.1} parent=1 // pred_region
      _
    $region17: #{mixed_op_forward.1} parent=1 // pred_fallthru
      _
    // Predicated region
    $region18: #{mixed_op_forward.1} parent=1 // pred_check
      _
    $region19: #{mixed_op_forward.1} parent=1 // pred_check_branch
      %40 = sbr.rel (0) target = $region21
    $region20: #{mixed_op_forward.1} parent=1 // pred_region
      _
    $region21: #{mixed_op_forward.1} parent=1 // pred_fallthru
      _
    // Predicated region
    $region22: #{mixed_op_forward.1} parent=1 // pred_check
      _
    $region23: #{mixed_op_forward.1} parent=1 // pred_check_branch
      %42 = sbr.rel (0) target = $region25
    $region24: #{mixed_op_forward.1} parent=1 // pred_region
      _
    $region25: #{mixed_op_forward.1} parent=1 // pred_fallthru
      _
    // Predicated region
    $region26: #{mixed_op_forward.1} parent=1 // pred_check
      _
    $region27: #{mixed_op_forward.1} parent=1 // pred_check_branch
      %44 = sbr.rel (0) target = $region29
    $region28: #{mixed_op_forward.1} parent=1 // pred_region
      _
    $region29: #{mixed_op_forward.1} parent=1 // pred_fallthru
      _
    // Predicated region
    $region30: #{mixed_op_forward.1} parent=1 // pred_check
      _
    $region31: #{mixed_op_forward.1} parent=1 // pred_check_branch
      %46 = sbr.rel (0) target = $region33
    $region32: #{mixed_op_forward.1} parent=1 // pred_region
      _
    $region33: #{mixed_op_forward.1} parent=1 // pred_fallthru
      _
    // Predicated region
    $region34: #{mixed_op_forward.1} parent=1 // pred_check
      _
    $region35: #{mixed_op_forward.1} parent=1 // pred_check_branch
      %48 = sbr.rel (0) target = $region37
    $region36: #{mixed_op_forward.1} parent=1 // pred_region
      _
    $region37: #{mixed_op_forward.1} parent=1 // pred_fallthru
      _
    // Predicated region
    $region38: #{mixed_op_forward.1} parent=1 // pred_check
      _
    $region39: #{mixed_op_forward.1} parent=1 // pred_check_branch
      %50 = sbr.rel (0) target = $region41
    $region40: #{mixed_op_forward.1} parent=1 // pred_region
      _
    $region41: #{mixed_op_forward.1} parent=1 // pred_fallthru
      _
    // Predicated region
    $region42: #{mixed_op_forward.1} parent=1 // pred_check
      _
    $region43: #{mixed_op_forward.1} parent=1 // pred_check_branch
      %52 = sbr.rel (0) target = $region45
    $region44: #{mixed_op_forward.1} parent=1 // pred_region
      _
    $region45: #{mixed_op_forward.1} parent=1 // pred_fallthru
      _
    // Predicated region
    $region46: #{mixed_op_forward.1} parent=1 // pred_check
      _
    $region47: #{mixed_op_forward.1} parent=1 // pred_check_branch
      %54 = sbr.rel (0) target = $region49
    $region48: #{mixed_op_forward.1} parent=1 // pred_region
      _
    $region49: #{mixed_op_forward.1} parent=1 // pred_fallthru
      _
    // Predicated region
    $region50: #{mixed_op_forward.1} parent=1 // pred_check
      _
    $region51: #{mixed_op_forward.1} parent=1 // pred_check_branch
      %56 = sbr.rel (0) target = $region53
    $region52: #{mixed_op_forward.1} parent=1 // pred_region
      _
    $region53: #{mixed_op_forward.1} parent=1 // pred_fallthru
      _
    // Predicated region
    $region54: #{mixed_op_forward.1} parent=1 // pred_check
      _
    $region55: #{mixed_op_forward.1} parent=1 // pred_check_branch
      %58 = sbr.rel (0) target = $region57
    $region56: #{mixed_op_forward.1} parent=1 // pred_region
      _
    $region57: #{mixed_op_forward.1} parent=1 // pred_fallthru
      _
    // Predicated region
    $region58: #{mixed_op_forward.1} parent=1 // pred_check
      _
    $region59: #{mixed_op_forward.1} parent=1 // pred_check_branch
      %60 = sbr.rel (0) target = $region61
    $region60: #{mixed_op_forward.1} parent=1 // pred_region
      _
    $region61: #{mixed_op_forward.1} parent=1 // pred_fallthru
      _
    // Predicated region
    $region62: #{mixed_op_forward.1} parent=1 // pred_check
      _
    $region63: #{mixed_op_forward.1} parent=1 // pred_check_branch
      %62 = sbr.rel (0) target = $region65
    $region64: #{mixed_op_forward.1} parent=1 // pred_region
      _
    $region65: #{mixed_op_forward.1} parent=1 // pred_fallthru
      _
    // Predicated region
    $region66: #{mixed_op_forward.1} parent=1 // pred_check
      _
    $region67: #{mixed_op_forward.1} parent=1 // pred_check_branch
      %64 = sbr.rel (0) target = $region69
    $region68: #{mixed_op_forward.1} parent=1 // pred_region
      _
    $region69: #{mixed_op_forward.1} parent=1 // pred_fallthru
      _
    // Predicated region
    $region70: #{mixed_op_forward.1} parent=1 // pred_check
      _
    $region71: #{mixed_op_forward.1} parent=1 // pred_check_branch
      %66 = sbr.rel (0) target = $region73
    $region72: #{mixed_op_forward.1} parent=1 // pred_region
      %67 = dma.done [#allocation3], 16
    $region73: #{mixed_op_forward.1} parent=1 // pred_fallthru
      _
    %68 = sfence
    %v69 = vld [vmem:[%s1] sm:$0xff]
    %v70 = vld [vmem:[%s1 + $0x8] sm:$0xff]
    %v71 = vld [vmem:[%s2] sm:$0xff]
    %v72 = vld [vmem:[%s2 + $0x8] sm:$0xff]
    %v73 = vld [vmem:[%s3] sm:$0xff]
    %v74 = vld [vmem:[%s3 + $0x8] sm:$0xff]
    %s75 = sld [smem:[#allocation2 + $0x3]]
    %v76 = vstv %s75
    %v77 = vmul.f32 %v76, %v69
    %v78 = vmul.f32 %v76, %v70
    %79 = vrot.lane.b32.xlu0 %v69, 17
    %v80 = vpop.permute.xlu0 %79
    %81 = vrot.lane.b32.xlu0 %v70, 17
    %v82 = vpop.permute.xlu0 %81
    %v83 = vlaneseq
    %v84 = vand.u32 %v83, 127
    %vm85 = vcmp.lt.s32.totalorder %v84, 17
    %v86 = vsel %vm85, %v80, %v82
    %v87 = vsel %vm85, %v82, %v80
    %vm88 = vcmp.ge.f32.partialorder %v71, 1.0
    %vm89 = vcmp.ge.f32.partialorder %v72, 1.0
    %vm90 = vcmp.le.f32.partialorder %v71, 16.0
    %vm91 = vcmp.le.f32.partialorder %v72, 16.0
    %vm92 = vmand %vm88, %vm90
    %vm93 = vmand %vm89, %vm91
    %vm94 = vcmp.ge.f32.partialorder %v73, 1.0
    %vm95 = vcmp.ge.f32.partialorder %v74, 1.0
    %vm96 = vcmp.le.f32.partialorder %v73, 16.0
    %vm97 = vcmp.le.f32.partialorder %v74, 16.0
    %vm98 = vmand %vm94, %vm96
    %vm99 = vmand %vm95, %vm97
    %vm100 = vmand %vm92, %vm98
    %vm101 = vmand %vm93, %vm99
    %v102 = vsel %vm100, %v87, -inf
    %v103 = vsel %vm101, %v86, -inf
    %v104 = vmax.f32 %v69, %v102
    %v105 = vmax.f32 %v70, %v103
    %v106 = vsel %vm100, %v87, 0.0
    %v107 = vsel %vm101, %v86, 0.0
    %v108 = vadd.f32 %v69, %v106
    %v109 = vadd.f32 %v70, %v107
    %110 = vrot.lane.b32.xlu0 %v69, 16
    %v111 = vpop.permute.xlu0 %110
    %112 = vrot.lane.b32.xlu0 %v70, 16
    %v113 = vpop.permute.xlu0 %112
    %vm114 = vcmp.lt.s32.totalorder %v84, 16
    %v115 = vsel %vm114, %v111, %v113
    %v116 = vsel %vm114, %v113, %v111
    %vm117 = vcmp.ge.f32.partialorder %v73, 0.0
    %vm118 = vcmp.ge.f32.partialorder %v74, 0.0
    %vm119 = vcmp.le.f32.partialorder %v73, 15.0
    %vm120 = vcmp.le.f32.partialorder %v74, 15.0
    %vm121 = vmand %vm117, %vm119
    %vm122 = vmand %vm118, %vm120
    %vm123 = vmand %vm92, %vm121
    %vm124 = vmand %vm93, %vm122
    %v125 = vsel %vm123, %v116, -inf
    %v126 = vsel %vm124, %v115, -inf
    %v127 = vmax.f32 %v104, %v125
    %v128 = vmax.f32 %v105, %v126
    %v129 = vsel %vm123, %v116, 0.0
    %v130 = vsel %vm124, %v115, 0.0
    %v131 = vadd.f32 %v108, %v129
    %v132 = vadd.f32 %v109, %v130
    %133 = vrot.lane.b32.xlu0 %v69, 15
    %v134 = vpop.permute.xlu0 %133
    %135 = vrot.lane.b32.xlu0 %v70, 15
    %v136 = vpop.permute.xlu0 %135
    %vm137 = vcmp.lt.s32.totalorder %v84, 15
    %v138 = vsel %vm137, %v134, %v136
    %v139 = vsel %vm137, %v136, %v134
    %vm140 = vcmp.ge.f32.partialorder %v73, -1.0
    %vm141 = vcmp.ge.f32.partialorder %v74, -1.0
    %vm142 = vcmp.le.f32.partialorder %v73, 14.0
    %vm143 = vcmp.le.f32.partialorder %v74, 14.0
    %vm144 = vmand %vm140, %vm142
    %vm145 = vmand %vm141, %vm143
    %vm146 = vmand %vm92, %vm144
    %vm147 = vmand %vm93, %vm145
    %v148 = vsel %vm146, %v139, -inf
    %v149 = vsel %vm147, %v138, -inf
    %v150 = vmax.f32 %v127, %v148
    %v151 = vmax.f32 %v128, %v149
    %v152 = vsel %vm146, %v139, 0.0
    %v153 = vsel %vm147, %v138, 0.0
    %v154 = vadd.f32 %v131, %v152
    %v155 = vadd.f32 %v132, %v153
    %156 = vrot.lane.b32.xlu0 %v69, 1
    %v157 = vpop.permute.xlu0 %156
    %158 = vrot.lane.b32.xlu0 %v70, 1
    %v159 = vpop.permute.xlu0 %158
    %vm160 = vcmp.lt.s32.totalorder %v84, 1
    %v161 = vsel %vm160, %v157, %v159
    %v162 = vsel %vm160, %v159, %v157
    %vm163 = vcmp.ge.f32.partialorder %v71, 0.0
    %vm164 = vcmp.ge.f32.partialorder %v72, 0.0
    %vm165 = vcmp.le.f32.partialorder %v71, 15.0
    %vm166 = vcmp.le.f32.partialorder %v72, 15.0
    %vm167 = vmand %vm163, %vm165
    %vm168 = vmand %vm164, %vm166
    %vm169 = vmand %vm167, %vm98
    %vm170 = vmand %vm168, %vm99
    %v171 = vsel %vm169, %v162, -inf
    %v172 = vsel %vm170, %v161, -inf
    %v173 = vmax.f32 %v150, %v171
    %v174 = vmax.f32 %v151, %v172
    %v175 = vsel %vm169, %v162, 0.0
    %v176 = vsel %vm170, %v161, 0.0
    %v177 = vadd.f32 %v154, %v175
    %v178 = vadd.f32 %v155, %v176
    %179 = vrot.lane.b32.xlu0 %v69, 127
    %v180 = vpop.permute.xlu0 %179
    %181 = vrot.lane.b32.xlu0 %v70, 127
    %v182 = vpop.permute.xlu0 %181
    %vm183 = vcmp.lt.s32.totalorder %v84, 127
    %v184 = vsel %vm183, %v180, %v182
    %v185 = vsel %vm183, %v182, %v180
    %vm186 = vmand %vm167, %vm144
    %vm187 = vmand %vm168, %vm145
    %v188 = vsel %vm186, %v184, -inf
    %v189 = vsel %vm187, %v185, -inf
    %v190 = vmax.f32 %v173, %v188
    %v191 = vmax.f32 %v174, %v189
    %v192 = vsel %vm186, %v184, 0.0
    %v193 = vsel %vm187, %v185, 0.0
    %v194 = vadd.f32 %v177, %v192
    %v195 = vadd.f32 %v178, %v193
    %196 = vrot.lane.b32.xlu0 %v69, 113
    %v197 = vpop.permute.xlu0 %196
    %198 = vrot.lane.b32.xlu0 %v70, 113
    %v199 = vpop.permute.xlu0 %198
    %vm200 = vcmp.lt.s32.totalorder %v84, 113
    %v201 = vsel %vm200, %v197, %v199
    %v202 = vsel %vm200, %v199, %v197
    %vm203 = vcmp.ge.f32.partialorder %v71, -1.0
    %vm204 = vcmp.ge.f32.partialorder %v72, -1.0
    %vm205 = vcmp.le.f32.partialorder %v71, 14.0
    %vm206 = vcmp.le.f32.partialorder %v72, 14.0
    %vm207 = vmand %vm203, %vm205
    %vm208 = vmand %vm204, %vm206
    %vm209 = vmand %vm207, %vm98
    %vm210 = vmand %vm208, %vm99
    %v211 = vsel %vm209, %v201, -inf
    %v212 = vsel %vm210, %v202, -inf
    %v213 = vmax.f32 %v190, %v211
    %v214 = vmax.f32 %v191, %v212
    %v215 = vsel %vm209, %v201, 0.0
    %v216 = vsel %vm210, %v202, 0.0
    %v217 = vadd.f32 %v194, %v215
    %v218 = vadd.f32 %v195, %v216
    %219 = vrot.lane.b32.xlu0 %v69, 112
    %v220 = vpop.permute.xlu0 %219
    %221 = vrot.lane.b32.xlu0 %v70, 112
    %v222 = vpop.permute.xlu0 %221
    %vm223 = vcmp.lt.s32.totalorder %v84, 112
    %v224 = vsel %vm223, %v220, %v222
    %v225 = vsel %vm223, %v222, %v220
    %vm226 = vmand %vm207, %vm121
    %vm227 = vmand %vm208, %vm122
    %v228 = vsel %vm226, %v224, -inf
    %v229 = vsel %vm227, %v225, -inf
    %v230 = vmax.f32 %v213, %v228
    %v231 = vmax.f32 %v214, %v229
    %v232 = vsel %vm226, %v224, 0.0
    %v233 = vsel %vm227, %v225, 0.0
    %v234 = vadd.f32 %v217, %v232
    %v235 = vadd.f32 %v218, %v233
    %236 = vrot.lane.b32.xlu0 %v69, 111
    %v237 = vpop.permute.xlu0 %236
    %238 = vrot.lane.b32.xlu0 %v70, 111
    %v239 = vpop.permute.xlu0 %238
    %vm240 = vcmp.lt.s32.totalorder %v84, 111
    %v241 = vsel %vm240, %v237, %v239
    %v242 = vsel %vm240, %v239, %v237
    %vm243 = vmand %vm207, %vm144
    %vm244 = vmand %vm208, %vm145
    %v245 = vsel %vm243, %v241, -inf
    %v246 = vsel %vm244, %v242, -inf
    %v247 = vmax.f32 %v230, %v245
    %v248 = vmax.f32 %v231, %v246
    %v249 = vsel %vm243, %v241, 0.0
    %v250 = vsel %vm244, %v242, 0.0
    %v251 = vadd.f32 %v234, %v249
    %v252 = vadd.f32 %v235, %v250
    %s253 = sld [smem:[#allocation2 + $0x1]]
    %v254 = vstv %s253
    %v255 = vmul.f32 %v254, %v247
    %v256 = vmul.f32 %v254, %v248
    %v257 = vadd.f32 %v77, %v255
    %v258 = vadd.f32 %v78, %v256
    %s259 = sld [smem:[#allocation2 + $0x2]]
    %v260 = vld [vmem:[%s4] sm:$0xff]
    %v261 = vld [vmem:[%s4 + $0x8] sm:$0xff]
    %v262 = vmul.f32 %v251, %v260
    %v263 = vmul.f32 %v252, %v261
    %v264 = vstv %s259
    %v265 = vmul.f32 %v264, %v262
    %v266 = vmul.f32 %v264, %v263
    %v267 = vadd.f32 %v257, %v265
    %v268 = vadd.f32 %v258, %v266
    %v269 = vmax.f32 %v69, 0.0
    %v270 = vmax.f32 %v70, 0.0
    %v271 = vld [vmem:[%s5] sm:$0xff]
    %v272 = vld [vmem:[%s5 + $0x8] sm:$0xff]
    %v273 = vld [vmem:[%s5 + $0x10] sm:$0xff]
    %v274 = vld [vmem:[%s5 + $0x18] sm:$0xff]
    %v275 = vld [vmem:[%s5 + $0x20] sm:$0xff]
    %v276 = vld [vmem:[%s5 + $0x28] sm:$0xff]
    %v277 = vld [vmem:[%s5 + $0x30] sm:$0xff]
    %v278 = vld [vmem:[%s5 + $0x38] sm:$0xff]
    %v279 = vld [vmem:[%s5 + $0x40] sm:$0xff]
    %280 = vrot.lane.b32.xlu0 %v269, 17
    %v281 = vpop.permute.xlu0 %280
    %282 = vrot.lane.b32.xlu0 %v270, 17
    %v283 = vpop.permute.xlu0 %282
    %v284 = vsel %vm85, %v281, %v283
    %v285 = vsel %vm85, %v283, %v281
    %v286 = vsel %vm100, %v285, 0.0
    %v287 = vsel %vm101, %v284, 0.0
    %289 = vset.pattern.permute.xlu0 0
    %290 = vperm.xlu0 %289, %v271
    %v291 = vpop.permute.xlu0 %290
    %v293 = vmul.f32 %v286, %v291
    %v294 = vmul.f32 %v287, %v291
    %295 = vrot.lane.b32.xlu0 %v269, 16
    %v296 = vpop.permute.xlu0 %295
    %297 = vrot.lane.b32.xlu0 %v270, 16
    %v298 = vpop.permute.xlu0 %297
    %v299 = vsel %vm114, %v296, %v298
    %v300 = vsel %vm114, %v298, %v296
    %v301 = vsel %vm123, %v300, 0.0
    %v302 = vsel %vm124, %v299, 0.0
    %304 = vset.pattern.permute.xlu0 0
    %305 = vperm.xlu0 %304, %v272
    %v306 = vpop.permute.xlu0 %305
    %v308 = vmul.f32 %v301, %v306
    %v309 = vmul.f32 %v302, %v306
    %v310 = vadd.f32 %v293, %v308
    %v311 = vadd.f32 %v294, %v309
    %312 = vrot.lane.b32.xlu0 %v269, 15
    %v313 = vpop.permute.xlu0 %312
    %314 = vrot.lane.b32.xlu0 %v270, 15
    %v315 = vpop.permute.xlu0 %314
    %v316 = vsel %vm137, %v313, %v315
    %v317 = vsel %vm137, %v315, %v313
    %v318 = vsel %vm146, %v317, 0.0
    %v319 = vsel %vm147, %v316, 0.0
    %321 = vset.pattern.permute.xlu0 0
    %322 = vperm.xlu0 %321, %v273
    %v323 = vpop.permute.xlu0 %322
    %v325 = vmul.f32 %v318, %v323
    %v326 = vmul.f32 %v319, %v323
    %v327 = vadd.f32 %v310, %v325
    %v328 = vadd.f32 %v311, %v326
    %329 = vrot.lane.b32.xlu0 %v269, 1
    %v330 = vpop.permute.xlu0 %329
    %331 = vrot.lane.b32.xlu0 %v270, 1
    %v332 = vpop.permute.xlu0 %331
    %v333 = vsel %vm160, %v330, %v332
    %v334 = vsel %vm160, %v332, %v330
    %v335 = vsel %vm169, %v334, 0.0
    %v336 = vsel %vm170, %v333, 0.0
    %338 = vset.pattern.permute.xlu0 0
    %339 = vperm.xlu0 %338, %v274
    %v340 = vpop.permute.xlu0 %339
    %v342 = vmul.f32 %v335, %v340
    %v343 = vmul.f32 %v336, %v340
    %v344 = vadd.f32 %v327, %v342
    %v345 = vadd.f32 %v328, %v343
    %347 = vset.pattern.permute.xlu0 0
    %348 = vperm.xlu0 %347, %v275
    %v349 = vpop.permute.xlu0 %348
    %v351 = vmul.f32 %v269, %v349
    %v352 = vmul.f32 %v270, %v349
    %v353 = vadd.f32 %v344, %v351
    %v354 = vadd.f32 %v345, %v352
    %355 = vrot.lane.b32.xlu0 %v269, 127
    %v356 = vpop.permute.xlu0 %355
    %357 = vrot.lane.b32.xlu0 %v270, 127
    %v358 = vpop.permute.xlu0 %357
    %v359 = vsel %vm183, %v356, %v358
    %v360 = vsel %vm183, %v358, %v356
    %v361 = vsel %vm186, %v359, 0.0
    %v362 = vsel %vm187, %v360, 0.0
    %364 = vset.pattern.permute.xlu0 0
    %365 = vperm.xlu0 %364, %v276
    %v366 = vpop.permute.xlu0 %365
    %v368 = vmul.f32 %v361, %v366
    %v369 = vmul.f32 %v362, %v366
    %v370 = vadd.f32 %v353, %v368
    %v371 = vadd.f32 %v354, %v369
    %372 = vrot.lane.b32.xlu0 %v269, 113
    %v373 = vpop.permute.xlu0 %372
    %374 = vrot.lane.b32.xlu0 %v270, 113
    %v375 = vpop.permute.xlu0 %374
    %v376 = vsel %vm200, %v373, %v375
    %v377 = vsel %vm200, %v375, %v373
    %v378 = vsel %vm209, %v376, 0.0
    %v379 = vsel %vm210, %v377, 0.0
    %381 = vset.pattern.permute.xlu0 0
    %382 = vperm.xlu0 %381, %v277
    %v383 = vpop.permute.xlu0 %382
    %v385 = vmul.f32 %v378, %v383
    %v386 = vmul.f32 %v379, %v383
    %v387 = vadd.f32 %v370, %v385
    %v388 = vadd.f32 %v371, %v386
    %389 = vrot.lane.b32.xlu0 %v269, 112
    %v390 = vpop.permute.xlu0 %389
    %391 = vrot.lane.b32.xlu0 %v270, 112
    %v392 = vpop.permute.xlu0 %391
    %v393 = vsel %vm223, %v390, %v392
    %v394 = vsel %vm223, %v392, %v390
    %v395 = vsel %vm226, %v393, 0.0
    %v396 = vsel %vm227, %v394, 0.0
    %398 = vset.pattern.permute.xlu0 0
    %399 = vperm.xlu0 %398, %v278
    %v400 = vpop.permute.xlu0 %399
    %v402 = vmul.f32 %v395, %v400
    %v403 = vmul.f32 %v396, %v400
    %v404 = vadd.f32 %v387, %v402
    %v405 = vadd.f32 %v388, %v403
    %406 = vrot.lane.b32.xlu0 %v269, 111
    %v407 = vpop.permute.xlu0 %406
    %408 = vrot.lane.b32.xlu0 %v270, 111
    %v409 = vpop.permute.xlu0 %408
    %v410 = vsel %vm240, %v407, %v409
    %v411 = vsel %vm240, %v409, %v407
    %v412 = vsel %vm243, %v410, 0.0
    %v413 = vsel %vm244, %v411, 0.0
    %415 = vset.pattern.permute.xlu0 0
    %416 = vperm.xlu0 %415, %v279
    %v417 = vpop.permute.xlu0 %416
    %v419 = vmul.f32 %v412, %v417
    %v420 = vmul.f32 %v413, %v417
    %v421 = vadd.f32 %v404, %v419
    %v422 = vadd.f32 %v405, %v420
    %v423 = vld [vmem:[%s6] sm:$0xff]
    %v424 = vld [vmem:[%s6 + $0x8] sm:$0xff]
    %v425 = vld [vmem:[%s6 + $0x10] sm:$0xff]
    %v426 = vld [vmem:[%s6 + $0x18] sm:$0xff]
    %v427 = vld [vmem:[%s6 + $0x20] sm:$0xff]
    %v428 = vld [vmem:[%s6 + $0x28] sm:$0xff]
    %v429 = vld [vmem:[%s6 + $0x30] sm:$0xff]
    %v430 = vrot.slane %v421, 3
    %v431 = vrot.slane %v422, 3
    %433 = vset.pattern.permute.xlu0 0
    %434 = vperm.xlu0 %433, %v423
    %v435 = vpop.permute.xlu0 %434
    %v437 = vmul.f32 %v430, %v435
    %v438 = vmul.f32 %v431, %v435
    %v439 = vrot.slane %v421, 2
    %v440 = vrot.slane %v422, 2
    %442 = vset.pattern.permute.xlu0 0
    %443 = vperm.xlu0 %442, %v424
    %v444 = vpop.permute.xlu0 %443
    %v446 = vmul.f32 %v439, %v444
    %v447 = vmul.f32 %v440, %v444
    %v448 = vadd.f32 %v437, %v446
    %v449 = vadd.f32 %v438, %v447
    %v450 = vrot.slane %v421, 1
    %v451 = vrot.slane %v422, 1
    %453 = vset.pattern.permute.xlu0 0
    %454 = vperm.xlu0 %453, %v425
    %v455 = vpop.permute.xlu0 %454
    %v457 = vmul.f32 %v450, %v455
    %v458 = vmul.f32 %v451, %v455
    %v459 = vadd.f32 %v448, %v457
    %v460 = vadd.f32 %v449, %v458
    %462 = vset.pattern.permute.xlu0 0
    %463 = vperm.xlu0 %462, %v426
    %v464 = vpop.permute.xlu0 %463
    %v466 = vmul.f32 %v421, %v464
    %v467 = vmul.f32 %v422, %v464
    %v468 = vadd.f32 %v459, %v466
    %v469 = vadd.f32 %v460, %v467
    %v470 = vrot.slane %v421, 7
    %v471 = vrot.slane %v422, 7
    %473 = vset.pattern.permute.xlu0 0
    %474 = vperm.xlu0 %473, %v427
    %v475 = vpop.permute.xlu0 %474
    %v477 = vmul.f32 %v470, %v475
    %v478 = vmul.f32 %v471, %v475
    %v479 = vadd.f32 %v468, %v477
    %v480 = vadd.f32 %v469, %v478
    %v481 = vrot.slane %v421, 6
    %v482 = vrot.slane %v422, 6
    %484 = vset.pattern.permute.xlu0 0
    %485 = vperm.xlu0 %484, %v428
    %v486 = vpop.permute.xlu0 %485
    %v488 = vmul.f32 %v481, %v486
    %v489 = vmul.f32 %v482, %v486
    %v490 = vadd.f32 %v479, %v488
    %v491 = vadd.f32 %v480, %v489
    %v492 = vrot.slane %v421, 5
    %v493 = vrot.slane %v422, 5
    %495 = vset.pattern.permute.xlu0 0
    %496 = vperm.xlu0 %495, %v429
    %v497 = vpop.permute.xlu0 %496
    %v499 = vmul.f32 %v492, %v497
    %v500 = vmul.f32 %v493, %v497
    %v501 = vadd.f32 %v490, %v499
    %v502 = vadd.f32 %v491, %v500
    %v503 = vmul.f32 %v501, %v501
    %v504 = vmul.f32 %v502, %v502
    %v505 = vrot.slane %v501, 4
    %v506 = vrot.slane %v502, 4
    %v507 = vadd.f32 %v501, %v505
    %v508 = vadd.f32 %v502, %v506
    %v509 = vrot.slane %v503, 4
    %v510 = vrot.slane %v504, 4
    %v511 = vadd.f32 %v503, %v509
    %v512 = vadd.f32 %v504, %v510
    %v513 = vadd.f32 %v507, %v508
    %514 = vadd.xlane.f32.xlu0 %v513
    %v515 = vpop.xlane.xlu0 %514
    %v516 = vadd.f32 %v511, %v512
    %517 = vadd.xlane.f32.xlu0 %v516
    %v518 = vpop.xlane.xlu0 %517
    %v519 = vmul.f32 %v515, 0.001953125
    %v520 = vmul.f32 %v518, 0.001953125
    %v521 = vmul.f32 %v519, %v519
    %v522 = vsub.f32 %v520, %v521
    %v523 = vsub.f32 %v501, %v519
    %v524 = vsub.f32 %v502, %v519
    %v525 = vadd.f32 %v522, 1e-05
    %v526 = vrsqrt.pop %v525
    %v527 = vmul.f32 %v523, %v526
    %v528 = vmul.f32 %v524, %v526
    %v529 = vmax.f32 %v527, 0.0
    %v530 = vmax.f32 %v528, 0.0
    %v531 = vld [vmem:[%s7] sm:$0xff]
    %v532 = vld [vmem:[%s7 + $0x8] sm:$0xff]
    %v533 = vld [vmem:[%s7 + $0x10] sm:$0xff]
    %v534 = vld [vmem:[%s7 + $0x18] sm:$0xff]
    %v535 = vld [vmem:[%s7 + $0x20] sm:$0xff]
    %v536 = vld [vmem:[%s7 + $0x28] sm:$0xff]
    %v537 = vld [vmem:[%s7 + $0x30] sm:$0xff]
    %v538 = vld [vmem:[%s7 + $0x38] sm:$0xff]
    %v539 = vld [vmem:[%s7 + $0x40] sm:$0xff]
    %540 = vrot.lane.b32.xlu0 %v529, 17
    %v541 = vpop.permute.xlu0 %540
    %542 = vrot.lane.b32.xlu0 %v530, 17
    %v543 = vpop.permute.xlu0 %542
    %v544 = vsel %vm85, %v541, %v543
    %v545 = vsel %vm85, %v543, %v541
    %v546 = vsel %vm100, %v545, 0.0
    %v547 = vsel %vm101, %v544, 0.0
    %549 = vset.pattern.permute.xlu0 0
    %550 = vperm.xlu0 %549, %v531
    %v551 = vpop.permute.xlu0 %550
    %v553 = vmul.f32 %v546, %v551
    %v554 = vmul.f32 %v547, %v551
    %555 = vrot.lane.b32.xlu0 %v529, 16
    %v556 = vpop.permute.xlu0 %555
    %557 = vrot.lane.b32.xlu0 %v530, 16
    %v558 = vpop.permute.xlu0 %557
    %v559 = vsel %vm114, %v556, %v558
    %v560 = vsel %vm114, %v558, %v556
    %v561 = vsel %vm123, %v560, 0.0
    %v562 = vsel %vm124, %v559, 0.0
    %564 = vset.pattern.permute.xlu0 0
    %565 = vperm.xlu0 %564, %v532
    %v566 = vpop.permute.xlu0 %565
    %v568 = vmul.f32 %v561, %v566
    %v569 = vmul.f32 %v562, %v566
    %v570 = vadd.f32 %v553, %v568
    %v571 = vadd.f32 %v554, %v569
    %572 = vrot.lane.b32.xlu0 %v529, 15
    %v573 = vpop.permute.xlu0 %572
    %574 = vrot.lane.b32.xlu0 %v530, 15
    %v575 = vpop.permute.xlu0 %574
    %v576 = vsel %vm137, %v573, %v575
    %v577 = vsel %vm137, %v575, %v573
    %v578 = vsel %vm146, %v577, 0.0
    %v579 = vsel %vm147, %v576, 0.0
    %581 = vset.pattern.permute.xlu0 0
    %582 = vperm.xlu0 %581, %v533
    %v583 = vpop.permute.xlu0 %582
    %v585 = vmul.f32 %v578, %v583
    %v586 = vmul.f32 %v579, %v583
    %v587 = vadd.f32 %v570, %v585
    %v588 = vadd.f32 %v571, %v586
    %589 = vrot.lane.b32.xlu0 %v529, 1
    %v590 = vpop.permute.xlu0 %589
    %591 = vrot.lane.b32.xlu0 %v530, 1
    %v592 = vpop.permute.xlu0 %591
    %v593 = vsel %vm160, %v590, %v592
    %v594 = vsel %vm160, %v592, %v590
    %v595 = vsel %vm169, %v594, 0.0
    %v596 = vsel %vm170, %v593, 0.0
    %598 = vset.pattern.permute.xlu0 0
    %599 = vperm.xlu0 %598, %v534
    %v600 = vpop.permute.xlu0 %599
    %v602 = vmul.f32 %v595, %v600
    %v603 = vmul.f32 %v596, %v600
    %v604 = vadd.f32 %v587, %v602
    %v605 = vadd.f32 %v588, %v603
    %607 = vset.pattern.permute.xlu0 0
    %608 = vperm.xlu0 %607, %v535
    %v609 = vpop.permute.xlu0 %608
    %v611 = vmul.f32 %v529, %v609
    %v612 = vmul.f32 %v530, %v609
    %v613 = vadd.f32 %v604, %v611
    %v614 = vadd.f32 %v605, %v612
    %615 = vrot.lane.b32.xlu0 %v529, 127
    %v616 = vpop.permute.xlu0 %615
    %617 = vrot.lane.b32.xlu0 %v530, 127
    %v618 = vpop.permute.xlu0 %617
    %v619 = vsel %vm183, %v616, %v618
    %v620 = vsel %vm183, %v618, %v616
    %v621 = vsel %vm186, %v619, 0.0
    %v622 = vsel %vm187, %v620, 0.0
    %624 = vset.pattern.permute.xlu0 0
    %625 = vperm.xlu0 %624, %v536
    %v626 = vpop.permute.xlu0 %625
    %v628 = vmul.f32 %v621, %v626
    %v629 = vmul.f32 %v622, %v626
    %v630 = vadd.f32 %v613, %v628
    %v631 = vadd.f32 %v614, %v629
    %632 = vrot.lane.b32.xlu0 %v529, 113
    %v633 = vpop.permute.xlu0 %632
    %634 = vrot.lane.b32.xlu0 %v530, 113
    %v635 = vpop.permute.xlu0 %634
    %v636 = vsel %vm200, %v633, %v635
    %v637 = vsel %vm200, %v635, %v633
    %v638 = vsel %vm209, %v636, 0.0
    %v639 = vsel %vm210, %v637, 0.0
    %641 = vset.pattern.permute.xlu0 0
    %642 = vperm.xlu0 %641, %v537
    %v643 = vpop.permute.xlu0 %642
    %v645 = vmul.f32 %v638, %v643
    %v646 = vmul.f32 %v639, %v643
    %v647 = vadd.f32 %v630, %v645
    %v648 = vadd.f32 %v631, %v646
    %649 = vrot.lane.b32.xlu0 %v529, 112
    %v650 = vpop.permute.xlu0 %649
    %651 = vrot.lane.b32.xlu0 %v530, 112
    %v652 = vpop.permute.xlu0 %651
    %v653 = vsel %vm223, %v650, %v652
    %v654 = vsel %vm223, %v652, %v650
    %v655 = vsel %vm226, %v653, 0.0
    %v656 = vsel %vm227, %v654, 0.0
    %658 = vset.pattern.permute.xlu0 0
    %659 = vperm.xlu0 %658, %v538
    %v660 = vpop.permute.xlu0 %659
    %v662 = vmul.f32 %v655, %v660
    %v663 = vmul.f32 %v656, %v660
    %v664 = vadd.f32 %v647, %v662
    %v665 = vadd.f32 %v648, %v663
    %666 = vrot.lane.b32.xlu0 %v529, 111
    %v667 = vpop.permute.xlu0 %666
    %668 = vrot.lane.b32.xlu0 %v530, 111
    %v669 = vpop.permute.xlu0 %668
    %v670 = vsel %vm240, %v667, %v669
    %v671 = vsel %vm240, %v669, %v667
    %v672 = vsel %vm243, %v670, 0.0
    %v673 = vsel %vm244, %v671, 0.0
    %675 = vset.pattern.permute.xlu0 0
    %676 = vperm.xlu0 %675, %v539
    %v677 = vpop.permute.xlu0 %676
    %v679 = vmul.f32 %v672, %v677
    %v680 = vmul.f32 %v673, %v677
    %v681 = vadd.f32 %v664, %v679
    %v682 = vadd.f32 %v665, %v680
    %v683 = vld [vmem:[%s8] sm:$0xff]
    %v684 = vld [vmem:[%s8 + $0x8] sm:$0xff]
    %v685 = vld [vmem:[%s8 + $0x10] sm:$0xff]
    %v686 = vld [vmem:[%s8 + $0x18] sm:$0xff]
    %v687 = vld [vmem:[%s8 + $0x20] sm:$0xff]
    %v688 = vld [vmem:[%s8 + $0x28] sm:$0xff]
    %v689 = vld [vmem:[%s8 + $0x30] sm:$0xff]
    %v690 = vrot.slane %v681, 3
    %v691 = vrot.slane %v682, 3
    %693 = vset.pattern.permute.xlu0 0
    %694 = vperm.xlu0 %693, %v683
    %v695 = vpop.permute.xlu0 %694
    %v697 = vmul.f32 %v690, %v695
    %v698 = vmul.f32 %v691, %v695
    %v699 = vrot.slane %v681, 2
    %v700 = vrot.slane %v682, 2
    %702 = vset.pattern.permute.xlu0 0
    %703 = vperm.xlu0 %702, %v684
    %v704 = vpop.permute.xlu0 %703
    %v706 = vmul.f32 %v699, %v704
    %v707 = vmul.f32 %v700, %v704
    %v708 = vadd.f32 %v697, %v706
    %v709 = vadd.f32 %v698, %v707
    %v710 = vrot.slane %v681, 1
    %v711 = vrot.slane %v682, 1
    %713 = vset.pattern.permute.xlu0 0
    %714 = vperm.xlu0 %713, %v685
    %v715 = vpop.permute.xlu0 %714
    %v717 = vmul.f32 %v710, %v715
    %v718 = vmul.f32 %v711, %v715
    %v719 = vadd.f32 %v708, %v717
    %v720 = vadd.f32 %v709, %v718
    %722 = vset.pattern.permute.xlu0 0
    %723 = vperm.xlu0 %722, %v686
    %v724 = vpop.permute.xlu0 %723
    %v726 = vmul.f32 %v681, %v724
    %v727 = vmul.f32 %v682, %v724
    %v728 = vadd.f32 %v719, %v726
    %v729 = vadd.f32 %v720, %v727
    %v730 = vrot.slane %v681, 7
    %v731 = vrot.slane %v682, 7
    %733 = vset.pattern.permute.xlu0 0
    %734 = vperm.xlu0 %733, %v687
    %v735 = vpop.permute.xlu0 %734
    %v737 = vmul.f32 %v730, %v735
    %v738 = vmul.f32 %v731, %v735
    %v739 = vadd.f32 %v728, %v737
    %v740 = vadd.f32 %v729, %v738
    %v741 = vrot.slane %v681, 6
    %v742 = vrot.slane %v682, 6
    %744 = vset.pattern.permute.xlu0 0
    %745 = vperm.xlu0 %744, %v688
    %v746 = vpop.permute.xlu0 %745
    %v748 = vmul.f32 %v741, %v746
    %v749 = vmul.f32 %v742, %v746
    %v750 = vadd.f32 %v739, %v748
    %v751 = vadd.f32 %v740, %v749
    %v752 = vrot.slane %v681, 5
    %v753 = vrot.slane %v682, 5
    %755 = vset.pattern.permute.xlu0 0
    %756 = vperm.xlu0 %755, %v689
    %v757 = vpop.permute.xlu0 %756
    %v759 = vmul.f32 %v752, %v757
    %v760 = vmul.f32 %v753, %v757
    %v761 = vadd.f32 %v750, %v759
    %v762 = vadd.f32 %v751, %v760
    %v763 = vmul.f32 %v761, %v761
    %v764 = vmul.f32 %v762, %v762
    %v765 = vrot.slane %v761, 4
    %v766 = vrot.slane %v762, 4
    %v767 = vadd.f32 %v761, %v765
    %v768 = vadd.f32 %v762, %v766
    %v769 = vrot.slane %v763, 4
    %v770 = vrot.slane %v764, 4
    %v771 = vadd.f32 %v763, %v769
    %v772 = vadd.f32 %v764, %v770
    %v773 = vadd.f32 %v767, %v768
    %774 = vadd.xlane.f32.xlu0 %v773
    %v775 = vpop.xlane.xlu0 %774
    %v776 = vadd.f32 %v771, %v772
    %777 = vadd.xlane.f32.xlu0 %v776
    %v778 = vpop.xlane.xlu0 %777
    %v779 = vmul.f32 %v775, 0.001953125
    %v780 = vmul.f32 %v778, 0.001953125
    %v781 = vmul.f32 %v779, %v779
    %v782 = vsub.f32 %v780, %v781
    %v783 = vsub.f32 %v761, %v779
    %v784 = vsub.f32 %v762, %v779
    %v785 = vadd.f32 %v782, 1e-05
    %v786 = vrsqrt.pop %v785
    %v787 = vmul.f32 %v783, %v786
    %v788 = vmul.f32 %v784, %v786
    %s789 = sld [smem:[#allocation2 + $0x4]]
    %v790 = vstv %s789
    %v791 = vmul.f32 %v790, %v787
    %v792 = vmul.f32 %v790, %v788
    %v793 = vadd.f32 %v267, %v791
    %v794 = vadd.f32 %v268, %v792
    %v795 = vld [vmem:[%s9] sm:$0xff]
    %v796 = vld [vmem:[%s9 + $0x8] sm:$0xff]
    %v797 = vld [vmem:[%s9 + $0x10] sm:$0xff]
    %v798 = vld [vmem:[%s9 + $0x18] sm:$0xff]
    %v799 = vld [vmem:[%s9 + $0x20] sm:$0xff]
    %v800 = vld [vmem:[%s9 + $0x28] sm:$0xff]
    %v801 = vld [vmem:[%s9 + $0x30] sm:$0xff]
    %v802 = vld [vmem:[%s9 + $0x38] sm:$0xff]
    %v803 = vld [vmem:[%s9 + $0x40] sm:$0xff]
    %v804 = vld [vmem:[%s9 + $0x48] sm:$0xff]
    %v805 = vld [vmem:[%s9 + $0x50] sm:$0xff]
    %v806 = vld [vmem:[%s9 + $0x58] sm:$0xff]
    %v807 = vld [vmem:[%s9 + $0x60] sm:$0xff]
    %v808 = vld [vmem:[%s9 + $0x68] sm:$0xff]
    %v809 = vld [vmem:[%s9 + $0x70] sm:$0xff]
    %v810 = vld [vmem:[%s9 + $0x78] sm:$0xff]
    %v811 = vld [vmem:[%s9 + $0x80] sm:$0xff]
    %v812 = vld [vmem:[%s9 + $0x88] sm:$0xff]
    %v813 = vld [vmem:[%s9 + $0x90] sm:$0xff]
    %v814 = vld [vmem:[%s9 + $0x98] sm:$0xff]
    %v815 = vld [vmem:[%s9 + $0xa0] sm:$0xff]
    %v816 = vld [vmem:[%s9 + $0xa8] sm:$0xff]
    %v817 = vld [vmem:[%s9 + $0xb0] sm:$0xff]
    %v818 = vld [vmem:[%s9 + $0xb8] sm:$0xff]
    %v819 = vld [vmem:[%s9 + $0xc0] sm:$0xff]
    %vm820 = vcmp.ge.f32.partialorder %v71, 2.0
    %vm821 = vcmp.ge.f32.partialorder %v72, 2.0
    %vm822 = vcmp.le.f32.partialorder %v71, 17.0
    %vm823 = vcmp.le.f32.partialorder %v72, 17.0
    %vm824 = vmand %vm820, %vm822
    %vm825 = vmand %vm821, %vm823
    %vm826 = vcmp.ge.f32.partialorder %v73, 2.0
    %vm827 = vcmp.ge.f32.partialorder %v74, 2.0
    %vm828 = vcmp.le.f32.partialorder %v73, 17.0
    %vm829 = vcmp.le.f32.partialorder %v74, 17.0
    %vm830 = vmand %vm826, %vm828
    %vm831 = vmand %vm827, %vm829
    %vm832 = vmand %vm824, %vm830
    %vm833 = vmand %vm825, %vm831
    %834 = vrot.lane.b32.xlu0 %v269, 34
    %v835 = vpop.permute.xlu0 %834
    %836 = vrot.lane.b32.xlu0 %v270, 34
    %v837 = vpop.permute.xlu0 %836
    %vm838 = vcmp.lt.s32.totalorder %v84, 34
    %v839 = vsel %vm838, %v835, %v837
    %v840 = vsel %vm838, %v837, %v835
    %v841 = vsel %vm832, %v840, 0.0
    %v842 = vsel %vm833, %v839, 0.0
    %844 = vset.pattern.permute.xlu0 0
    %845 = vperm.xlu0 %844, %v795
    %v846 = vpop.permute.xlu0 %845
    %v848 = vmul.f32 %v841, %v846
    %v849 = vmul.f32 %v842, %v846
    %vm850 = vmand %vm824, %vm98
    %vm851 = vmand %vm825, %vm99
    %852 = vrot.lane.b32.xlu0 %v269, 33
    %v853 = vpop.permute.xlu0 %852
    %854 = vrot.lane.b32.xlu0 %v270, 33
    %v855 = vpop.permute.xlu0 %854
    %vm856 = vcmp.lt.s32.totalorder %v84, 33
    %v857 = vsel %vm856, %v853, %v855
    %v858 = vsel %vm856, %v855, %v853
    %v859 = vsel %vm850, %v858, 0.0
    %v860 = vsel %vm851, %v857, 0.0
    %862 = vset.pattern.permute.xlu0 0
    %863 = vperm.xlu0 %862, %v796
    %v864 = vpop.permute.xlu0 %863
    %v866 = vmul.f32 %v859, %v864
    %v867 = vmul.f32 %v860, %v864
    %v868 = vadd.f32 %v848, %v866
    %v869 = vadd.f32 %v849, %v867
    %vm870 = vmand %vm824, %vm121
    %vm871 = vmand %vm825, %vm122
    %872 = vrot.lane.b32.xlu0 %v269, 32
    %v873 = vpop.permute.xlu0 %872
    %874 = vrot.lane.b32.xlu0 %v270, 32
    %v875 = vpop.permute.xlu0 %874
    %vm876 = vcmp.lt.s32.totalorder %v84, 32
    %v877 = vsel %vm876, %v873, %v875
    %v878 = vsel %vm876, %v875, %v873
    %v879 = vsel %vm870, %v878, 0.0
    %v880 = vsel %vm871, %v877, 0.0
    %882 = vset.pattern.permute.xlu0 0
    %883 = vperm.xlu0 %882, %v797
    %v884 = vpop.permute.xlu0 %883
    %v886 = vmul.f32 %v879, %v884
    %v887 = vmul.f32 %v880, %v884
    %v888 = vadd.f32 %v868, %v886
    %v889 = vadd.f32 %v869, %v887
    %vm890 = vmand %vm824, %vm144
    %vm891 = vmand %vm825, %vm145
    %892 = vrot.lane.b32.xlu0 %v269, 31
    %v893 = vpop.permute.xlu0 %892
    %894 = vrot.lane.b32.xlu0 %v270, 31
    %v895 = vpop.permute.xlu0 %894
    %vm896 = vcmp.lt.s32.totalorder %v84, 31
    %v897 = vsel %vm896, %v893, %v895
    %v898 = vsel %vm896, %v895, %v893
    %v899 = vsel %vm890, %v898, 0.0
    %v900 = vsel %vm891, %v897, 0.0
    %902 = vset.pattern.permute.xlu0 0
    %903 = vperm.xlu0 %902, %v798
    %v904 = vpop.permute.xlu0 %903
    %v906 = vmul.f32 %v899, %v904
    %v907 = vmul.f32 %v900, %v904
    %v908 = vadd.f32 %v888, %v906
    %v909 = vadd.f32 %v889, %v907
    %vm910 = vcmp.ge.f32.partialorder %v73, -2.0
    %vm911 = vcmp.ge.f32.partialorder %v74, -2.0
    %vm912 = vcmp.le.f32.partialorder %v73, 13.0
    %vm913 = vcmp.le.f32.partialorder %v74, 13.0
    %vm914 = vmand %vm910, %vm912
    %vm915 = vmand %vm911, %vm913
    %vm916 = vmand %vm824, %vm914
    %vm917 = vmand %vm825, %vm915
    %918 = vrot.lane.b32.xlu0 %v269, 30
    %v919 = vpop.permute.xlu0 %918
    %920 = vrot.lane.b32.xlu0 %v270, 30
    %v921 = vpop.permute.xlu0 %920
    %vm922 = vcmp.lt.s32.totalorder %v84, 30
    %v923 = vsel %vm922, %v919, %v921
    %v924 = vsel %vm922, %v921, %v919
    %v925 = vsel %vm916, %v924, 0.0
    %v926 = vsel %vm917, %v923, 0.0
    %928 = vset.pattern.permute.xlu0 0
    %929 = vperm.xlu0 %928, %v799
    %v930 = vpop.permute.xlu0 %929
    %v932 = vmul.f32 %v925, %v930
    %v933 = vmul.f32 %v926, %v930
    %v934 = vadd.f32 %v908, %v932
    %v935 = vadd.f32 %v909, %v933
    %vm936 = vmand %vm92, %vm830
    %vm937 = vmand %vm93, %vm831
    %938 = vrot.lane.b32.xlu0 %v269, 18
    %v939 = vpop.permute.xlu0 %938
    %940 = vrot.lane.b32.xlu0 %v270, 18
    %v941 = vpop.permute.xlu0 %940
    %vm942 = vcmp.lt.s32.totalorder %v84, 18
    %v943 = vsel %vm942, %v939, %v941
    %v944 = vsel %vm942, %v941, %v939
    %v945 = vsel %vm936, %v944, 0.0
    %v946 = vsel %vm937, %v943, 0.0
    %948 = vset.pattern.permute.xlu0 0
    %949 = vperm.xlu0 %948, %v800
    %v950 = vpop.permute.xlu0 %949
    %v952 = vmul.f32 %v945, %v950
    %v953 = vmul.f32 %v946, %v950
    %v954 = vadd.f32 %v934, %v952
    %v955 = vadd.f32 %v935, %v953
    %957 = vset.pattern.permute.xlu0 0
    %958 = vperm.xlu0 %957, %v801
    %v959 = vpop.permute.xlu0 %958
    %v961 = vmul.f32 %v286, %v959
    %v962 = vmul.f32 %v287, %v959
    %v963 = vadd.f32 %v954, %v961
    %v964 = vadd.f32 %v955, %v962
    %966 = vset.pattern.permute.xlu0 0
    %967 = vperm.xlu0 %966, %v802
    %v968 = vpop.permute.xlu0 %967
    %v970 = vmul.f32 %v301, %v968
    %v971 = vmul.f32 %v302, %v968
    %v972 = vadd.f32 %v963, %v970
    %v973 = vadd.f32 %v964, %v971
    %975 = vset.pattern.permute.xlu0 0
    %976 = vperm.xlu0 %975, %v803
    %v977 = vpop.permute.xlu0 %976
    %v979 = vmul.f32 %v318, %v977
    %v980 = vmul.f32 %v319, %v977
    %v981 = vadd.f32 %v972, %v979
    %v982 = vadd.f32 %v973, %v980
    %vm983 = vmand %vm92, %vm914
    %vm984 = vmand %vm93, %vm915
    %985 = vrot.lane.b32.xlu0 %v269, 14
    %v986 = vpop.permute.xlu0 %985
    %987 = vrot.lane.b32.xlu0 %v270, 14
    %v988 = vpop.permute.xlu0 %987
    %vm989 = vcmp.lt.s32.totalorder %v84, 14
    %v990 = vsel %vm989, %v986, %v988
    %v991 = vsel %vm989, %v988, %v986
    %v992 = vsel %vm983, %v991, 0.0
    %v993 = vsel %vm984, %v990, 0.0
    %995 = vset.pattern.permute.xlu0 0
    %996 = vperm.xlu0 %995, %v804
    %v997 = vpop.permute.xlu0 %996
    %v999 = vmul.f32 %v992, %v997
    %v1000 = vmul.f32 %v993, %v997
    %v1001 = vadd.f32 %v981, %v999
    %v1002 = vadd.f32 %v982, %v1000
    %vm1003 = vmand %vm167, %vm830
    %vm1004 = vmand %vm168, %vm831
    %1005 = vrot.lane.b32.xlu0 %v269, 2
    %v1006 = vpop.permute.xlu0 %1005
    %1007 = vrot.lane.b32.xlu0 %v270, 2
    %v1008 = vpop.permute.xlu0 %1007
    %vm1009 = vcmp.lt.s32.totalorder %v84, 2
    %v1010 = vsel %vm1009, %v1006, %v1008
    %v1011 = vsel %vm1009, %v1008, %v1006
    %v1012 = vsel %vm1003, %v1011, 0.0
    %v1013 = vsel %vm1004, %v1010, 0.0
    %1015 = vset.pattern.permute.xlu0 0
    %1016 = vperm.xlu0 %1015, %v805
    %v1017 = vpop.permute.xlu0 %1016
    %v1019 = vmul.f32 %v1012, %v1017
    %v1020 = vmul.f32 %v1013, %v1017
    %v1021 = vadd.f32 %v1001, %v1019
    %v1022 = vadd.f32 %v1002, %v1020
    %1024 = vset.pattern.permute.xlu0 0
    %1025 = vperm.xlu0 %1024, %v806
    %v1026 = vpop.permute.xlu0 %1025
    %v1028 = vmul.f32 %v335, %v1026
    %v1029 = vmul.f32 %v336, %v1026
    %v1030 = vadd.f32 %v1021, %v1028
    %v1031 = vadd.f32 %v1022, %v1029
    %1033 = vset.pattern.permute.xlu0 0
    %1034 = vperm.xlu0 %1033, %v807
    %v1035 = vpop.permute.xlu0 %1034
    %v1037 = vmul.f32 %v269, %v1035
    %v1038 = vmul.f32 %v270, %v1035
    %v1039 = vadd.f32 %v1030, %v1037
    %v1040 = vadd.f32 %v1031, %v1038
    %1042 = vset.pattern.permute.xlu0 0
    %1043 = vperm.xlu0 %1042, %v808
    %v1044 = vpop.permute.xlu0 %1043
    %v1046 = vmul.f32 %v361, %v1044
    %v1047 = vmul.f32 %v362, %v1044
    %v1048 = vadd.f32 %v1039, %v1046
    %v1049 = vadd.f32 %v1040, %v1047
    %vm1050 = vmand %vm167, %vm914
    %vm1051 = vmand %vm168, %vm915
    %1052 = vrot.lane.b32.xlu0 %v269, 126
    %v1053 = vpop.permute.xlu0 %1052
    %1054 = vrot.lane.b32.xlu0 %v270, 126
    %v1055 = vpop.permute.xlu0 %1054
    %vm1056 = vcmp.lt.s32.totalorder %v84, 126
    %v1057 = vsel %vm1056, %v1053, %v1055
    %v1058 = vsel %vm1056, %v1055, %v1053
    %v1059 = vsel %vm1050, %v1057, 0.0
    %v1060 = vsel %vm1051, %v1058, 0.0
    %1062 = vset.pattern.permute.xlu0 0
    %1063 = vperm.xlu0 %1062, %v809
    %v1064 = vpop.permute.xlu0 %1063
    %v1066 = vmul.f32 %v1059, %v1064
    %v1067 = vmul.f32 %v1060, %v1064
    %v1068 = vadd.f32 %v1048, %v1066
    %v1069 = vadd.f32 %v1049, %v1067
    %vm1070 = vmand %vm207, %vm830
    %vm1071 = vmand %vm208, %vm831
    %1072 = vrot.lane.b32.xlu0 %v269, 114
    %v1073 = vpop.permute.xlu0 %1072
    %1074 = vrot.lane.b32.xlu0 %v270, 114
    %v1075 = vpop.permute.xlu0 %1074
    %vm1076 = vcmp.lt.s32.totalorder %v84, 114
    %v1077 = vsel %vm1076, %v1073, %v1075
    %v1078 = vsel %vm1076, %v1075, %v1073
    %v1079 = vsel %vm1070, %v1077, 0.0
    %v1080 = vsel %vm1071, %v1078, 0.0
    %1082 = vset.pattern.permute.xlu0 0
    %1083 = vperm.xlu0 %1082, %v810
    %v1084 = vpop.permute.xlu0 %1083
    %v1086 = vmul.f32 %v1079, %v1084
    %v1087 = vmul.f32 %v1080, %v1084
    %v1088 = vadd.f32 %v1068, %v1086
    %v1089 = vadd.f32 %v1069, %v1087
    %1091 = vset.pattern.permute.xlu0 0
    %1092 = vperm.xlu0 %1091, %v811
    %v1093 = vpop.permute.xlu0 %1092
    %v1095 = vmul.f32 %v378, %v1093
    %v1096 = vmul.f32 %v379, %v1093
    %v1097 = vadd.f32 %v1088, %v1095
    %v1098 = vadd.f32 %v1089, %v1096
    %1100 = vset.pattern.permute.xlu0 0
    %1101 = vperm.xlu0 %1100, %v812
    %v1102 = vpop.permute.xlu0 %1101
    %v1104 = vmul.f32 %v395, %v1102
    %v1105 = vmul.f32 %v396, %v1102
    %v1106 = vadd.f32 %v1097, %v1104
    %v1107 = vadd.f32 %v1098, %v1105
    %1109 = vset.pattern.permute.xlu0 0
    %1110 = vperm.xlu0 %1109, %v813
    %v1111 = vpop.permute.xlu0 %1110
    %v1113 = vmul.f32 %v412, %v1111
    %v1114 = vmul.f32 %v413, %v1111
    %v1115 = vadd.f32 %v1106, %v1113
    %v1116 = vadd.f32 %v1107, %v1114
    %vm1117 = vmand %vm207, %vm914
    %vm1118 = vmand %vm208, %vm915
    %1119 = vrot.lane.b32.xlu0 %v269, 110
    %v1120 = vpop.permute.xlu0 %1119
    %1121 = vrot.lane.b32.xlu0 %v270, 110
    %v1122 = vpop.permute.xlu0 %1121
    %vm1123 = vcmp.lt.s32.totalorder %v84, 110
    %v1124 = vsel %vm1123, %v1120, %v1122
    %v1125 = vsel %vm1123, %v1122, %v1120
    %v1126 = vsel %vm1117, %v1124, 0.0
    %v1127 = vsel %vm1118, %v1125, 0.0
    %1129 = vset.pattern.permute.xlu0 0
    %1130 = vperm.xlu0 %1129, %v814
    %v1131 = vpop.permute.xlu0 %1130
    %v1133 = vmul.f32 %v1126, %v1131
    %v1134 = vmul.f32 %v1127, %v1131
    %v1135 = vadd.f32 %v1115, %v1133
    %v1136 = vadd.f32 %v1116, %v1134
    %vm1137 = vcmp.ge.f32.partialorder %v71, -2.0
    %vm1138 = vcmp.ge.f32.partialorder %v72, -2.0
    %vm1139 = vcmp.le.f32.partialorder %v71, 13.0
    %vm1140 = vcmp.le.f32.partialorder %v72, 13.0
    %vm1141 = vmand %vm1137, %vm1139
    %vm1142 = vmand %vm1138, %vm1140
    %vm1143 = vmand %vm1141, %vm830
    %vm1144 = vmand %vm1142, %vm831
    %1145 = vrot.lane.b32.xlu0 %v269, 98
    %v1146 = vpop.permute.xlu0 %1145
    %1147 = vrot.lane.b32.xlu0 %v270, 98
    %v1148 = vpop.permute.xlu0 %1147
    %vm1149 = vcmp.lt.s32.totalorder %v84, 98
    %v1150 = vsel %vm1149, %v1146, %v1148
    %v1151 = vsel %vm1149, %v1148, %v1146
    %v1152 = vsel %vm1143, %v1150, 0.0
    %v1153 = vsel %vm1144, %v1151, 0.0
    %1155 = vset.pattern.permute.xlu0 0
    %1156 = vperm.xlu0 %1155, %v815
    %v1157 = vpop.permute.xlu0 %1156
    %v1159 = vmul.f32 %v1152, %v1157
    %v1160 = vmul.f32 %v1153, %v1157
    %v1161 = vadd.f32 %v1135, %v1159
    %v1162 = vadd.f32 %v1136, %v1160
    %vm1163 = vmand %vm1141, %vm98
    %vm1164 = vmand %vm1142, %vm99
    %1165 = vrot.lane.b32.xlu0 %v269, 97
    %v1166 = vpop.permute.xlu0 %1165
    %1167 = vrot.lane.b32.xlu0 %v270, 97
    %v1168 = vpop.permute.xlu0 %1167
    %vm1169 = vcmp.lt.s32.totalorder %v84, 97
    %v1170 = vsel %vm1169, %v1166, %v1168
    %v1171 = vsel %vm1169, %v1168, %v1166
    %v1172 = vsel %vm1163, %v1170, 0.0
    %v1173 = vsel %vm1164, %v1171, 0.0
    %1175 = vset.pattern.permute.xlu0 0
    %1176 = vperm.xlu0 %1175, %v816
    %v1177 = vpop.permute.xlu0 %1176
    %v1179 = vmul.f32 %v1172, %v1177
    %v1180 = vmul.f32 %v1173, %v1177
    %v1181 = vadd.f32 %v1161, %v1179
    %v1182 = vadd.f32 %v1162, %v1180
    %vm1183 = vmand %vm1141, %vm121
    %vm1184 = vmand %vm1142, %vm122
    %1185 = vrot.lane.b32.xlu0 %v269, 96
    %v1186 = vpop.permute.xlu0 %1185
    %1187 = vrot.lane.b32.xlu0 %v270, 96
    %v1188 = vpop.permute.xlu0 %1187
    %vm1189 = vcmp.lt.s32.totalorder %v84, 96
    %v1190 = vsel %vm1189, %v1186, %v1188
    %v1191 = vsel %vm1189, %v1188, %v1186
    %v1192 = vsel %vm1183, %v1190, 0.0
    %v1193 = vsel %vm1184, %v1191, 0.0
    %1195 = vset.pattern.permute.xlu0 0
    %1196 = vperm.xlu0 %1195, %v817
    %v1197 = vpop.permute.xlu0 %1196
    %v1199 = vmul.f32 %v1192, %v1197
    %v1200 = vmul.f32 %v1193, %v1197
    %v1201 = vadd.f32 %v1181, %v1199
    %v1202 = vadd.f32 %v1182, %v1200
    %vm1203 = vmand %vm1141, %vm144
    %vm1204 = vmand %vm1142, %vm145
    %1205 = vrot.lane.b32.xlu0 %v269, 95
    %v1206 = vpop.permute.xlu0 %1205
    %1207 = vrot.lane.b32.xlu0 %v270, 95
    %v1208 = vpop.permute.xlu0 %1207
    %vm1209 = vcmp.lt.s32.totalorder %v84, 95
    %v1210 = vsel %vm1209, %v1206, %v1208
    %v1211 = vsel %vm1209, %v1208, %v1206
    %v1212 = vsel %vm1203, %v1210, 0.0
    %v1213 = vsel %vm1204, %v1211, 0.0
    %1215 = vset.pattern.permute.xlu0 0
    %1216 = vperm.xlu0 %1215, %v818
    %v1217 = vpop.permute.xlu0 %1216
    %v1219 = vmul.f32 %v1212, %v1217
    %v1220 = vmul.f32 %v1213, %v1217
    %v1221 = vadd.f32 %v1201, %v1219
    %v1222 = vadd.f32 %v1202, %v1220
    %vm1223 = vmand %vm1141, %vm914
    %vm1224 = vmand %vm1142, %vm915
    %1225 = vrot.lane.b32.xlu0 %v269, 94
    %v1226 = vpop.permute.xlu0 %1225
    %1227 = vrot.lane.b32.xlu0 %v270, 94
    %v1228 = vpop.permute.xlu0 %1227
    %vm1229 = vcmp.lt.s32.totalorder %v84, 94
    %v1230 = vsel %vm1229, %v1226, %v1228
    %v1231 = vsel %vm1229, %v1228, %v1226
    %v1232 = vsel %vm1223, %v1230, 0.0
    %v1233 = vsel %vm1224, %v1231, 0.0
    %1235 = vset.pattern.permute.xlu0 0
    %1236 = vperm.xlu0 %1235, %v819
    %v1237 = vpop.permute.xlu0 %1236
    %v1239 = vmul.f32 %v1232, %v1237
    %v1240 = vmul.f32 %v1233, %v1237
    %v1241 = vadd.f32 %v1221, %v1239
    %v1242 = vadd.f32 %v1222, %v1240
    %v1243 = vld [vmem:[%s10] sm:$0xff]
    %v1244 = vld [vmem:[%s10 + $0x8] sm:$0xff]
    %v1245 = vld [vmem:[%s10 + $0x10] sm:$0xff]
    %v1246 = vld [vmem:[%s10 + $0x18] sm:$0xff]
    %v1247 = vld [vmem:[%s10 + $0x20] sm:$0xff]
    %v1248 = vld [vmem:[%s10 + $0x28] sm:$0xff]
    %v1249 = vld [vmem:[%s10 + $0x30] sm:$0xff]
    %v1250 = vrot.slane %v1241, 3
    %v1251 = vrot.slane %v1242, 3
    %1253 = vset.pattern.permute.xlu0 0
    %1254 = vperm.xlu0 %1253, %v1243
    %v1255 = vpop.permute.xlu0 %1254
    %v1257 = vmul.f32 %v1250, %v1255
    %v1258 = vmul.f32 %v1251, %v1255
    %v1259 = vrot.slane %v1241, 2
    %v1260 = vrot.slane %v1242, 2
    %1262 = vset.pattern.permute.xlu0 0
    %1263 = vperm.xlu0 %1262, %v1244
    %v1264 = vpop.permute.xlu0 %1263
    %v1266 = vmul.f32 %v1259, %v1264
    %v1267 = vmul.f32 %v1260, %v1264
    %v1268 = vadd.f32 %v1257, %v1266
    %v1269 = vadd.f32 %v1258, %v1267
    %v1270 = vrot.slane %v1241, 1
    %v1271 = vrot.slane %v1242, 1
    %1273 = vset.pattern.permute.xlu0 0
    %1274 = vperm.xlu0 %1273, %v1245
    %v1275 = vpop.permute.xlu0 %1274
    %v1277 = vmul.f32 %v1270, %v1275
    %v1278 = vmul.f32 %v1271, %v1275
    %v1279 = vadd.f32 %v1268, %v1277
    %v1280 = vadd.f32 %v1269, %v1278
    %1282 = vset.pattern.permute.xlu0 0
    %1283 = vperm.xlu0 %1282, %v1246
    %v1284 = vpop.permute.xlu0 %1283
    %v1286 = vmul.f32 %v1241, %v1284
    %v1287 = vmul.f32 %v1242, %v1284
    %v1288 = vadd.f32 %v1279, %v1286
    %v1289 = vadd.f32 %v1280, %v1287
    %v1290 = vrot.slane %v1241, 7
    %v1291 = vrot.slane %v1242, 7
    %1293 = vset.pattern.permute.xlu0 0
    %1294 = vperm.xlu0 %1293, %v1247
    %v1295 = vpop.permute.xlu0 %1294
    %v1297 = vmul.f32 %v1290, %v1295
    %v1298 = vmul.f32 %v1291, %v1295
    %v1299 = vadd.f32 %v1288, %v1297
    %v1300 = vadd.f32 %v1289, %v1298
    %v1301 = vrot.slane %v1241, 6
    %v1302 = vrot.slane %v1242, 6
    %1304 = vset.pattern.permute.xlu0 0
    %1305 = vperm.xlu0 %1304, %v1248
    %v1306 = vpop.permute.xlu0 %1305
    %v1308 = vmul.f32 %v1301, %v1306
    %v1309 = vmul.f32 %v1302, %v1306
    %v1310 = vadd.f32 %v1299, %v1308
    %v1311 = vadd.f32 %v1300, %v1309
    %v1312 = vrot.slane %v1241, 5
    %v1313 = vrot.slane %v1242, 5
    %1315 = vset.pattern.permute.xlu0 0
    %1316 = vperm.xlu0 %1315, %v1249
    %v1317 = vpop.permute.xlu0 %1316
    %v1319 = vmul.f32 %v1312, %v1317
    %v1320 = vmul.f32 %v1313, %v1317
    %v1321 = vadd.f32 %v1310, %v1319
    %v1322 = vadd.f32 %v1311, %v1320
    %v1323 = vmul.f32 %v1321, %v1321
    %v1324 = vmul.f32 %v1322, %v1322
    %v1325 = vrot.slane %v1321, 4
    %v1326 = vrot.slane %v1322, 4
    %v1327 = vadd.f32 %v1321, %v1325
    %v1328 = vadd.f32 %v1322, %v1326
    %v1329 = vrot.slane %v1323, 4
    %v1330 = vrot.slane %v1324, 4
    %v1331 = vadd.f32 %v1323, %v1329
    %v1332 = vadd.f32 %v1324, %v1330
    %v1333 = vadd.f32 %v1327, %v1328
    %1334 = vadd.xlane.f32.xlu0 %v1333
    %v1335 = vpop.xlane.xlu0 %1334
    %v1336 = vadd.f32 %v1331, %v1332
    %1337 = vadd.xlane.f32.xlu0 %v1336
    %v1338 = vpop.xlane.xlu0 %1337
    %v1339 = vmul.f32 %v1335, 0.001953125
    %v1340 = vmul.f32 %v1338, 0.001953125
    %v1341 = vmul.f32 %v1339, %v1339
    %v1342 = vsub.f32 %v1340, %v1341
    %v1343 = vsub.f32 %v1321, %v1339
    %v1344 = vsub.f32 %v1322, %v1339
    %v1345 = vadd.f32 %v1342, 1e-05
    %v1346 = vrsqrt.pop %v1345
    %v1347 = vmul.f32 %v1343, %v1346
    %v1348 = vmul.f32 %v1344, %v1346
    %v1349 = vmax.f32 %v1347, 0.0
    %v1350 = vmax.f32 %v1348, 0.0
    %v1351 = vld [vmem:[%s11] sm:$0xff]
    %v1352 = vld [vmem:[%s11 + $0x8] sm:$0xff]
    %v1353 = vld [vmem:[%s11 + $0x10] sm:$0xff]
    %v1354 = vld [vmem:[%s11 + $0x18] sm:$0xff]
    %v1355 = vld [vmem:[%s11 + $0x20] sm:$0xff]
    %v1356 = vld [vmem:[%s11 + $0x28] sm:$0xff]
    %v1357 = vld [vmem:[%s11 + $0x30] sm:$0xff]
    %v1358 = vld [vmem:[%s11 + $0x38] sm:$0xff]
    %v1359 = vld [vmem:[%s11 + $0x40] sm:$0xff]
    %v1360 = vld [vmem:[%s11 + $0x48] sm:$0xff]
    %v1361 = vld [vmem:[%s11 + $0x50] sm:$0xff]
    %v1362 = vld [vmem:[%s11 + $0x58] sm:$0xff]
    %v1363 = vld [vmem:[%s11 + $0x60] sm:$0xff]
    %v1364 = vld [vmem:[%s11 + $0x68] sm:$0xff]
    %v1365 = vld [vmem:[%s11 + $0x70] sm:$0xff]
    %v1366 = vld [vmem:[%s11 + $0x78] sm:$0xff]
    %v1367 = vld [vmem:[%s11 + $0x80] sm:$0xff]
    %v1368 = vld [vmem:[%s11 + $0x88] sm:$0xff]
    %v1369 = vld [vmem:[%s11 + $0x90] sm:$0xff]
    %v1370 = vld [vmem:[%s11 + $0x98] sm:$0xff]
    %v1371 = vld [vmem:[%s11 + $0xa0] sm:$0xff]
    %v1372 = vld [vmem:[%s11 + $0xa8] sm:$0xff]
    %v1373 = vld [vmem:[%s11 + $0xb0] sm:$0xff]
    %v1374 = vld [vmem:[%s11 + $0xb8] sm:$0xff]
    %v1375 = vld [vmem:[%s11 + $0xc0] sm:$0xff]
    %1376 = vrot.lane.b32.xlu0 %v1349, 34
    %v1377 = vpop.permute.xlu0 %1376
    %1378 = vrot.lane.b32.xlu0 %v1350, 34
    %v1379 = vpop.permute.xlu0 %1378
    %v1380 = vsel %vm838, %v1377, %v1379
    %v1381 = vsel %vm838, %v1379, %v1377
    %v1382 = vsel %vm832, %v1381, 0.0
    %v1383 = vsel %vm833, %v1380, 0.0
    %1385 = vset.pattern.permute.xlu0 0
    %1386 = vperm.xlu0 %1385, %v1351
    %v1387 = vpop.permute.xlu0 %1386
    %v1389 = vmul.f32 %v1382, %v1387
    %v1390 = vmul.f32 %v1383, %v1387
    %1391 = vrot.lane.b32.xlu0 %v1349, 33
    %v1392 = vpop.permute.xlu0 %1391
    %1393 = vrot.lane.b32.xlu0 %v1350, 33
    %v1394 = vpop.permute.xlu0 %1393
    %v1395 = vsel %vm856, %v1392, %v1394
    %v1396 = vsel %vm856, %v1394, %v1392
    %v1397 = vsel %vm850, %v1396, 0.0
    %v1398 = vsel %vm851, %v1395, 0.0
    %1400 = vset.pattern.permute.xlu0 0
    %1401 = vperm.xlu0 %1400, %v1352
    %v1402 = vpop.permute.xlu0 %1401
    %v1404 = vmul.f32 %v1397, %v1402
    %v1405 = vmul.f32 %v1398, %v1402
    %v1406 = vadd.f32 %v1389, %v1404
    %v1407 = vadd.f32 %v1390, %v1405
    %1408 = vrot.lane.b32.xlu0 %v1349, 32
    %v1409 = vpop.permute.xlu0 %1408
    %1410 = vrot.lane.b32.xlu0 %v1350, 32
    %v1411 = vpop.permute.xlu0 %1410
    %v1412 = vsel %vm876, %v1409, %v1411
    %v1413 = vsel %vm876, %v1411, %v1409
    %v1414 = vsel %vm870, %v1413, 0.0
    %v1415 = vsel %vm871, %v1412, 0.0
    %1417 = vset.pattern.permute.xlu0 0
    %1418 = vperm.xlu0 %1417, %v1353
    %v1419 = vpop.permute.xlu0 %1418
    %v1421 = vmul.f32 %v1414, %v1419
    %v1422 = vmul.f32 %v1415, %v1419
    %v1423 = vadd.f32 %v1406, %v1421
    %v1424 = vadd.f32 %v1407, %v1422
    %1425 = vrot.lane.b32.xlu0 %v1349, 31
    %v1426 = vpop.permute.xlu0 %1425
    %1427 = vrot.lane.b32.xlu0 %v1350, 31
    %v1428 = vpop.permute.xlu0 %1427
    %v1429 = vsel %vm896, %v1426, %v1428
    %v1430 = vsel %vm896, %v1428, %v1426
    %v1431 = vsel %vm890, %v1430, 0.0
    %v1432 = vsel %vm891, %v1429, 0.0
    %1434 = vset.pattern.permute.xlu0 0
    %1435 = vperm.xlu0 %1434, %v1354
    %v1436 = vpop.permute.xlu0 %1435
    %v1438 = vmul.f32 %v1431, %v1436
    %v1439 = vmul.f32 %v1432, %v1436
    %v1440 = vadd.f32 %v1423, %v1438
    %v1441 = vadd.f32 %v1424, %v1439
    %1442 = vrot.lane.b32.xlu0 %v1349, 30
    %v1443 = vpop.permute.xlu0 %1442
    %1444 = vrot.lane.b32.xlu0 %v1350, 30
    %v1445 = vpop.permute.xlu0 %1444
    %v1446 = vsel %vm922, %v1443, %v1445
    %v1447 = vsel %vm922, %v1445, %v1443
    %v1448 = vsel %vm916, %v1447, 0.0
    %v1449 = vsel %vm917, %v1446, 0.0
    %1451 = vset.pattern.permute.xlu0 0
    %1452 = vperm.xlu0 %1451, %v1355
    %v1453 = vpop.permute.xlu0 %1452
    %v1455 = vmul.f32 %v1448, %v1453
    %v1456 = vmul.f32 %v1449, %v1453
    %v1457 = vadd.f32 %v1440, %v1455
    %v1458 = vadd.f32 %v1441, %v1456
    %1459 = vrot.lane.b32.xlu0 %v1349, 18
    %v1460 = vpop.permute.xlu0 %1459
    %1461 = vrot.lane.b32.xlu0 %v1350, 18
    %v1462 = vpop.permute.xlu0 %1461
    %v1463 = vsel %vm942, %v1460, %v1462
    %v1464 = vsel %vm942, %v1462, %v1460
    %v1465 = vsel %vm936, %v1464, 0.0
    %v1466 = vsel %vm937, %v1463, 0.0
    %1468 = vset.pattern.permute.xlu0 0
    %1469 = vperm.xlu0 %1468, %v1356
    %v1470 = vpop.permute.xlu0 %1469
    %v1472 = vmul.f32 %v1465, %v1470
    %v1473 = vmul.f32 %v1466, %v1470
    %v1474 = vadd.f32 %v1457, %v1472
    %v1475 = vadd.f32 %v1458, %v1473
    %1476 = vrot.lane.b32.xlu0 %v1349, 17
    %v1477 = vpop.permute.xlu0 %1476
    %1478 = vrot.lane.b32.xlu0 %v1350, 17
    %v1479 = vpop.permute.xlu0 %1478
    %v1480 = vsel %vm85, %v1477, %v1479
    %v1481 = vsel %vm85, %v1479, %v1477
    %v1482 = vsel %vm100, %v1481, 0.0
    %v1483 = vsel %vm101, %v1480, 0.0
    %1485 = vset.pattern.permute.xlu0 0
    %1486 = vperm.xlu0 %1485, %v1357
    %v1487 = vpop.permute.xlu0 %1486
    %v1489 = vmul.f32 %v1482, %v1487
    %v1490 = vmul.f32 %v1483, %v1487
    %v1491 = vadd.f32 %v1474, %v1489
    %v1492 = vadd.f32 %v1475, %v1490
    %1493 = vrot.lane.b32.xlu0 %v1349, 16
    %v1494 = vpop.permute.xlu0 %1493
    %1495 = vrot.lane.b32.xlu0 %v1350, 16
    %v1496 = vpop.permute.xlu0 %1495
    %v1497 = vsel %vm114, %v1494, %v1496
    %v1498 = vsel %vm114, %v1496, %v1494
    %v1499 = vsel %vm123, %v1498, 0.0
    %v1500 = vsel %vm124, %v1497, 0.0
    %1502 = vset.pattern.permute.xlu0 0
    %1503 = vperm.xlu0 %1502, %v1358
    %v1504 = vpop.permute.xlu0 %1503
    %v1506 = vmul.f32 %v1499, %v1504
    %v1507 = vmul.f32 %v1500, %v1504
    %v1508 = vadd.f32 %v1491, %v1506
    %v1509 = vadd.f32 %v1492, %v1507
    %1510 = vrot.lane.b32.xlu0 %v1349, 15
    %v1511 = vpop.permute.xlu0 %1510
    %1512 = vrot.lane.b32.xlu0 %v1350, 15
    %v1513 = vpop.permute.xlu0 %1512
    %v1514 = vsel %vm137, %v1511, %v1513
    %v1515 = vsel %vm137, %v1513, %v1511
    %v1516 = vsel %vm146, %v1515, 0.0
    %v1517 = vsel %vm147, %v1514, 0.0
    %1519 = vset.pattern.permute.xlu0 0
    %1520 = vperm.xlu0 %1519, %v1359
    %v1521 = vpop.permute.xlu0 %1520
    %v1523 = vmul.f32 %v1516, %v1521
    %v1524 = vmul.f32 %v1517, %v1521
    %v1525 = vadd.f32 %v1508, %v1523
    %v1526 = vadd.f32 %v1509, %v1524
    %1527 = vrot.lane.b32.xlu0 %v1349, 14
    %v1528 = vpop.permute.xlu0 %1527
    %1529 = vrot.lane.b32.xlu0 %v1350, 14
    %v1530 = vpop.permute.xlu0 %1529
    %v1531 = vsel %vm989, %v1528, %v1530
    %v1532 = vsel %vm989, %v1530, %v1528
    %v1533 = vsel %vm983, %v1532, 0.0
    %v1534 = vsel %vm984, %v1531, 0.0
    %1536 = vset.pattern.permute.xlu0 0
    %1537 = vperm.xlu0 %1536, %v1360
    %v1538 = vpop.permute.xlu0 %1537
    %v1540 = vmul.f32 %v1533, %v1538
    %v1541 = vmul.f32 %v1534, %v1538
    %v1542 = vadd.f32 %v1525, %v1540
    %v1543 = vadd.f32 %v1526, %v1541
    %1544 = vrot.lane.b32.xlu0 %v1349, 2
    %v1545 = vpop.permute.xlu0 %1544
    %1546 = vrot.lane.b32.xlu0 %v1350, 2
    %v1547 = vpop.permute.xlu0 %1546
    %v1548 = vsel %vm1009, %v1545, %v1547
    %v1549 = vsel %vm1009, %v1547, %v1545
    %v1550 = vsel %vm1003, %v1549, 0.0
    %v1551 = vsel %vm1004, %v1548, 0.0
    %1553 = vset.pattern.permute.xlu0 0
    %1554 = vperm.xlu0 %1553, %v1361
    %v1555 = vpop.permute.xlu0 %1554
    %v1557 = vmul.f32 %v1550, %v1555
    %v1558 = vmul.f32 %v1551, %v1555
    %v1559 = vadd.f32 %v1542, %v1557
    %v1560 = vadd.f32 %v1543, %v1558
    %1561 = vrot.lane.b32.xlu0 %v1349, 1
    %v1562 = vpop.permute.xlu0 %1561
    %1563 = vrot.lane.b32.xlu0 %v1350, 1
    %v1564 = vpop.permute.xlu0 %1563
    %v1565 = vsel %vm160, %v1562, %v1564
    %v1566 = vsel %vm160, %v1564, %v1562
    %v1567 = vsel %vm169, %v1566, 0.0
    %v1568 = vsel %vm170, %v1565, 0.0
    %1570 = vset.pattern.permute.xlu0 0
    %1571 = vperm.xlu0 %1570, %v1362
    %v1572 = vpop.permute.xlu0 %1571
    %v1574 = vmul.f32 %v1567, %v1572
    %v1575 = vmul.f32 %v1568, %v1572
    %v1576 = vadd.f32 %v1559, %v1574
    %v1577 = vadd.f32 %v1560, %v1575
    %1579 = vset.pattern.permute.xlu0 0
    %1580 = vperm.xlu0 %1579, %v1363
    %v1581 = vpop.permute.xlu0 %1580
    %v1583 = vmul.f32 %v1349, %v1581
    %v1584 = vmul.f32 %v1350, %v1581
    %v1585 = vadd.f32 %v1576, %v1583
    %v1586 = vadd.f32 %v1577, %v1584
    %1587 = vrot.lane.b32.xlu0 %v1349, 127
    %v1588 = vpop.permute.xlu0 %1587
    %1589 = vrot.lane.b32.xlu0 %v1350, 127
    %v1590 = vpop.permute.xlu0 %1589
    %v1591 = vsel %vm183, %v1588, %v1590
    %v1592 = vsel %vm183, %v1590, %v1588
    %v1593 = vsel %vm186, %v1591, 0.0
    %v1594 = vsel %vm187, %v1592, 0.0
    %1596 = vset.pattern.permute.xlu0 0
    %1597 = vperm.xlu0 %1596, %v1364
    %v1598 = vpop.permute.xlu0 %1597
    %v1600 = vmul.f32 %v1593, %v1598
    %v1601 = vmul.f32 %v1594, %v1598
    %v1602 = vadd.f32 %v1585, %v1600
    %v1603 = vadd.f32 %v1586, %v1601
    %1604 = vrot.lane.b32.xlu0 %v1349, 126
    %v1605 = vpop.permute.xlu0 %1604
    %1606 = vrot.lane.b32.xlu0 %v1350, 126
    %v1607 = vpop.permute.xlu0 %1606
    %v1608 = vsel %vm1056, %v1605, %v1607
    %v1609 = vsel %vm1056, %v1607, %v1605
    %v1610 = vsel %vm1050, %v1608, 0.0
    %v1611 = vsel %vm1051, %v1609, 0.0
    %1613 = vset.pattern.permute.xlu0 0
    %1614 = vperm.xlu0 %1613, %v1365
    %v1615 = vpop.permute.xlu0 %1614
    %v1617 = vmul.f32 %v1610, %v1615
    %v1618 = vmul.f32 %v1611, %v1615
    %v1619 = vadd.f32 %v1602, %v1617
    %v1620 = vadd.f32 %v1603, %v1618
    %1621 = vrot.lane.b32.xlu0 %v1349, 114
    %v1622 = vpop.permute.xlu0 %1621
    %1623 = vrot.lane.b32.xlu0 %v1350, 114
    %v1624 = vpop.permute.xlu0 %1623
    %v1625 = vsel %vm1076, %v1622, %v1624
    %v1626 = vsel %vm1076, %v1624, %v1622
    %v1627 = vsel %vm1070, %v1625, 0.0
    %v1628 = vsel %vm1071, %v1626, 0.0
    %1630 = vset.pattern.permute.xlu0 0
    %1631 = vperm.xlu0 %1630, %v1366
    %v1632 = vpop.permute.xlu0 %1631
    %v1634 = vmul.f32 %v1627, %v1632
    %v1635 = vmul.f32 %v1628, %v1632
    %v1636 = vadd.f32 %v1619, %v1634
    %v1637 = vadd.f32 %v1620, %v1635
    %1638 = vrot.lane.b32.xlu0 %v1349, 113
    %v1639 = vpop.permute.xlu0 %1638
    %1640 = vrot.lane.b32.xlu0 %v1350, 113
    %v1641 = vpop.permute.xlu0 %1640
    %v1642 = vsel %vm200, %v1639, %v1641
    %v1643 = vsel %vm200, %v1641, %v1639
    %v1644 = vsel %vm209, %v1642, 0.0
    %v1645 = vsel %vm210, %v1643, 0.0
    %1647 = vset.pattern.permute.xlu0 0
    %1648 = vperm.xlu0 %1647, %v1367
    %v1649 = vpop.permute.xlu0 %1648
    %v1651 = vmul.f32 %v1644, %v1649
    %v1652 = vmul.f32 %v1645, %v1649
    %v1653 = vadd.f32 %v1636, %v1651
    %v1654 = vadd.f32 %v1637, %v1652
    %1655 = vrot.lane.b32.xlu0 %v1349, 112
    %v1656 = vpop.permute.xlu0 %1655
    %1657 = vrot.lane.b32.xlu0 %v1350, 112
    %v1658 = vpop.permute.xlu0 %1657
    %v1659 = vsel %vm223, %v1656, %v1658
    %v1660 = vsel %vm223, %v1658, %v1656
    %v1661 = vsel %vm226, %v1659, 0.0
    %v1662 = vsel %vm227, %v1660, 0.0
    %1664 = vset.pattern.permute.xlu0 0
    %1665 = vperm.xlu0 %1664, %v1368
    %v1666 = vpop.permute.xlu0 %1665
    %v1668 = vmul.f32 %v1661, %v1666
    %v1669 = vmul.f32 %v1662, %v1666
    %v1670 = vadd.f32 %v1653, %v1668
    %v1671 = vadd.f32 %v1654, %v1669
    %1672 = vrot.lane.b32.xlu0 %v1349, 111
    %v1673 = vpop.permute.xlu0 %1672
    %1674 = vrot.lane.b32.xlu0 %v1350, 111
    %v1675 = vpop.permute.xlu0 %1674
    %v1676 = vsel %vm240, %v1673, %v1675
    %v1677 = vsel %vm240, %v1675, %v1673
    %v1678 = vsel %vm243, %v1676, 0.0
    %v1679 = vsel %vm244, %v1677, 0.0
    %1681 = vset.pattern.permute.xlu0 0
    %1682 = vperm.xlu0 %1681, %v1369
    %v1683 = vpop.permute.xlu0 %1682
    %v1685 = vmul.f32 %v1678, %v1683
    %v1686 = vmul.f32 %v1679, %v1683
    %v1687 = vadd.f32 %v1670, %v1685
    %v1688 = vadd.f32 %v1671, %v1686
    %1689 = vrot.lane.b32.xlu0 %v1349, 110
    %v1690 = vpop.permute.xlu0 %1689
    %1691 = vrot.lane.b32.xlu0 %v1350, 110
    %v1692 = vpop.permute.xlu0 %1691
    %v1693 = vsel %vm1123, %v1690, %v1692
    %v1694 = vsel %vm1123, %v1692, %v1690
    %v1695 = vsel %vm1117, %v1693, 0.0
    %v1696 = vsel %vm1118, %v1694, 0.0
    %1698 = vset.pattern.permute.xlu0 0
    %1699 = vperm.xlu0 %1698, %v1370
    %v1700 = vpop.permute.xlu0 %1699
    %v1702 = vmul.f32 %v1695, %v1700
    %v1703 = vmul.f32 %v1696, %v1700
    %v1704 = vadd.f32 %v1687, %v1702
    %v1705 = vadd.f32 %v1688, %v1703
    %1706 = vrot.lane.b32.xlu0 %v1349, 98
    %v1707 = vpop.permute.xlu0 %1706
    %1708 = vrot.lane.b32.xlu0 %v1350, 98
    %v1709 = vpop.permute.xlu0 %1708
    %v1710 = vsel %vm1149, %v1707, %v1709
    %v1711 = vsel %vm1149, %v1709, %v1707
    %v1712 = vsel %vm1143, %v1710, 0.0
    %v1713 = vsel %vm1144, %v1711, 0.0
    %1715 = vset.pattern.permute.xlu0 0
    %1716 = vperm.xlu0 %1715, %v1371
    %v1717 = vpop.permute.xlu0 %1716
    %v1719 = vmul.f32 %v1712, %v1717
    %v1720 = vmul.f32 %v1713, %v1717
    %v1721 = vadd.f32 %v1704, %v1719
    %v1722 = vadd.f32 %v1705, %v1720
    %1723 = vrot.lane.b32.xlu0 %v1349, 97
    %v1724 = vpop.permute.xlu0 %1723
    %1725 = vrot.lane.b32.xlu0 %v1350, 97
    %v1726 = vpop.permute.xlu0 %1725
    %v1727 = vsel %vm1169, %v1724, %v1726
    %v1728 = vsel %vm1169, %v1726, %v1724
    %v1729 = vsel %vm1163, %v1727, 0.0
    %v1730 = vsel %vm1164, %v1728, 0.0
    %1732 = vset.pattern.permute.xlu0 0
    %1733 = vperm.xlu0 %1732, %v1372
    %v1734 = vpop.permute.xlu0 %1733
    %v1736 = vmul.f32 %v1729, %v1734
    %v1737 = vmul.f32 %v1730, %v1734
    %v1738 = vadd.f32 %v1721, %v1736
    %v1739 = vadd.f32 %v1722, %v1737
    %1740 = vrot.lane.b32.xlu0 %v1349, 96
    %v1741 = vpop.permute.xlu0 %1740
    %1742 = vrot.lane.b32.xlu0 %v1350, 96
    %v1743 = vpop.permute.xlu0 %1742
    %v1744 = vsel %vm1189, %v1741, %v1743
    %v1745 = vsel %vm1189, %v1743, %v1741
    %v1746 = vsel %vm1183, %v1744, 0.0
    %v1747 = vsel %vm1184, %v1745, 0.0
    %1749 = vset.pattern.permute.xlu0 0
    %1750 = vperm.xlu0 %1749, %v1373
    %v1751 = vpop.permute.xlu0 %1750
    %v1753 = vmul.f32 %v1746, %v1751
    %v1754 = vmul.f32 %v1747, %v1751
    %v1755 = vadd.f32 %v1738, %v1753
    %v1756 = vadd.f32 %v1739, %v1754
    %1757 = vrot.lane.b32.xlu0 %v1349, 95
    %v1758 = vpop.permute.xlu0 %1757
    %1759 = vrot.lane.b32.xlu0 %v1350, 95
    %v1760 = vpop.permute.xlu0 %1759
    %v1761 = vsel %vm1209, %v1758, %v1760
    %v1762 = vsel %vm1209, %v1760, %v1758
    %v1763 = vsel %vm1203, %v1761, 0.0
    %v1764 = vsel %vm1204, %v1762, 0.0
    %1766 = vset.pattern.permute.xlu0 0
    %1767 = vperm.xlu0 %1766, %v1374
    %v1768 = vpop.permute.xlu0 %1767
    %v1770 = vmul.f32 %v1763, %v1768
    %v1771 = vmul.f32 %v1764, %v1768
    %v1772 = vadd.f32 %v1755, %v1770
    %v1773 = vadd.f32 %v1756, %v1771
    %1774 = vrot.lane.b32.xlu0 %v1349, 94
    %v1775 = vpop.permute.xlu0 %1774
    %1776 = vrot.lane.b32.xlu0 %v1350, 94
    %v1777 = vpop.permute.xlu0 %1776
    %v1778 = vsel %vm1229, %v1775, %v1777
    %v1779 = vsel %vm1229, %v1777, %v1775
    %v1780 = vsel %vm1223, %v1778, 0.0
    %v1781 = vsel %vm1224, %v1779, 0.0
    %1783 = vset.pattern.permute.xlu0 0
    %1784 = vperm.xlu0 %1783, %v1375
    %v1785 = vpop.permute.xlu0 %1784
    %v1787 = vmul.f32 %v1780, %v1785
    %v1788 = vmul.f32 %v1781, %v1785
    %v1789 = vadd.f32 %v1772, %v1787
    %v1790 = vadd.f32 %v1773, %v1788
    %v1791 = vld [vmem:[%s12] sm:$0xff]
    %v1792 = vld [vmem:[%s12 + $0x8] sm:$0xff]
    %v1793 = vld [vmem:[%s12 + $0x10] sm:$0xff]
    %v1794 = vld [vmem:[%s12 + $0x18] sm:$0xff]
    %v1795 = vld [vmem:[%s12 + $0x20] sm:$0xff]
    %v1796 = vld [vmem:[%s12 + $0x28] sm:$0xff]
    %v1797 = vld [vmem:[%s12 + $0x30] sm:$0xff]
    %v1798 = vrot.slane %v1789, 3
    %v1799 = vrot.slane %v1790, 3
    %1801 = vset.pattern.permute.xlu0 0
    %1802 = vperm.xlu0 %1801, %v1791
    %v1803 = vpop.permute.xlu0 %1802
    %v1805 = vmul.f32 %v1798, %v1803
    %v1806 = vmul.f32 %v1799, %v1803
    %v1807 = vrot.slane %v1789, 2
    %v1808 = vrot.slane %v1790, 2
    %1810 = vset.pattern.permute.xlu0 0
    %1811 = vperm.xlu0 %1810, %v1792
    %v1812 = vpop.permute.xlu0 %1811
    %v1814 = vmul.f32 %v1807, %v1812
    %v1815 = vmul.f32 %v1808, %v1812
    %v1816 = vadd.f32 %v1805, %v1814
    %v1817 = vadd.f32 %v1806, %v1815
    %v1818 = vrot.slane %v1789, 1
    %v1819 = vrot.slane %v1790, 1
    %1821 = vset.pattern.permute.xlu0 0
    %1822 = vperm.xlu0 %1821, %v1793
    %v1823 = vpop.permute.xlu0 %1822
    %v1825 = vmul.f32 %v1818, %v1823
    %v1826 = vmul.f32 %v1819, %v1823
    %v1827 = vadd.f32 %v1816, %v1825
    %v1828 = vadd.f32 %v1817, %v1826
    %1830 = vset.pattern.permute.xlu0 0
    %1831 = vperm.xlu0 %1830, %v1794
    %v1832 = vpop.permute.xlu0 %1831
    %v1834 = vmul.f32 %v1789, %v1832
    %v1835 = vmul.f32 %v1790, %v1832
    %v1836 = vadd.f32 %v1827, %v1834
    %v1837 = vadd.f32 %v1828, %v1835
    %v1838 = vrot.slane %v1789, 7
    %v1839 = vrot.slane %v1790, 7
    %1841 = vset.pattern.permute.xlu0 0
    %1842 = vperm.xlu0 %1841, %v1795
    %v1843 = vpop.permute.xlu0 %1842
    %v1845 = vmul.f32 %v1838, %v1843
    %v1846 = vmul.f32 %v1839, %v1843
    %v1847 = vadd.f32 %v1836, %v1845
    %v1848 = vadd.f32 %v1837, %v1846
    %v1849 = vrot.slane %v1789, 6
    %v1850 = vrot.slane %v1790, 6
    %1852 = vset.pattern.permute.xlu0 0
    %1853 = vperm.xlu0 %1852, %v1796
    %v1854 = vpop.permute.xlu0 %1853
    %v1856 = vmul.f32 %v1849, %v1854
    %v1857 = vmul.f32 %v1850, %v1854
    %v1858 = vadd.f32 %v1847, %v1856
    %v1859 = vadd.f32 %v1848, %v1857
    %v1860 = vrot.slane %v1789, 5
    %v1861 = vrot.slane %v1790, 5
    %1863 = vset.pattern.permute.xlu0 0
    %1864 = vperm.xlu0 %1863, %v1797
    %v1865 = vpop.permute.xlu0 %1864
    %v1867 = vmul.f32 %v1860, %v1865
    %v1868 = vmul.f32 %v1861, %v1865
    %v1869 = vadd.f32 %v1858, %v1867
    %v1870 = vadd.f32 %v1859, %v1868
    %v1871 = vmul.f32 %v1869, %v1869
    %v1872 = vmul.f32 %v1870, %v1870
    %v1873 = vrot.slane %v1869, 4
    %v1874 = vrot.slane %v1870, 4
    %v1875 = vadd.f32 %v1869, %v1873
    %v1876 = vadd.f32 %v1870, %v1874
    %v1877 = vrot.slane %v1871, 4
    %v1878 = vrot.slane %v1872, 4
    %v1879 = vadd.f32 %v1871, %v1877
    %v1880 = vadd.f32 %v1872, %v1878
    %v1881 = vadd.f32 %v1875, %v1876
    %1882 = vadd.xlane.f32.xlu0 %v1881
    %v1883 = vpop.xlane.xlu0 %1882
    %v1884 = vadd.f32 %v1879, %v1880
    %1885 = vadd.xlane.f32.xlu0 %v1884
    %v1886 = vpop.xlane.xlu0 %1885
    %v1887 = vmul.f32 %v1883, 0.001953125
    %v1888 = vmul.f32 %v1886, 0.001953125
    %v1889 = vmul.f32 %v1887, %v1887
    %v1890 = vsub.f32 %v1888, %v1889
    %v1891 = vsub.f32 %v1869, %v1887
    %v1892 = vsub.f32 %v1870, %v1887
    %v1893 = vadd.f32 %v1890, 1e-05
    %v1894 = vrsqrt.pop %v1893
    %v1895 = vmul.f32 %v1891, %v1894
    %v1896 = vmul.f32 %v1892, %v1894
    %s1897 = sld [smem:[#allocation2 + $0x5]]
    %v1898 = vstv %s1897
    %v1899 = vmul.f32 %v1898, %v1895
    %v1900 = vmul.f32 %v1898, %v1896
    %v1901 = vadd.f32 %v793, %v1899
    %v1902 = vadd.f32 %v794, %v1900
    %s1903 = sld [smem:[#allocation2 + $0x6]]
    %v1904 = vld [vmem:[%s13] sm:$0xff]
    %v1905 = vld [vmem:[%s13 + $0x8] sm:$0xff]
    %v1906 = vld [vmem:[%s13 + $0x10] sm:$0xff]
    %v1907 = vld [vmem:[%s13 + $0x18] sm:$0xff]
    %v1908 = vld [vmem:[%s13 + $0x20] sm:$0xff]
    %v1909 = vld [vmem:[%s13 + $0x28] sm:$0xff]
    %v1910 = vld [vmem:[%s13 + $0x30] sm:$0xff]
    %v1911 = vld [vmem:[%s13 + $0x38] sm:$0xff]
    %v1912 = vld [vmem:[%s13 + $0x40] sm:$0xff]
    %1914 = vset.pattern.permute.xlu0 0
    %1915 = vperm.xlu0 %1914, %v1904
    %v1916 = vpop.permute.xlu0 %1915
    %v1918 = vmul.f32 %v841, %v1916
    %v1919 = vmul.f32 %v842, %v1916
    %1921 = vset.pattern.permute.xlu0 0
    %1922 = vperm.xlu0 %1921, %v1905
    %v1923 = vpop.permute.xlu0 %1922
    %v1925 = vmul.f32 %v879, %v1923
    %v1926 = vmul.f32 %v880, %v1923
    %v1927 = vadd.f32 %v1918, %v1925
    %v1928 = vadd.f32 %v1919, %v1926
    %1930 = vset.pattern.permute.xlu0 0
    %1931 = vperm.xlu0 %1930, %v1906
    %v1932 = vpop.permute.xlu0 %1931
    %v1934 = vmul.f32 %v925, %v1932
    %v1935 = vmul.f32 %v926, %v1932
    %v1936 = vadd.f32 %v1927, %v1934
    %v1937 = vadd.f32 %v1928, %v1935
    %1939 = vset.pattern.permute.xlu0 0
    %1940 = vperm.xlu0 %1939, %v1907
    %v1941 = vpop.permute.xlu0 %1940
    %v1943 = vmul.f32 %v1012, %v1941
    %v1944 = vmul.f32 %v1013, %v1941
    %v1945 = vadd.f32 %v1936, %v1943
    %v1946 = vadd.f32 %v1937, %v1944
    %1948 = vset.pattern.permute.xlu0 0
    %1949 = vperm.xlu0 %1948, %v1908
    %v1950 = vpop.permute.xlu0 %1949
    %v1952 = vmul.f32 %v269, %v1950
    %v1953 = vmul.f32 %v270, %v1950
    %v1954 = vadd.f32 %v1945, %v1952
    %v1955 = vadd.f32 %v1946, %v1953
    %1957 = vset.pattern.permute.xlu0 0
    %1958 = vperm.xlu0 %1957, %v1909
    %v1959 = vpop.permute.xlu0 %1958
    %v1961 = vmul.f32 %v1059, %v1959
    %v1962 = vmul.f32 %v1060, %v1959
    %v1963 = vadd.f32 %v1954, %v1961
    %v1964 = vadd.f32 %v1955, %v1962
    %1966 = vset.pattern.permute.xlu0 0
    %1967 = vperm.xlu0 %1966, %v1910
    %v1968 = vpop.permute.xlu0 %1967
    %v1970 = vmul.f32 %v1152, %v1968
    %v1971 = vmul.f32 %v1153, %v1968
    %v1972 = vadd.f32 %v1963, %v1970
    %v1973 = vadd.f32 %v1964, %v1971
    %1975 = vset.pattern.permute.xlu0 0
    %1976 = vperm.xlu0 %1975, %v1911
    %v1977 = vpop.permute.xlu0 %1976
    %v1979 = vmul.f32 %v1192, %v1977
    %v1980 = vmul.f32 %v1193, %v1977
    %v1981 = vadd.f32 %v1972, %v1979
    %v1982 = vadd.f32 %v1973, %v1980
    %1984 = vset.pattern.permute.xlu0 0
    %1985 = vperm.xlu0 %1984, %v1912
    %v1986 = vpop.permute.xlu0 %1985
    %v1988 = vmul.f32 %v1232, %v1986
    %v1989 = vmul.f32 %v1233, %v1986
    %v1990 = vadd.f32 %v1981, %v1988
    %v1991 = vadd.f32 %v1982, %v1989
    %v1992 = vld [vmem:[%s14] sm:$0xff]
    %v1993 = vld [vmem:[%s14 + $0x8] sm:$0xff]
    %v1994 = vld [vmem:[%s14 + $0x10] sm:$0xff]
    %v1995 = vld [vmem:[%s14 + $0x18] sm:$0xff]
    %v1996 = vld [vmem:[%s14 + $0x20] sm:$0xff]
    %v1997 = vld [vmem:[%s14 + $0x28] sm:$0xff]
    %v1998 = vld [vmem:[%s14 + $0x30] sm:$0xff]
    %v1999 = vrot.slane %v1990, 3
    %v2000 = vrot.slane %v1991, 3
    %2002 = vset.pattern.permute.xlu0 0
    %2003 = vperm.xlu0 %2002, %v1992
    %v2004 = vpop.permute.xlu0 %2003
    %v2006 = vmul.f32 %v1999, %v2004
    %v2007 = vmul.f32 %v2000, %v2004
    %v2008 = vrot.slane %v1990, 2
    %v2009 = vrot.slane %v1991, 2
    %2011 = vset.pattern.permute.xlu0 0
    %2012 = vperm.xlu0 %2011, %v1993
    %v2013 = vpop.permute.xlu0 %2012
    %v2015 = vmul.f32 %v2008, %v2013
    %v2016 = vmul.f32 %v2009, %v2013
    %v2017 = vadd.f32 %v2006, %v2015
    %v2018 = vadd.f32 %v2007, %v2016
    %v2019 = vrot.slane %v1990, 1
    %v2020 = vrot.slane %v1991, 1
    %2022 = vset.pattern.permute.xlu0 0
    %2023 = vperm.xlu0 %2022, %v1994
    %v2024 = vpop.permute.xlu0 %2023
    %v2026 = vmul.f32 %v2019, %v2024
    %v2027 = vmul.f32 %v2020, %v2024
    %v2028 = vadd.f32 %v2017, %v2026
    %v2029 = vadd.f32 %v2018, %v2027
    %2031 = vset.pattern.permute.xlu0 0
    %2032 = vperm.xlu0 %2031, %v1995
    %v2033 = vpop.permute.xlu0 %2032
    %v2035 = vmul.f32 %v1990, %v2033
    %v2036 = vmul.f32 %v1991, %v2033
    %v2037 = vadd.f32 %v2028, %v2035
    %v2038 = vadd.f32 %v2029, %v2036
    %v2039 = vrot.slane %v1990, 7
    %v2040 = vrot.slane %v1991, 7
    %2042 = vset.pattern.permute.xlu0 0
    %2043 = vperm.xlu0 %2042, %v1996
    %v2044 = vpop.permute.xlu0 %2043
    %v2046 = vmul.f32 %v2039, %v2044
    %v2047 = vmul.f32 %v2040, %v2044
    %v2048 = vadd.f32 %v2037, %v2046
    %v2049 = vadd.f32 %v2038, %v2047
    %v2050 = vrot.slane %v1990, 6
    %v2051 = vrot.slane %v1991, 6
    %2053 = vset.pattern.permute.xlu0 0
    %2054 = vperm.xlu0 %2053, %v1997
    %v2055 = vpop.permute.xlu0 %2054
    %v2057 = vmul.f32 %v2050, %v2055
    %v2058 = vmul.f32 %v2051, %v2055
    %v2059 = vadd.f32 %v2048, %v2057
    %v2060 = vadd.f32 %v2049, %v2058
    %v2061 = vrot.slane %v1990, 5
    %v2062 = vrot.slane %v1991, 5
    %2064 = vset.pattern.permute.xlu0 0
    %2065 = vperm.xlu0 %2064, %v1998
    %v2066 = vpop.permute.xlu0 %2065
    %v2068 = vmul.f32 %v2061, %v2066
    %v2069 = vmul.f32 %v2062, %v2066
    %v2070 = vadd.f32 %v2059, %v2068
    %v2071 = vadd.f32 %v2060, %v2069
    %v2072 = vmul.f32 %v2070, %v2070
    %v2073 = vmul.f32 %v2071, %v2071
    %v2074 = vrot.slane %v2070, 4
    %v2075 = vrot.slane %v2071, 4
    %v2076 = vadd.f32 %v2070, %v2074
    %v2077 = vadd.f32 %v2071, %v2075
    %v2078 = vrot.slane %v2072, 4
    %v2079 = vrot.slane %v2073, 4
    %v2080 = vadd.f32 %v2072, %v2078
    %v2081 = vadd.f32 %v2073, %v2079
    %v2082 = vadd.f32 %v2076, %v2077
    %2083 = vadd.xlane.f32.xlu0 %v2082
    %v2084 = vpop.xlane.xlu0 %2083
    %v2085 = vadd.f32 %v2080, %v2081
    %2086 = vadd.xlane.f32.xlu0 %v2085
    %v2087 = vpop.xlane.xlu0 %2086
    %v2088 = vmul.f32 %v2084, 0.001953125
    %v2089 = vmul.f32 %v2087, 0.001953125
    %v2090 = vmul.f32 %v2088, %v2088
    %v2091 = vsub.f32 %v2089, %v2090
    %v2092 = vsub.f32 %v2070, %v2088
    %v2093 = vsub.f32 %v2071, %v2088
    %v2094 = vadd.f32 %v2091, 1e-05
    %v2095 = vrsqrt.pop %v2094
    %v2096 = vmul.f32 %v2092, %v2095
    %v2097 = vmul.f32 %v2093, %v2095
    %v2098 = vstv %s1903
    %v2099 = vmul.f32 %v2098, %v2096
    %v2100 = vmul.f32 %v2098, %v2097
    %v2101 = vadd.f32 %v1901, %v2099
    %v2102 = vadd.f32 %v1902, %v2100
    %s2103 = sld [smem:[#allocation2 + $0x7]]
    %v2104 = vld [vmem:[%s15] sm:$0xff]
    %v2105 = vld [vmem:[%s15 + $0x8] sm:$0xff]
    %v2106 = vld [vmem:[%s15 + $0x10] sm:$0xff]
    %v2107 = vld [vmem:[%s15 + $0x18] sm:$0xff]
    %v2108 = vld [vmem:[%s15 + $0x20] sm:$0xff]
    %v2109 = vld [vmem:[%s15 + $0x28] sm:$0xff]
    %v2110 = vld [vmem:[%s15 + $0x30] sm:$0xff]
    %v2111 = vld [vmem:[%s15 + $0x38] sm:$0xff]
    %v2112 = vld [vmem:[%s15 + $0x40] sm:$0xff]
    %v2113 = vld [vmem:[%s15 + $0x48] sm:$0xff]
    %v2114 = vld [vmem:[%s15 + $0x50] sm:$0xff]
    %v2115 = vld [vmem:[%s15 + $0x58] sm:$0xff]
    %v2116 = vld [vmem:[%s15 + $0x60] sm:$0xff]
    %v2117 = vld [vmem:[%s15 + $0x68] sm:$0xff]
    %v2118 = vld [vmem:[%s15 + $0x70] sm:$0xff]
    %v2119 = vld [vmem:[%s15 + $0x78] sm:$0xff]
    %v2120 = vld [vmem:[%s15 + $0x80] sm:$0xff]
    %v2121 = vld [vmem:[%s15 + $0x88] sm:$0xff]
    %v2122 = vld [vmem:[%s15 + $0x90] sm:$0xff]
    %v2123 = vld [vmem:[%s15 + $0x98] sm:$0xff]
    %v2124 = vld [vmem:[%s15 + $0xa0] sm:$0xff]
    %v2125 = vld [vmem:[%s15 + $0xa8] sm:$0xff]
    %v2126 = vld [vmem:[%s15 + $0xb0] sm:$0xff]
    %v2127 = vld [vmem:[%s15 + $0xb8] sm:$0xff]
    %v2128 = vld [vmem:[%s15 + $0xc0] sm:$0xff]
    %vm2129 = vcmp.ge.f32.partialorder %v71, 4.0
    %vm2130 = vcmp.ge.f32.partialorder %v72, 4.0
    %vm2131 = vcmp.le.f32.partialorder %v71, 19.0
    %vm2132 = vcmp.le.f32.partialorder %v72, 19.0
    %vm2133 = vmand %vm2129, %vm2131
    %vm2134 = vmand %vm2130, %vm2132
    %vm2135 = vcmp.ge.f32.partialorder %v73, 4.0
    %vm2136 = vcmp.ge.f32.partialorder %v74, 4.0
    %vm2137 = vcmp.le.f32.partialorder %v73, 19.0
    %vm2138 = vcmp.le.f32.partialorder %v74, 19.0
    %vm2139 = vmand %vm2135, %vm2137
    %vm2140 = vmand %vm2136, %vm2138
    %vm2141 = vmand %vm2133, %vm2139
    %vm2142 = vmand %vm2134, %vm2140
    %2143 = vrot.lane.b32.xlu0 %v269, 68
    %v2144 = vpop.permute.xlu0 %2143
    %2145 = vrot.lane.b32.xlu0 %v270, 68
    %v2146 = vpop.permute.xlu0 %2145
    %vm2147 = vcmp.lt.s32.totalorder %v84, 68
    %v2148 = vsel %vm2147, %v2144, %v2146
    %v2149 = vsel %vm2147, %v2146, %v2144
    %v2150 = vsel %vm2141, %v2149, 0.0
    %v2151 = vsel %vm2142, %v2148, 0.0
    %2153 = vset.pattern.permute.xlu0 0
    %2154 = vperm.xlu0 %2153, %v2104
    %v2155 = vpop.permute.xlu0 %2154
    %v2157 = vmul.f32 %v2150, %v2155
    %v2158 = vmul.f32 %v2151, %v2155
    %vm2159 = vmand %vm2133, %vm830
    %vm2160 = vmand %vm2134, %vm831
    %2161 = vrot.lane.b32.xlu0 %v269, 66
    %v2162 = vpop.permute.xlu0 %2161
    %2163 = vrot.lane.b32.xlu0 %v270, 66
    %v2164 = vpop.permute.xlu0 %2163
    %vm2165 = vcmp.lt.s32.totalorder %v84, 66
    %v2166 = vsel %vm2165, %v2162, %v2164
    %v2167 = vsel %vm2165, %v2164, %v2162
    %v2168 = vsel %vm2159, %v2167, 0.0
    %v2169 = vsel %vm2160, %v2166, 0.0
    %2171 = vset.pattern.permute.xlu0 0
    %2172 = vperm.xlu0 %2171, %v2105
    %v2173 = vpop.permute.xlu0 %2172
    %v2175 = vmul.f32 %v2168, %v2173
    %v2176 = vmul.f32 %v2169, %v2173
    %v2177 = vadd.f32 %v2157, %v2175
    %v2178 = vadd.f32 %v2158, %v2176
    %vm2179 = vmand %vm2133, %vm121
    %vm2180 = vmand %vm2134, %vm122
    %2181 = vrot.lane.b32.xlu0 %v269, 64
    %v2182 = vpop.permute.xlu0 %2181
    %2183 = vrot.lane.b32.xlu0 %v270, 64
    %v2184 = vpop.permute.xlu0 %2183
    %vm2185 = vcmp.lt.s32.totalorder %v84, 64
    %v2186 = vsel %vm2185, %v2182, %v2184
    %v2187 = vsel %vm2185, %v2184, %v2182
    %v2188 = vsel %vm2179, %v2187, 0.0
    %v2189 = vsel %vm2180, %v2186, 0.0
    %2191 = vset.pattern.permute.xlu0 0
    %2192 = vperm.xlu0 %2191, %v2106
    %v2193 = vpop.permute.xlu0 %2192
    %v2195 = vmul.f32 %v2188, %v2193
    %v2196 = vmul.f32 %v2189, %v2193
    %v2197 = vadd.f32 %v2177, %v2195
    %v2198 = vadd.f32 %v2178, %v2196
    %vm2199 = vmand %vm2133, %vm914
    %vm2200 = vmand %vm2134, %vm915
    %2201 = vrot.lane.b32.xlu0 %v269, 62
    %v2202 = vpop.permute.xlu0 %2201
    %2203 = vrot.lane.b32.xlu0 %v270, 62
    %v2204 = vpop.permute.xlu0 %2203
    %vm2205 = vcmp.lt.s32.totalorder %v84, 62
    %v2206 = vsel %vm2205, %v2202, %v2204
    %v2207 = vsel %vm2205, %v2204, %v2202
    %v2208 = vsel %vm2199, %v2207, 0.0
    %v2209 = vsel %vm2200, %v2206, 0.0
    %2211 = vset.pattern.permute.xlu0 0
    %2212 = vperm.xlu0 %2211, %v2107
    %v2213 = vpop.permute.xlu0 %2212
    %v2215 = vmul.f32 %v2208, %v2213
    %v2216 = vmul.f32 %v2209, %v2213
    %v2217 = vadd.f32 %v2197, %v2215
    %v2218 = vadd.f32 %v2198, %v2216
    %vm2219 = vcmp.ge.f32.partialorder %v73, -4.0
    %vm2220 = vcmp.ge.f32.partialorder %v74, -4.0
    %vm2221 = vcmp.le.f32.partialorder %v73, 11.0
    %vm2222 = vcmp.le.f32.partialorder %v74, 11.0
    %vm2223 = vmand %vm2219, %vm2221
    %vm2224 = vmand %vm2220, %vm2222
    %vm2225 = vmand %vm2133, %vm2223
    %vm2226 = vmand %vm2134, %vm2224
    %2227 = vrot.lane.b32.xlu0 %v269, 60
    %v2228 = vpop.permute.xlu0 %2227
    %2229 = vrot.lane.b32.xlu0 %v270, 60
    %v2230 = vpop.permute.xlu0 %2229
    %vm2231 = vcmp.lt.s32.totalorder %v84, 60
    %v2232 = vsel %vm2231, %v2228, %v2230
    %v2233 = vsel %vm2231, %v2230, %v2228
    %v2234 = vsel %vm2225, %v2233, 0.0
    %v2235 = vsel %vm2226, %v2232, 0.0
    %2237 = vset.pattern.permute.xlu0 0
    %2238 = vperm.xlu0 %2237, %v2108
    %v2239 = vpop.permute.xlu0 %2238
    %v2241 = vmul.f32 %v2234, %v2239
    %v2242 = vmul.f32 %v2235, %v2239
    %v2243 = vadd.f32 %v2217, %v2241
    %v2244 = vadd.f32 %v2218, %v2242
    %vm2245 = vmand %vm824, %vm2139
    %vm2246 = vmand %vm825, %vm2140
    %2247 = vrot.lane.b32.xlu0 %v269, 36
    %v2248 = vpop.permute.xlu0 %2247
    %2249 = vrot.lane.b32.xlu0 %v270, 36
    %v2250 = vpop.permute.xlu0 %2249
    %vm2251 = vcmp.lt.s32.totalorder %v84, 36
    %v2252 = vsel %vm2251, %v2248, %v2250
    %v2253 = vsel %vm2251, %v2250, %v2248
    %v2254 = vsel %vm2245, %v2253, 0.0
    %v2255 = vsel %vm2246, %v2252, 0.0
    %2257 = vset.pattern.permute.xlu0 0
    %2258 = vperm.xlu0 %2257, %v2109
    %v2259 = vpop.permute.xlu0 %2258
    %v2261 = vmul.f32 %v2254, %v2259
    %v2262 = vmul.f32 %v2255, %v2259
    %v2263 = vadd.f32 %v2243, %v2261
    %v2264 = vadd.f32 %v2244, %v2262
    %2266 = vset.pattern.permute.xlu0 0
    %2267 = vperm.xlu0 %2266, %v2110
    %v2268 = vpop.permute.xlu0 %2267
    %v2270 = vmul.f32 %v841, %v2268
    %v2271 = vmul.f32 %v842, %v2268
    %v2272 = vadd.f32 %v2263, %v2270
    %v2273 = vadd.f32 %v2264, %v2271
    %2275 = vset.pattern.permute.xlu0 0
    %2276 = vperm.xlu0 %2275, %v2111
    %v2277 = vpop.permute.xlu0 %2276
    %v2279 = vmul.f32 %v879, %v2277
    %v2280 = vmul.f32 %v880, %v2277
    %v2281 = vadd.f32 %v2272, %v2279
    %v2282 = vadd.f32 %v2273, %v2280
    %2284 = vset.pattern.permute.xlu0 0
    %2285 = vperm.xlu0 %2284, %v2112
    %v2286 = vpop.permute.xlu0 %2285
    %v2288 = vmul.f32 %v925, %v2286
    %v2289 = vmul.f32 %v926, %v2286
    %v2290 = vadd.f32 %v2281, %v2288
    %v2291 = vadd.f32 %v2282, %v2289
    %vm2292 = vmand %vm824, %vm2223
    %vm2293 = vmand %vm825, %vm2224
    %2294 = vrot.lane.b32.xlu0 %v269, 28
    %v2295 = vpop.permute.xlu0 %2294
    %2296 = vrot.lane.b32.xlu0 %v270, 28
    %v2297 = vpop.permute.xlu0 %2296
    %vm2298 = vcmp.lt.s32.totalorder %v84, 28
    %v2299 = vsel %vm2298, %v2295, %v2297
    %v2300 = vsel %vm2298, %v2297, %v2295
    %v2301 = vsel %vm2292, %v2300, 0.0
    %v2302 = vsel %vm2293, %v2299, 0.0
    %2304 = vset.pattern.permute.xlu0 0
    %2305 = vperm.xlu0 %2304, %v2113
    %v2306 = vpop.permute.xlu0 %2305
    %v2308 = vmul.f32 %v2301, %v2306
    %v2309 = vmul.f32 %v2302, %v2306
    %v2310 = vadd.f32 %v2290, %v2308
    %v2311 = vadd.f32 %v2291, %v2309
    %vm2312 = vmand %vm167, %vm2139
    %vm2313 = vmand %vm168, %vm2140
    %2314 = vrot.lane.b32.xlu0 %v269, 4
    %v2315 = vpop.permute.xlu0 %2314
    %2316 = vrot.lane.b32.xlu0 %v270, 4
    %v2317 = vpop.permute.xlu0 %2316
    %vm2318 = vcmp.lt.s32.totalorder %v84, 4
    %v2319 = vsel %vm2318, %v2315, %v2317
    %v2320 = vsel %vm2318, %v2317, %v2315
    %v2321 = vsel %vm2312, %v2320, 0.0
    %v2322 = vsel %vm2313, %v2319, 0.0
    %2324 = vset.pattern.permute.xlu0 0
    %2325 = vperm.xlu0 %2324, %v2114
    %v2326 = vpop.permute.xlu0 %2325
    %v2328 = vmul.f32 %v2321, %v2326
    %v2329 = vmul.f32 %v2322, %v2326
    %v2330 = vadd.f32 %v2310, %v2328
    %v2331 = vadd.f32 %v2311, %v2329
    %2333 = vset.pattern.permute.xlu0 0
    %2334 = vperm.xlu0 %2333, %v2115
    %v2335 = vpop.permute.xlu0 %2334
    %v2337 = vmul.f32 %v1012, %v2335
    %v2338 = vmul.f32 %v1013, %v2335
    %v2339 = vadd.f32 %v2330, %v2337
    %v2340 = vadd.f32 %v2331, %v2338
    %2342 = vset.pattern.permute.xlu0 0
    %2343 = vperm.xlu0 %2342, %v2116
    %v2344 = vpop.permute.xlu0 %2343
    %v2346 = vmul.f32 %v269, %v2344
    %v2347 = vmul.f32 %v270, %v2344
    %v2348 = vadd.f32 %v2339, %v2346
    %v2349 = vadd.f32 %v2340, %v2347
    %2351 = vset.pattern.permute.xlu0 0
    %2352 = vperm.xlu0 %2351, %v2117
    %v2353 = vpop.permute.xlu0 %2352
    %v2355 = vmul.f32 %v1059, %v2353
    %v2356 = vmul.f32 %v1060, %v2353
    %v2357 = vadd.f32 %v2348, %v2355
    %v2358 = vadd.f32 %v2349, %v2356
    %vm2359 = vmand %vm167, %vm2223
    %vm2360 = vmand %vm168, %vm2224
    %2361 = vrot.lane.b32.xlu0 %v269, 124
    %v2362 = vpop.permute.xlu0 %2361
    %2363 = vrot.lane.b32.xlu0 %v270, 124
    %v2364 = vpop.permute.xlu0 %2363
    %vm2365 = vcmp.lt.s32.totalorder %v84, 124
    %v2366 = vsel %vm2365, %v2362, %v2364
    %v2367 = vsel %vm2365, %v2364, %v2362
    %v2368 = vsel %vm2359, %v2366, 0.0
    %v2369 = vsel %vm2360, %v2367, 0.0
    %2371 = vset.pattern.permute.xlu0 0
    %2372 = vperm.xlu0 %2371, %v2118
    %v2373 = vpop.permute.xlu0 %2372
    %v2375 = vmul.f32 %v2368, %v2373
    %v2376 = vmul.f32 %v2369, %v2373
    %v2377 = vadd.f32 %v2357, %v2375
    %v2378 = vadd.f32 %v2358, %v2376
    %vm2379 = vmand %vm1141, %vm2139
    %vm2380 = vmand %vm1142, %vm2140
    %2381 = vrot.lane.b32.xlu0 %v269, 100
    %v2382 = vpop.permute.xlu0 %2381
    %2383 = vrot.lane.b32.xlu0 %v270, 100
    %v2384 = vpop.permute.xlu0 %2383
    %vm2385 = vcmp.lt.s32.totalorder %v84, 100
    %v2386 = vsel %vm2385, %v2382, %v2384
    %v2387 = vsel %vm2385, %v2384, %v2382
    %v2388 = vsel %vm2379, %v2386, 0.0
    %v2389 = vsel %vm2380, %v2387, 0.0
    %2391 = vset.pattern.permute.xlu0 0
    %2392 = vperm.xlu0 %2391, %v2119
    %v2393 = vpop.permute.xlu0 %2392
    %v2395 = vmul.f32 %v2388, %v2393
    %v2396 = vmul.f32 %v2389, %v2393
    %v2397 = vadd.f32 %v2377, %v2395
    %v2398 = vadd.f32 %v2378, %v2396
    %2400 = vset.pattern.permute.xlu0 0
    %2401 = vperm.xlu0 %2400, %v2120
    %v2402 = vpop.permute.xlu0 %2401
    %v2404 = vmul.f32 %v1152, %v2402
    %v2405 = vmul.f32 %v1153, %v2402
    %v2406 = vadd.f32 %v2397, %v2404
    %v2407 = vadd.f32 %v2398, %v2405
    %2409 = vset.pattern.permute.xlu0 0
    %2410 = vperm.xlu0 %2409, %v2121
    %v2411 = vpop.permute.xlu0 %2410
    %v2413 = vmul.f32 %v1192, %v2411
    %v2414 = vmul.f32 %v1193, %v2411
    %v2415 = vadd.f32 %v2406, %v2413
    %v2416 = vadd.f32 %v2407, %v2414
    %2418 = vset.pattern.permute.xlu0 0
    %2419 = vperm.xlu0 %2418, %v2122
    %v2420 = vpop.permute.xlu0 %2419
    %v2422 = vmul.f32 %v1232, %v2420
    %v2423 = vmul.f32 %v1233, %v2420
    %v2424 = vadd.f32 %v2415, %v2422
    %v2425 = vadd.f32 %v2416, %v2423
    %vm2426 = vmand %vm1141, %vm2223
    %vm2427 = vmand %vm1142, %vm2224
    %2428 = vrot.lane.b32.xlu0 %v269, 92
    %v2429 = vpop.permute.xlu0 %2428
    %2430 = vrot.lane.b32.xlu0 %v270, 92
    %v2431 = vpop.permute.xlu0 %2430
    %vm2432 = vcmp.lt.s32.totalorder %v84, 92
    %v2433 = vsel %vm2432, %v2429, %v2431
    %v2434 = vsel %vm2432, %v2431, %v2429
    %v2435 = vsel %vm2426, %v2433, 0.0
    %v2436 = vsel %vm2427, %v2434, 0.0
    %2438 = vset.pattern.permute.xlu0 0
    %2439 = vperm.xlu0 %2438, %v2123
    %v2440 = vpop.permute.xlu0 %2439
    %v2442 = vmul.f32 %v2435, %v2440
    %v2443 = vmul.f32 %v2436, %v2440
    %v2444 = vadd.f32 %v2424, %v2442
    %v2445 = vadd.f32 %v2425, %v2443
    %vm2446 = vcmp.ge.f32.partialorder %v71, -4.0
    %vm2447 = vcmp.ge.f32.partialorder %v72, -4.0
    %vm2448 = vcmp.le.f32.partialorder %v71, 11.0
    %vm2449 = vcmp.le.f32.partialorder %v72, 11.0
    %vm2450 = vmand %vm2446, %vm2448
    %vm2451 = vmand %vm2447, %vm2449
    %vm2452 = vmand %vm2450, %vm2139
    %vm2453 = vmand %vm2451, %vm2140
    %v2454 = vsel %vm2452, %v2148, 0.0
    %v2455 = vsel %vm2453, %v2149, 0.0
    %2457 = vset.pattern.permute.xlu0 0
    %2458 = vperm.xlu0 %2457, %v2124
    %v2459 = vpop.permute.xlu0 %2458
    %v2461 = vmul.f32 %v2454, %v2459
    %v2462 = vmul.f32 %v2455, %v2459
    %v2463 = vadd.f32 %v2444, %v2461
    %v2464 = vadd.f32 %v2445, %v2462
    %vm2465 = vmand %vm2450, %vm830
    %vm2466 = vmand %vm2451, %vm831
    %v2467 = vsel %vm2465, %v2166, 0.0
    %v2468 = vsel %vm2466, %v2167, 0.0
    %2470 = vset.pattern.permute.xlu0 0
    %2471 = vperm.xlu0 %2470, %v2125
    %v2472 = vpop.permute.xlu0 %2471
    %v2474 = vmul.f32 %v2467, %v2472
    %v2475 = vmul.f32 %v2468, %v2472
    %v2476 = vadd.f32 %v2463, %v2474
    %v2477 = vadd.f32 %v2464, %v2475
    %vm2478 = vmand %vm2450, %vm121
    %vm2479 = vmand %vm2451, %vm122
    %v2480 = vsel %vm2478, %v2186, 0.0
    %v2481 = vsel %vm2479, %v2187, 0.0
    %2483 = vset.pattern.permute.xlu0 0
    %2484 = vperm.xlu0 %2483, %v2126
    %v2485 = vpop.permute.xlu0 %2484
    %v2487 = vmul.f32 %v2480, %v2485
    %v2488 = vmul.f32 %v2481, %v2485
    %v2489 = vadd.f32 %v2476, %v2487
    %v2490 = vadd.f32 %v2477, %v2488
    %vm2491 = vmand %vm2450, %vm914
    %vm2492 = vmand %vm2451, %vm915
    %v2493 = vsel %vm2491, %v2206, 0.0
    %v2494 = vsel %vm2492, %v2207, 0.0
    %2496 = vset.pattern.permute.xlu0 0
    %2497 = vperm.xlu0 %2496, %v2127
    %v2498 = vpop.permute.xlu0 %2497
    %v2500 = vmul.f32 %v2493, %v2498
    %v2501 = vmul.f32 %v2494, %v2498
    %v2502 = vadd.f32 %v2489, %v2500
    %v2503 = vadd.f32 %v2490, %v2501
    %vm2504 = vmand %vm2450, %vm2223
    %vm2505 = vmand %vm2451, %vm2224
    %v2506 = vsel %vm2504, %v2232, 0.0
    %v2507 = vsel %vm2505, %v2233, 0.0
    %2509 = vset.pattern.permute.xlu0 0
    %2510 = vperm.xlu0 %2509, %v2128
    %v2511 = vpop.permute.xlu0 %2510
    %v2513 = vmul.f32 %v2506, %v2511
    %v2514 = vmul.f32 %v2507, %v2511
    %v2515 = vadd.f32 %v2502, %v2513
    %v2516 = vadd.f32 %v2503, %v2514
    %v2517 = vld [vmem:[%s16] sm:$0xff]
    %v2518 = vld [vmem:[%s16 + $0x8] sm:$0xff]
    %v2519 = vld [vmem:[%s16 + $0x10] sm:$0xff]
    %v2520 = vld [vmem:[%s16 + $0x18] sm:$0xff]
    %v2521 = vld [vmem:[%s16 + $0x20] sm:$0xff]
    %v2522 = vld [vmem:[%s16 + $0x28] sm:$0xff]
    %v2523 = vld [vmem:[%s16 + $0x30] sm:$0xff]
    %v2524 = vrot.slane %v2515, 3
    %v2525 = vrot.slane %v2516, 3
    %2527 = vset.pattern.permute.xlu0 0
    %2528 = vperm.xlu0 %2527, %v2517
    %v2529 = vpop.permute.xlu0 %2528
    %v2531 = vmul.f32 %v2524, %v2529
    %v2532 = vmul.f32 %v2525, %v2529
    %v2533 = vrot.slane %v2515, 2
    %v2534 = vrot.slane %v2516, 2
    %2536 = vset.pattern.permute.xlu0 0
    %2537 = vperm.xlu0 %2536, %v2518
    %v2538 = vpop.permute.xlu0 %2537
    %v2540 = vmul.f32 %v2533, %v2538
    %v2541 = vmul.f32 %v2534, %v2538
    %v2542 = vadd.f32 %v2531, %v2540
    %v2543 = vadd.f32 %v2532, %v2541
    %v2544 = vrot.slane %v2515, 1
    %v2545 = vrot.slane %v2516, 1
    %2547 = vset.pattern.permute.xlu0 0
    %2548 = vperm.xlu0 %2547, %v2519
    %v2549 = vpop.permute.xlu0 %2548
    %v2551 = vmul.f32 %v2544, %v2549
    %v2552 = vmul.f32 %v2545, %v2549
    %v2553 = vadd.f32 %v2542, %v2551
    %v2554 = vadd.f32 %v2543, %v2552
    %2556 = vset.pattern.permute.xlu0 0
    %2557 = vperm.xlu0 %2556, %v2520
    %v2558 = vpop.permute.xlu0 %2557
    %v2560 = vmul.f32 %v2515, %v2558
    %v2561 = vmul.f32 %v2516, %v2558
    %v2562 = vadd.f32 %v2553, %v2560
    %v2563 = vadd.f32 %v2554, %v2561
    %v2564 = vrot.slane %v2515, 7
    %v2565 = vrot.slane %v2516, 7
    %2567 = vset.pattern.permute.xlu0 0
    %2568 = vperm.xlu0 %2567, %v2521
    %v2569 = vpop.permute.xlu0 %2568
    %v2571 = vmul.f32 %v2564, %v2569
    %v2572 = vmul.f32 %v2565, %v2569
    %v2573 = vadd.f32 %v2562, %v2571
    %v2574 = vadd.f32 %v2563, %v2572
    %v2575 = vrot.slane %v2515, 6
    %v2576 = vrot.slane %v2516, 6
    %2578 = vset.pattern.permute.xlu0 0
    %2579 = vperm.xlu0 %2578, %v2522
    %v2580 = vpop.permute.xlu0 %2579
    %v2582 = vmul.f32 %v2575, %v2580
    %v2583 = vmul.f32 %v2576, %v2580
    %v2584 = vadd.f32 %v2573, %v2582
    %v2585 = vadd.f32 %v2574, %v2583
    %v2586 = vrot.slane %v2515, 5
    %v2587 = vrot.slane %v2516, 5
    %2589 = vset.pattern.permute.xlu0 0
    %2590 = vperm.xlu0 %2589, %v2523
    %v2591 = vpop.permute.xlu0 %2590
    %v2593 = vmul.f32 %v2586, %v2591
    %v2594 = vmul.f32 %v2587, %v2591
    %v2595 = vadd.f32 %v2584, %v2593
    %v2596 = vadd.f32 %v2585, %v2594
    %v2597 = vmul.f32 %v2595, %v2595
    %v2598 = vmul.f32 %v2596, %v2596
    %v2599 = vrot.slane %v2595, 4
    %v2600 = vrot.slane %v2596, 4
    %v2601 = vadd.f32 %v2595, %v2599
    %v2602 = vadd.f32 %v2596, %v2600
    %v2603 = vrot.slane %v2597, 4
    %v2604 = vrot.slane %v2598, 4
    %v2605 = vadd.f32 %v2597, %v2603
    %v2606 = vadd.f32 %v2598, %v2604
    %v2607 = vadd.f32 %v2601, %v2602
    %2608 = vadd.xlane.f32.xlu0 %v2607
    %v2609 = vpop.xlane.xlu0 %2608
    %v2610 = vadd.f32 %v2605, %v2606
    %2611 = vadd.xlane.f32.xlu0 %v2610
    %v2612 = vpop.xlane.xlu0 %2611
    %v2613 = vmul.f32 %v2609, 0.001953125
    %v2614 = vmul.f32 %v2612, 0.001953125
    %v2615 = vmul.f32 %v2613, %v2613
    %v2616 = vsub.f32 %v2614, %v2615
    %v2617 = vsub.f32 %v2595, %v2613
    %v2618 = vsub.f32 %v2596, %v2613
    %v2619 = vadd.f32 %v2616, 1e-05
    %v2620 = vrsqrt.pop %v2619
    %v2621 = vmul.f32 %v2617, %v2620
    %v2622 = vmul.f32 %v2618, %v2620
    %v2623 = vstv %s2103
    %v2624 = vmul.f32 %v2623, %v2621
    %v2625 = vmul.f32 %v2623, %v2622
    %v2626 = vadd.f32 %v2101, %v2624
    %v2627 = vadd.f32 %v2102, %v2625
    %2628 = vst [vmem:[%s17] sm:$0xff] %v2626
    %2629 = vst [vmem:[%s17 + $0x8] sm:$0xff] %v2627
    // Predicated region
    $region74: #{mixed_op_forward.1} parent=1 // pred_check
      _
    $region75: #{mixed_op_forward.1} parent=1 // pred_check_branch
      %2631 = sbr.rel (0) target = $region77
    $region76: #{mixed_op_forward.1} parent=1 // pred_region
      _
    $region77: #{mixed_op_forward.1} parent=1 // pred_fallthru
      _
    // Predicated region
    $region78: #{mixed_op_forward.1} parent=1 // pred_check
      _
    $region79: #{mixed_op_forward.1} parent=1 // pred_check_branch
      %2633 = sbr.rel (0) target = $region81
    $region80: #{mixed_op_forward.1} parent=1 // pred_region
      _
    $region81: #{mixed_op_forward.1} parent=1 // pred_fallthru
      _
    %2634 = vsyncpa [#allocation3], 1

</llo_original>
